<compile_context>
chip_gen: v7x
topology: tpu7x:2x2x1
jax: 0.10.0
libtpu: 0.0.40
codegen_flags: <defaults>
</compile_context>

<pallas_src>
import functools

import jax
import jax.numpy as jnp
from jax.experimental import pallas as pl
from jax.experimental.pallas import tpu as pltpu


def _round_up(v, m):
    return (v + m - 1) // m * m


# ----------------------------------------------------------------------------
# Kernel (single invocation, in-kernel time loop)
# ----------------------------------------------------------------------------
def recurrent_kernel(
    x_ref, noise_ref,
    wi0_ref, whh_ref, wi1_ref, gru_b_ref,
    w1_ref, w2_ref, w3_ref, mlp_b12_ref, mlp_b3_ref, whead_ref, bhead_ref,
    out_ref,
    xp_ref, h2_ref,
    *, T, B, leak,
):
    G = wi1_ref.shape[0]          # nrnn
    G3 = 3 * G
    NZP = bhead_ref.shape[1] // 2  # lane-padded nz (multiple of 128)

    def dot(a, b):
        return jnp.dot(a, b, preferred_element_type=jnp.float32)

    # ---- load parameters once (loop invariant) ------------------------------
    wi0 = wi0_ref[...]            # (Hin, 3G)
    whh = whh_ref[...]            # (2G, 6G) block-diagonal [Wh0 0; 0 Wh1]
    wi1 = wi1_ref[...]            # (G, 3G)
    gb = gru_b_ref[...]           # (4, 3G): [bi0; bh0; bi1; bh1]
    bi0 = gb[0:1]
    # Pre-broadcast loop-invariant biases ONCE (unrolled loop => no CSE of broadcasts).
    bhh_b = jnp.broadcast_to(jnp.concatenate([gb[1:2], gb[3:4]], axis=1), (B, 2 * G3))
    bi1_b = jnp.broadcast_to(gb[2:3], (B, G3))

    # ---- hoisted layer-0 input projection over ALL timesteps ----------------
    xp_ref[...] = dot(x_ref[...], wi0) + bi0              # (T*B, 3G)

    def gru_gates(xp, hp, h):
        # PyTorch GRU cell (input/hidden biases already folded into xp / hp):
        #   r = sigmoid(x_r + b_ir + h_r + b_hr)
        #   z = sigmoid(x_z + b_iz + h_z + b_hz)
        #   n = tanh(x_n + b_in + r * (h_n + b_hn))
        #   h' = (1 - z) * n + z * h
        r = jax.nn.sigmoid(xp[:, :G] + hp[:, :G])
        z = jax.nn.sigmoid(xp[:, G:2 * G] + hp[:, G:2 * G])
        n = jnp.tanh(xp[:, 2 * G:] + r * hp[:, 2 * G:])
        return (1.0 - z) * n + z * h

    def step(t, carry):
        h1, h2 = carry
        # B is padded to a sublane multiple, so row = t*B is (8,128)-tile aligned:
        # these dynamic slices are full, unmasked sublane loads/stores.
        row = pl.multiple_of(t * B, B)
        xp0 = xp_ref[pl.ds(row, B), :]                     # (B, 3G) precomputed
        # One fused hidden-state matmul for both layers (block-diagonal W_hh).
        hp = dot(jnp.concatenate([h1, h2], axis=-1), whh) + bhh_b   # (B, 6G)
        h1 = gru_gates(xp0, hp[:, :G3], h1)
        # NOTE: nn.GRU inter-layer dropout is a no-op in eval mode.
        xp1 = dot(h1, wi1) + bi1_b
        h2 = gru_gates(xp1, hp[:, G3:], h2)
        h2_ref[pl.ds(row, B), :] = h2                      # stash top-layer output
        return (h1, h2)

    h_init = jnp.zeros((B, G), jnp.float32)
    # Full unroll only while T is small; partial unroll keeps vreg pressure bounded.
    jax.lax.fori_loop(0, T, step, (h_init, h_init),
                      unroll=(True if T <= 16 else 8))

    # ---- time-batched MLP -> LayerNorm -> LeakyReLU (x3), heads, reparam ----
    def layernorm(v, gamma, beta, eps=1e-5):
        mean = jnp.mean(v, axis=-1, keepdims=True)
        var = jnp.mean((v - mean) ** 2, axis=-1, keepdims=True)
        return (v - mean) * jax.lax.rsqrt(var + eps) * gamma + beta

    def lrelu(v):
        return jnp.where(v > 0, v, leak * v)

    mb12 = mlp_b12_ref[...]            # (6, nlin): [b1; g1; beta1; b2; g2; beta2]
    mb3 = mlp_b3_ref[...]              # (3, nz):   [b3; g3; beta3]

    h = h2_ref[...]                                               # (T*B, G)
    h = lrelu(layernorm(dot(h, w1_ref[...]) + mb12[0:1], mb12[1:2], mb12[2:3]))
    h = lrelu(layernorm(dot(h, w2_ref[...]) + mb12[3:4], mb12[4:5], mb12[5:6]))
    h = lrelu(layernorm(dot(h, w3_ref[...]) + mb3[0:1], mb3[1:2], mb3[2:3]))

    # Head is lane-padded: mu/logvar split lands on a 128-lane tile boundary and the
    # final store is a lane-dense (T*B, NZP) slab (no masked partial stores).
    head = dot(h, whead_ref[...]) + bhead_ref[...]                # (T*B, 2*NZP)
    mu = head[:, :NZP]
    logvar = head[:, NZP:]
    # sample(): z = mu + diag(exp(logvar)) @ noise == mu + exp(logvar) * noise
    # (padded lanes: mu = 0, logvar = 0 -> exp = 1, noise = 0 -> output 0; dropped by wrapper)
    out_ref[...] = mu + jnp.exp(logvar) * noise_ref[...]


# ----------------------------------------------------------------------------
# Parameter packing (raw per-gate params -> 11 fused kernel tensors).
# Call ONCE (outside the per-step call path) and reuse the packed tuple.
# ----------------------------------------------------------------------------
def pack_params(params):
    f32 = jnp.float32
    G = params["Whr0"].shape[0]

    def gru_pack(l):
        wi = jnp.concatenate([params[f"Wir{l}"], params[f"Wiz{l}"], params[f"Win{l}"]], axis=1)
        wh = jnp.concatenate([params[f"Whr{l}"], params[f"Whz{l}"], params[f"Whn{l}"]], axis=1)
        bi = jnp.concatenate([params[f"bir{l}"], params[f"biz{l}"], params[f"bin{l}"]], axis=1)
        bh = jnp.concatenate([params[f"bhr{l}"], params[f"bhz{l}"], params[f"bhn{l}"]], axis=1)
        return wi, wh, bi, bh

    wi0, wh0, bi0, bh0 = gru_pack(0)
    wi1, wh1, bi1, bh1 = gru_pack(1)

    # Block-diagonal fusion of the two per-step hidden-state projections.
    whh = jnp.zeros((2 * G, 6 * G), f32)
    whh = whh.at[:G, :3 * G].set(wh0).at[G:, 3 * G:].set(wh1)

    gru_b = jnp.concatenate([bi0, bh0, bi1, bh1], axis=0)               # (4, 3G)
    mlp_b12 = jnp.concatenate(
        [params["b1"], params["g1"], params["beta1"],
         params["b2"], params["g2"], params["beta2"]], axis=0)          # (6, nlin)
    mlp_b3 = jnp.concatenate([params["b3"], params["g3"], params["beta3"]], axis=0)  # (3, nz)

    # mu|logvar head, lane-padded to NZP = round_up(nz, 128) so the split is tile
    # aligned and the kernel output store is lane-dense.
    nz = params["Wmu"].shape[0]
    NZP = _round_up(nz, 128)
    whead = jnp.zeros((nz, 2 * NZP), f32)
    whead = whead.at[:, :nz].set(params["Wmu"]).at[:, NZP:NZP + nz].set(params["Wls"])
    bhead = jnp.zeros((1, 2 * NZP), f32)
    bhead = bhead.at[:, :nz].set(params["bmu"]).at[:, NZP:NZP + nz].set(params["bls"])

    return (wi0, whh, wi1, gru_b,
            params["W1"], params["W2"], params["W3"],
            mlp_b12, mlp_b3, whead, bhead)


# ----------------------------------------------------------------------------
# Wrapper
# ----------------------------------------------------------------------------
def recurrent_net_forward(x, noise, packed, leak=0.1):
    """x: (B, T, Hin), noise: (B, T, nz), packed: output of pack_params -> (B, T, nz)."""
    B, T, Hin = x.shape
    nz = noise.shape[-1]
    nrnn = packed[2].shape[0]           # wi1: (nrnn, 3*nrnn)
    NZP = packed[-1].shape[1] // 2      # bhead: (1, 2*NZP)
    Bp = _round_up(B, 8)                # sublane-pad the batch

    # Time-major flatten (row index = t*Bp + b), zero-pad batch rows and noise lanes.
    x_tm = jnp.transpose(x, (1, 0, 2))                                   # (T, B, Hin)
    x_tm = jnp.pad(x_tm, ((0, 0), (0, Bp - B), (0, 0)))
    x_flat = x_tm.reshape(T * Bp, Hin)
    n_tm = jnp.transpose(noise, (1, 0, 2))                               # (T, B, nz)
    n_tm = jnp.pad(n_tm, ((0, 0), (0, Bp - B), (0, NZP - nz)))
    noise_flat = n_tm.reshape(T * Bp, NZP)

    # Explicit VMEM budget: all inputs + output + scratches resident (no grid).
    resident = 4 * (x_flat.size + noise_flat.size + sum(int(p.size) for p in packed)
                    + T * Bp * NZP              # output
                    + T * Bp * 3 * nrnn         # xp scratch
                    + T * Bp * nrnn)            # h2 scratch
    vmem_limit = int(min(max(2 * resident + (2 << 20), 8 << 20), 64 << 20))
    # TODO(synk): for large T*B (beyond what fits 64 MiB on v7x) switch to a
    # time-chunked grid with the hidden state carried in VMEM scratch.

    vmem_spec = pl.BlockSpec(memory_space=pltpu.MemorySpace.VMEM)

    out_flat = pl.pallas_call(
        functools.partial(recurrent_kernel, T=T, B=Bp, leak=leak),
        out_shape=jax.ShapeDtypeStruct((T * Bp, NZP), jnp.float32),
        in_specs=[vmem_spec] * (2 + len(packed)),
        out_specs=vmem_spec,
        scratch_shapes=[
            pltpu.VMEM((T * Bp, 3 * nrnn), jnp.float32),  # hoisted layer-0 input projection
            pltpu.VMEM((T * Bp, nrnn), jnp.float32),      # top-layer GRU outputs (batched MLP)
        ],
        compiler_params=pltpu.CompilerParams(vmem_limit_bytes=vmem_limit),
    )(x_flat, noise_flat, *packed)

    # Drop batch/lane padding, back to (B, T, nz).
    out = out_flat.reshape(T, Bp, NZP)[:, :B, :nz]
    return jnp.transpose(out, (1, 0, 2))


# ----------------------------------------------------------------------------
# Deterministic parameter init (shapes per RecurrentNetv1.__init__; weights
# stored transposed so y = x @ W + b)
# ----------------------------------------------------------------------------
def init_params(key, Hin, nz, nrnn, nlin):
    keys = iter(jax.random.split(key, 64))

    def uni(shape, scale):
        return jax.random.uniform(next(keys), shape, jnp.float32, -scale, scale)

    params = {}

    # GRU (2 layers), PyTorch init scale = 1/sqrt(hidden); per-gate biases kept
    # separate (b_in / b_hn must NOT be folded for the n gate).
    k = 1.0 / float(nrnn) ** 0.5
    for l in (0, 1):
        in_dim = Hin if l == 0 else nrnn
        for name in ("Wir", "Wiz", "Win"):
            params[f"{name}{l}"] = uni((in_dim, nrnn), k)
        for name in ("Whr", "Whz", "Whn"):
            params[f"{name}{l}"] = uni((nrnn, nrnn), k)
        for name in ("bir", "biz", "bin", "bhr", "bhz", "bhn"):
            params[f"{name}{l}"] = uni((1, nrnn), k)

    def linear_params(fan_in, fan_out):
        s = 1.0 / float(fan_in) ** 0.5
        return uni((fan_in, fan_out), s), uni((1, fan_out), s)

    params["W1"], params["b1"] = linear_params(nrnn, nlin)
    params["g1"], params["beta1"] = jnp.ones((1, nlin), jnp.float32), jnp.zeros((1, nlin), jnp.float32)
    params["W2"], params["b2"] = linear_params(nlin, nlin)
    params["g2"], params["beta2"] = jnp.ones((1, nlin), jnp.float32), jnp.zeros((1, nlin), jnp.float32)
    params["W3"], params["b3"] = linear_params(nlin, nz)
    params["g3"], params["beta3"] = jnp.ones((1, nz), jnp.float32), jnp.zeros((1, nz), jnp.float32)
    params["Wmu"], params["bmu"] = linear_params(nz, nz)
    params["Wls"], params["bls"] = linear_params(nz, nz)
    return params


# ----------------------------------------------------------------------------
# Pure-JAX reference (mirrors the PyTorch forward) for a correctness check
# ----------------------------------------------------------------------------
def reference_forward(x, noise, params, leak=0.1):
    B, T, _ = x.shape
    nrnn = params["Whr0"].shape[0]

    def gru_layer(xs, l):
        def cell(h, x_t):
            r = jax.nn.sigmoid(x_t @ params[f"Wir{l}"] + params[f"bir{l}"]
                               + h @ params[f"Whr{l}"] + params[f"bhr{l}"])
            z = jax.nn.sigmoid(x_t @ params[f"Wiz{l}"] + params[f"biz{l}"]
                               + h @ params[f"Whz{l}"] + params[f"bhz{l}"])
            n = jnp.tanh(x_t @ params[f"Win{l}"] + params[f"bin{l}"]
                         + r * (h @ params[f"Whn{l}"] + params[f"bhn{l}"]))
            hn = (1.0 - z) * n + z * h
            return hn, hn
        h0 = jnp.zeros((B, nrnn), jnp.float32)
        _, ys = jax.lax.scan(cell, h0, xs)
        return ys

    def ln(v, g, b, eps=1e-5):
        m = jnp.mean(v, -1, keepdims=True)
        var = jnp.mean((v - m) ** 2, -1, keepdims=True)
        return (v - m) * jax.lax.rsqrt(var + eps) * g + b

    def lrelu(v):
        return jnp.where(v > 0, v, leak * v)

    x_tm = jnp.transpose(x, (1, 0, 2))
    o = gru_layer(gru_layer(x_tm, 0), 1)                     # (T, B, nrnn)
    h = o.reshape(T * B, nrnn)
    h = lrelu(ln(h @ params["W1"] + params["b1"], params["g1"], params["beta1"]))
    h = lrelu(ln(h @ params["W2"] + params["b2"], params["g2"], params["beta2"]))
    h = lrelu(ln(h @ params["W3"] + params["b3"], params["g3"], params["beta3"]))
    mu = h @ params["Wmu"] + params["bmu"]
    logvar = h @ params["Wls"] + params["bls"]
    n_flat = jnp.transpose(noise, (1, 0, 2)).reshape(T * B, -1)
    z = mu + jnp.exp(logvar) * n_flat
    return jnp.transpose(z.reshape(T, B, -1), (1, 0, 2))


# ----------------------------------------------------------------------------
if __name__ == "__main__":
    B, T = 2, 8
    Hin, nz, nrnn, nlin = 16, 16, 32, 32

    key = jax.random.PRNGKey(0)
    kx, kn, kp = jax.random.split(key, 3)

    x = jax.random.normal(kx, (B, T, Hin), jnp.float32)
    # torch.randn_like(mu) replaced by an explicit deterministic noise tensor.
    noise = jax.random.normal(kn, (B, T, nz), jnp.float32)
    params = init_params(kp, Hin, nz, nrnn, nlin)

    # Pack once, outside the per-call path (feedback: hoist pack_params).
    packed = pack_params(params)
    fwd = jax.jit(lambda x_, n_, p_: recurrent_net_forward(x_, n_, p_, leak=0.1))

    out = jax.block_until_ready(fwd(x, noise, packed))
    assert out.shape == (B, T, nz) and out.dtype == jnp.float32

    ref = jax.block_until_ready(reference_forward(x, noise, params, leak=0.1))
    max_err = float(jnp.max(jnp.abs(out - ref)))
    assert max_err < 5e-5, f"kernel vs reference mismatch: max abs err {max_err}"

    print("KERNEL_OK")
</pallas_src>

<mosaic_0001>
module attributes {stable_mosaic.version = 11 : i64} {
  func.func @recurrent_kernel(%arg0: memref<64x16xf32, #tpu.memory_space<vmem>>, %arg1: memref<64x128xf32, #tpu.memory_space<vmem>>, %arg2: memref<16x96xf32, #tpu.memory_space<vmem>>, %arg3: memref<64x192xf32, #tpu.memory_space<vmem>>, %arg4: memref<32x96xf32, #tpu.memory_space<vmem>>, %arg5: memref<4x96xf32, #tpu.memory_space<vmem>>, %arg6: memref<32x32xf32, #tpu.memory_space<vmem>>, %arg7: memref<32x32xf32, #tpu.memory_space<vmem>>, %arg8: memref<32x16xf32, #tpu.memory_space<vmem>>, %arg9: memref<6x32xf32, #tpu.memory_space<vmem>>, %arg10: memref<3x16xf32, #tpu.memory_space<vmem>>, %arg11: memref<16x256xf32, #tpu.memory_space<vmem>>, %arg12: memref<1x256xf32, #tpu.memory_space<vmem>>, %arg13: memref<64x128xf32, #tpu.memory_space<vmem>>, %arg14: memref<64x96xf32, #tpu.memory_space<vmem>>, %arg15: memref<64x32xf32, #tpu.memory_space<vmem>>) attributes {dimension_semantics = [], scalar_prefetch = 0 : i64, scratch_operands = 2 : i64, tpu.core_type = #tpu.core_type<tc>} {
    %c0 = arith.constant 0 : index
    %c0_0 = arith.constant 0 : index
    %0 = vector.load %arg2[%c0, %c0_0] : memref<16x96xf32, #tpu.memory_space<vmem>>, vector<16x96xf32>
    %c0_1 = arith.constant 0 : index
    %c0_2 = arith.constant 0 : index
    %1 = vector.load %arg3[%c0_1, %c0_2] : memref<64x192xf32, #tpu.memory_space<vmem>>, vector<64x192xf32>
    %c0_3 = arith.constant 0 : index
    %c0_4 = arith.constant 0 : index
    %2 = vector.load %arg4[%c0_3, %c0_4] : memref<32x96xf32, #tpu.memory_space<vmem>>, vector<32x96xf32>
    %c0_5 = arith.constant 0 : index
    %c0_6 = arith.constant 0 : index
    %3 = vector.load %arg5[%c0_5, %c0_6] : memref<4x96xf32, #tpu.memory_space<vmem>>, vector<4x96xf32>
    %4 = vector.extract_strided_slice %3 {offsets = [0, 0], sizes = [1, 96], strides = [1, 1]} : vector<4x96xf32> to vector<1x96xf32>
    %5 = vector.extract_strided_slice %3 {offsets = [1, 0], sizes = [1, 96], strides = [1, 1]} : vector<4x96xf32> to vector<1x96xf32>
    %6 = vector.extract_strided_slice %3 {offsets = [3, 0], sizes = [1, 96], strides = [1, 1]} : vector<4x96xf32> to vector<1x96xf32>
    %7 = tpu.concatenate %5, %6 in 1 : vector<1x96xf32>, vector<1x96xf32> -> vector<1x192xf32>
    %8 = vector.shape_cast %7 : vector<1x192xf32> to vector<1x192xf32>
    %9 = vector.broadcast %8 : vector<1x192xf32> to vector<8x192xf32>
    %10 = vector.extract_strided_slice %3 {offsets = [2, 0], sizes = [1, 96], strides = [1, 1]} : vector<4x96xf32> to vector<1x96xf32>
    %11 = vector.shape_cast %10 : vector<1x96xf32> to vector<1x96xf32>
    %12 = vector.broadcast %11 : vector<1x96xf32> to vector<8x96xf32>
    %c0_7 = arith.constant 0 : index
    %c0_8 = arith.constant 0 : index
    %13 = vector.load %arg0[%c0_7, %c0_8] : memref<64x16xf32, #tpu.memory_space<vmem>>, vector<64x16xf32>
    %cst = arith.constant dense<0.000000e+00> : vector<64x96xf32>
    %14 = tpu.matmul %13, %0, %cst {dimension_numbers = #tpu.dot_dimension_numbers<[1], [0], [0], [1], [0, 0, 1, 1], [], []>} : vector<64x16xf32>, vector<16x96xf32>, vector<64x96xf32> -> vector<64x96xf32>
    %15 = vector.broadcast %4 : vector<1x96xf32> to vector<64x96xf32>
    %16 = arith.addf %14, %15 : vector<64x96xf32>
    %c0_9 = arith.constant 0 : index
    %c0_10 = arith.constant 0 : index
    %17 = vector.load %arg14[%c0_9, %c0_10] : memref<64x96xf32, #tpu.memory_space<vmem>>, vector<64x96xf32>
    tpu.vector_store %arg14[%c0_9, %c0_10], %16 {strides = array<i32>} : memref<64x96xf32, #tpu.memory_space<vmem>>, vector<64x96xf32>,
    %cst_11 = arith.constant 0.000000e+00 : f32
    %18 = vector.broadcast %cst_11 : f32 to vector<8x32xf32>
    %c0_i32 = arith.constant 0 : i32
    %c8_i32 = arith.constant 8 : i32
    %19 = arith.muli %c0_i32, %c8_i32 : i32
    %20 = tpu.assume_multiple %19, 8 : i32
    %21 = arith.index_cast %20 : i32 to index
    %c0_12 = arith.constant 0 : index
    %22 = vector.load %arg14[%21, %c0_12] : memref<64x96xf32, #tpu.memory_space<vmem>>, vector<8x96xf32>
    %23 = tpu.concatenate %18, %18 in 1 : vector<8x32xf32>, vector<8x32xf32> -> vector<8x64xf32>
    %cst_13 = arith.constant dense<0.000000e+00> : vector<8x192xf32>
    %24 = tpu.matmul %23, %1, %cst_13 {dimension_numbers = #tpu.dot_dimension_numbers<[1], [0], [0], [1], [0, 0, 1, 1], [], []>} : vector<8x64xf32>, vector<64x192xf32>, vector<8x192xf32> -> vector<8x192xf32>
    %25 = arith.addf %24, %9 : vector<8x192xf32>
    %26 = vector.extract_strided_slice %25 {offsets = [0, 0], sizes = [8, 96], strides = [1, 1]} : vector<8x192xf32> to vector<8x96xf32>
    %27 = vector.extract_strided_slice %22 {offsets = [0, 0], sizes = [8, 32], strides = [1, 1]} : vector<8x96xf32> to vector<8x32xf32>
    %28 = vector.extract_strided_slice %26 {offsets = [0, 0], sizes = [8, 32], strides = [1, 1]} : vector<8x96xf32> to vector<8x32xf32>
    %29 = arith.addf %27, %28 : vector<8x32xf32>
    %30 = arith.negf %29 : vector<8x32xf32>
    %31 = math.exp %30 : vector<8x32xf32>
    %cst_14 = arith.constant 1.000000e+00 : f32
    %32 = vector.broadcast %cst_14 : f32 to vector<8x32xf32>
    %33 = arith.addf %32, %31 : vector<8x32xf32>
    %34 = arith.divf %32, %33 : vector<8x32xf32>
    %35 = vector.extract_strided_slice %22 {offsets = [0, 32], sizes = [8, 32], strides = [1, 1]} : vector<8x96xf32> to vector<8x32xf32>
    %36 = vector.extract_strided_slice %26 {offsets = [0, 32], sizes = [8, 32], strides = [1, 1]} : vector<8x96xf32> to vector<8x32xf32>
    %37 = arith.addf %35, %36 : vector<8x32xf32>
    %38 = arith.negf %37 : vector<8x32xf32>
    %39 = math.exp %38 : vector<8x32xf32>
    %cst_15 = arith.constant 1.000000e+00 : f32
    %40 = vector.broadcast %cst_15 : f32 to vector<8x32xf32>
    %41 = arith.addf %40, %39 : vector<8x32xf32>
    %42 = arith.divf %40, %41 : vector<8x32xf32>
    %43 = vector.extract_strided_slice %22 {offsets = [0, 64], sizes = [8, 32], strides = [1, 1]} : vector<8x96xf32> to vector<8x32xf32>
    %44 = vector.extract_strided_slice %26 {offsets = [0, 64], sizes = [8, 32], strides = [1, 1]} : vector<8x96xf32> to vector<8x32xf32>
    %45 = arith.mulf %34, %44 : vector<8x32xf32>
    %46 = arith.addf %43, %45 : vector<8x32xf32>
    %47 = math.tanh %46 : vector<8x32xf32>
    %cst_16 = arith.constant 1.000000e+00 : f32
    %48 = vector.broadcast %cst_16 : f32 to vector<8x32xf32>
    %49 = arith.subf %48, %42 : vector<8x32xf32>
    %50 = arith.mulf %49, %47 : vector<8x32xf32>
    %51 = arith.mulf %42, %18 : vector<8x32xf32>
    %52 = arith.addf %50, %51 : vector<8x32xf32>
    %cst_17 = arith.constant dense<0.000000e+00> : vector<8x96xf32>
    %53 = tpu.matmul %52, %2, %cst_17 {dimension_numbers = #tpu.dot_dimension_numbers<[1], [0], [0], [1], [0, 0, 1, 1], [], []>} : vector<8x32xf32>, vector<32x96xf32>, vector<8x96xf32> -> vector<8x96xf32>
    %54 = arith.addf %53, %12 : vector<8x96xf32>
    %55 = vector.extract_strided_slice %25 {offsets = [0, 96], sizes = [8, 96], strides = [1, 1]} : vector<8x192xf32> to vector<8x96xf32>
    %56 = vector.extract_strided_slice %54 {offsets = [0, 0], sizes = [8, 32], strides = [1, 1]} : vector<8x96xf32> to vector<8x32xf32>
    %57 = vector.extract_strided_slice %55 {offsets = [0, 0], sizes = [8, 32], strides = [1, 1]} : vector<8x96xf32> to vector<8x32xf32>
    %58 = arith.addf %56, %57 : vector<8x32xf32>
    %59 = arith.negf %58 : vector<8x32xf32>
    %60 = math.exp %59 : vector<8x32xf32>
    %cst_18 = arith.constant 1.000000e+00 : f32
    %61 = vector.broadcast %cst_18 : f32 to vector<8x32xf32>
    %62 = arith.addf %61, %60 : vector<8x32xf32>
    %63 = arith.divf %61, %62 : vector<8x32xf32>
    %64 = vector.extract_strided_slice %54 {offsets = [0, 32], sizes = [8, 32], strides = [1, 1]} : vector<8x96xf32> to vector<8x32xf32>
    %65 = vector.extract_strided_slice %55 {offsets = [0, 32], sizes = [8, 32], strides = [1, 1]} : vector<8x96xf32> to vector<8x32xf32>
    %66 = arith.addf %64, %65 : vector<8x32xf32>
    %67 = arith.negf %66 : vector<8x32xf32>
    %68 = math.exp %67 : vector<8x32xf32>
    %cst_19 = arith.constant 1.000000e+00 : f32
    %69 = vector.broadcast %cst_19 : f32 to vector<8x32xf32>
    %70 = arith.addf %69, %68 : vector<8x32xf32>
    %71 = arith.divf %69, %70 : vector<8x32xf32>
    %72 = vector.extract_strided_slice %54 {offsets = [0, 64], sizes = [8, 32], strides = [1, 1]} : vector<8x96xf32> to vector<8x32xf32>
    %73 = vector.extract_strided_slice %55 {offsets = [0, 64], sizes = [8, 32], strides = [1, 1]} : vector<8x96xf32> to vector<8x32xf32>
    %74 = arith.mulf %63, %73 : vector<8x32xf32>
    %75 = arith.addf %72, %74 : vector<8x32xf32>
    %76 = math.tanh %75 : vector<8x32xf32>
    %cst_20 = arith.constant 1.000000e+00 : f32
    %77 = vector.broadcast %cst_20 : f32 to vector<8x32xf32>
    %78 = arith.subf %77, %71 : vector<8x32xf32>
    %79 = arith.mulf %78, %76 : vector<8x32xf32>
    %80 = arith.mulf %71, %18 : vector<8x32xf32>
    %81 = arith.addf %79, %80 : vector<8x32xf32>
    %82 = arith.index_cast %20 : i32 to index
    %c0_21 = arith.constant 0 : index
    %83 = vector.load %arg15[%82, %c0_21] : memref<64x32xf32, #tpu.memory_space<vmem>>, vector<8x32xf32>
    tpu.vector_store %arg15[%82, %c0_21], %81 {strides = array<i32>} : memref<64x32xf32, #tpu.memory_space<vmem>>, vector<8x32xf32>,
    %c1_i32 = arith.constant 1 : i32
    %c8_i32_22 = arith.constant 8 : i32
    %84 = arith.muli %c1_i32, %c8_i32_22 : i32
    %85 = tpu.assume_multiple %84, 8 : i32
    %86 = arith.index_cast %85 : i32 to index
    %c0_23 = arith.constant 0 : index
    %87 = vector.load %arg14[%86, %c0_23] : memref<64x96xf32, #tpu.memory_space<vmem>>, vector<8x96xf32>
    %88 = tpu.concatenate %52, %81 in 1 : vector<8x32xf32>, vector<8x32xf32> -> vector<8x64xf32>
    %cst_24 = arith.constant dense<0.000000e+00> : vector<8x192xf32>
    %89 = tpu.matmul %88, %1, %cst_24 {dimension_numbers = #tpu.dot_dimension_numbers<[1], [0], [0], [1], [0, 0, 1, 1], [], []>} : vector<8x64xf32>, vector<64x192xf32>, vector<8x192xf32> -> vector<8x192xf32>
    %90 = arith.addf %89, %9 : vector<8x192xf32>
    %91 = vector.extract_strided_slice %90 {offsets = [0, 0], sizes = [8, 96], strides = [1, 1]} : vector<8x192xf32> to vector<8x96xf32>
    %92 = vector.extract_strided_slice %87 {offsets = [0, 0], sizes = [8, 32], strides = [1, 1]} : vector<8x96xf32> to vector<8x32xf32>
    %93 = vector.extract_strided_slice %91 {offsets = [0, 0], sizes = [8, 32], strides = [1, 1]} : vector<8x96xf32> to vector<8x32xf32>
    %94 = arith.addf %92, %93 : vector<8x32xf32>
    %95 = arith.negf %94 : vector<8x32xf32>
    %96 = math.exp %95 : vector<8x32xf32>
    %cst_25 = arith.constant 1.000000e+00 : f32
    %97 = vector.broadcast %cst_25 : f32 to vector<8x32xf32>
    %98 = arith.addf %97, %96 : vector<8x32xf32>
    %99 = arith.divf %97, %98 : vector<8x32xf32>
    %100 = vector.extract_strided_slice %87 {offsets = [0, 32], sizes = [8, 32], strides = [1, 1]} : vector<8x96xf32> to vector<8x32xf32>
    %101 = vector.extract_strided_slice %91 {offsets = [0, 32], sizes = [8, 32], strides = [1, 1]} : vector<8x96xf32> to vector<8x32xf32>
    %102 = arith.addf %100, %101 : vector<8x32xf32>
    %103 = arith.negf %102 : vector<8x32xf32>
    %104 = math.exp %103 : vector<8x32xf32>
    %cst_26 = arith.constant 1.000000e+00 : f32
    %105 = vector.broadcast %cst_26 : f32 to vector<8x32xf32>
    %106 = arith.addf %105, %104 : vector<8x32xf32>
    %107 = arith.divf %105, %106 : vector<8x32xf32>
    %108 = vector.extract_strided_slice %87 {offsets = [0, 64], sizes = [8, 32], strides = [1, 1]} : vector<8x96xf32> to vector<8x32xf32>
    %109 = vector.extract_strided_slice %91 {offsets = [0, 64], sizes = [8, 32], strides = [1, 1]} : vector<8x96xf32> to vector<8x32xf32>
    %110 = arith.mulf %99, %109 : vector<8x32xf32>
    %111 = arith.addf %108, %110 : vector<8x32xf32>
    %112 = math.tanh %111 : vector<8x32xf32>
    %cst_27 = arith.constant 1.000000e+00 : f32
    %113 = vector.broadcast %cst_27 : f32 to vector<8x32xf32>
    %114 = arith.subf %113, %107 : vector<8x32xf32>
    %115 = arith.mulf %114, %112 : vector<8x32xf32>
    %116 = arith.mulf %107, %52 : vector<8x32xf32>
    %117 = arith.addf %115, %116 : vector<8x32xf32>
    %cst_28 = arith.constant dense<0.000000e+00> : vector<8x96xf32>
    %118 = tpu.matmul %117, %2, %cst_28 {dimension_numbers = #tpu.dot_dimension_numbers<[1], [0], [0], [1], [0, 0, 1, 1], [], []>} : vector<8x32xf32>, vector<32x96xf32>, vector<8x96xf32> -> vector<8x96xf32>
    %119 = arith.addf %118, %12 : vector<8x96xf32>
    %120 = vector.extract_strided_slice %90 {offsets = [0, 96], sizes = [8, 96], strides = [1, 1]} : vector<8x192xf32> to vector<8x96xf32>
    %121 = vector.extract_strided_slice %119 {offsets = [0, 0], sizes = [8, 32], strides = [1, 1]} : vector<8x96xf32> to vector<8x32xf32>
    %122 = vector.extract_strided_slice %120 {offsets = [0, 0], sizes = [8, 32], strides = [1, 1]} : vector<8x96xf32> to vector<8x32xf32>
    %123 = arith.addf %121, %122 : vector<8x32xf32>
    %124 = arith.negf %123 : vector<8x32xf32>
    %125 = math.exp %124 : vector<8x32xf32>
    %cst_29 = arith.constant 1.000000e+00 : f32
    %126 = vector.broadcast %cst_29 : f32 to vector<8x32xf32>
    %127 = arith.addf %126, %125 : vector<8x32xf32>
    %128 = arith.divf %126, %127 : vector<8x32xf32>
    %129 = vector.extract_strided_slice %119 {offsets = [0, 32], sizes = [8, 32], strides = [1, 1]} : vector<8x96xf32> to vector<8x32xf32>
    %130 = vector.extract_strided_slice %120 {offsets = [0, 32], sizes = [8, 32], strides = [1, 1]} : vector<8x96xf32> to vector<8x32xf32>
    %131 = arith.addf %129, %130 : vector<8x32xf32>
    %132 = arith.negf %131 : vector<8x32xf32>
    %133 = math.exp %132 : vector<8x32xf32>
    %cst_30 = arith.constant 1.000000e+00 : f32
    %134 = vector.broadcast %cst_30 : f32 to vector<8x32xf32>
    %135 = arith.addf %134, %133 : vector<8x32xf32>
    %136 = arith.divf %134, %135 : vector<8x32xf32>
    %137 = vector.extract_strided_slice %119 {offsets = [0, 64], sizes = [8, 32], strides = [1, 1]} : vector<8x96xf32> to vector<8x32xf32>
    %138 = vector.extract_strided_slice %120 {offsets = [0, 64], sizes = [8, 32], strides = [1, 1]} : vector<8x96xf32> to vector<8x32xf32>
    %139 = arith.mulf %128, %138 : vector<8x32xf32>
    %140 = arith.addf %137, %139 : vector<8x32xf32>
    %141 = math.tanh %140 : vector<8x32xf32>
    %cst_31 = arith.constant 1.000000e+00 : f32
    %142 = vector.broadcast %cst_31 : f32 to vector<8x32xf32>
    %143 = arith.subf %142, %136 : vector<8x32xf32>
    %144 = arith.mulf %143, %141 : vector<8x32xf32>
    %145 = arith.mulf %136, %81 : vector<8x32xf32>
    %146 = arith.addf %144, %145 : vector<8x32xf32>
    %147 = arith.index_cast %85 : i32 to index
    %c0_32 = arith.constant 0 : index
    %148 = vector.load %arg15[%147, %c0_32] : memref<64x32xf32, #tpu.memory_space<vmem>>, vector<8x32xf32>
    tpu.vector_store %arg15[%147, %c0_32], %146 {strides = array<i32>} : memref<64x32xf32, #tpu.memory_space<vmem>>, vector<8x32xf32>,
    %c2_i32 = arith.constant 2 : i32
    %c8_i32_33 = arith.constant 8 : i32
    %149 = arith.muli %c2_i32, %c8_i32_33 : i32
    %150 = tpu.assume_multiple %149, 8 : i32
    %151 = arith.index_cast %150 : i32 to index
    %c0_34 = arith.constant 0 : index
    %152 = vector.load %arg14[%151, %c0_34] : memref<64x96xf32, #tpu.memory_space<vmem>>, vector<8x96xf32>
    %153 = tpu.concatenate %117, %146 in 1 : vector<8x32xf32>, vector<8x32xf32> -> vector<8x64xf32>
    %cst_35 = arith.constant dense<0.000000e+00> : vector<8x192xf32>
    %154 = tpu.matmul %153, %1, %cst_35 {dimension_numbers = #tpu.dot_dimension_numbers<[1], [0], [0], [1], [0, 0, 1, 1], [], []>} : vector<8x64xf32>, vector<64x192xf32>, vector<8x192xf32> -> vector<8x192xf32>
    %155 = arith.addf %154, %9 : vector<8x192xf32>
    %156 = vector.extract_strided_slice %155 {offsets = [0, 0], sizes = [8, 96], strides = [1, 1]} : vector<8x192xf32> to vector<8x96xf32>
    %157 = vector.extract_strided_slice %152 {offsets = [0, 0], sizes = [8, 32], strides = [1, 1]} : vector<8x96xf32> to vector<8x32xf32>
    %158 = vector.extract_strided_slice %156 {offsets = [0, 0], sizes = [8, 32], strides = [1, 1]} : vector<8x96xf32> to vector<8x32xf32>
    %159 = arith.addf %157, %158 : vector<8x32xf32>
    %160 = arith.negf %159 : vector<8x32xf32>
    %161 = math.exp %160 : vector<8x32xf32>
    %cst_36 = arith.constant 1.000000e+00 : f32
    %162 = vector.broadcast %cst_36 : f32 to vector<8x32xf32>
    %163 = arith.addf %162, %161 : vector<8x32xf32>
    %164 = arith.divf %162, %163 : vector<8x32xf32>
    %165 = vector.extract_strided_slice %152 {offsets = [0, 32], sizes = [8, 32], strides = [1, 1]} : vector<8x96xf32> to vector<8x32xf32>
    %166 = vector.extract_strided_slice %156 {offsets = [0, 32], sizes = [8, 32], strides = [1, 1]} : vector<8x96xf32> to vector<8x32xf32>
    %167 = arith.addf %165, %166 : vector<8x32xf32>
    %168 = arith.negf %167 : vector<8x32xf32>
    %169 = math.exp %168 : vector<8x32xf32>
    %cst_37 = arith.constant 1.000000e+00 : f32
    %170 = vector.broadcast %cst_37 : f32 to vector<8x32xf32>
    %171 = arith.addf %170, %169 : vector<8x32xf32>
    %172 = arith.divf %170, %171 : vector<8x32xf32>
    %173 = vector.extract_strided_slice %152 {offsets = [0, 64], sizes = [8, 32], strides = [1, 1]} : vector<8x96xf32> to vector<8x32xf32>
    %174 = vector.extract_strided_slice %156 {offsets = [0, 64], sizes = [8, 32], strides = [1, 1]} : vector<8x96xf32> to vector<8x32xf32>
    %175 = arith.mulf %164, %174 : vector<8x32xf32>
    %176 = arith.addf %173, %175 : vector<8x32xf32>
    %177 = math.tanh %176 : vector<8x32xf32>
    %cst_38 = arith.constant 1.000000e+00 : f32
    %178 = vector.broadcast %cst_38 : f32 to vector<8x32xf32>
    %179 = arith.subf %178, %172 : vector<8x32xf32>
    %180 = arith.mulf %179, %177 : vector<8x32xf32>
    %181 = arith.mulf %172, %117 : vector<8x32xf32>
    %182 = arith.addf %180, %181 : vector<8x32xf32>
    %cst_39 = arith.constant dense<0.000000e+00> : vector<8x96xf32>
    %183 = tpu.matmul %182, %2, %cst_39 {dimension_numbers = #tpu.dot_dimension_numbers<[1], [0], [0], [1], [0, 0, 1, 1], [], []>} : vector<8x32xf32>, vector<32x96xf32>, vector<8x96xf32> -> vector<8x96xf32>
    %184 = arith.addf %183, %12 : vector<8x96xf32>
    %185 = vector.extract_strided_slice %155 {offsets = [0, 96], sizes = [8, 96], strides = [1, 1]} : vector<8x192xf32> to vector<8x96xf32>
    %186 = vector.extract_strided_slice %184 {offsets = [0, 0], sizes = [8, 32], strides = [1, 1]} : vector<8x96xf32> to vector<8x32xf32>
    %187 = vector.extract_strided_slice %185 {offsets = [0, 0], sizes = [8, 32], strides = [1, 1]} : vector<8x96xf32> to vector<8x32xf32>
    %188 = arith.addf %186, %187 : vector<8x32xf32>
    %189 = arith.negf %188 : vector<8x32xf32>
    %190 = math.exp %189 : vector<8x32xf32>
    %cst_40 = arith.constant 1.000000e+00 : f32
    %191 = vector.broadcast %cst_40 : f32 to vector<8x32xf32>
    %192 = arith.addf %191, %190 : vector<8x32xf32>
    %193 = arith.divf %191, %192 : vector<8x32xf32>
    %194 = vector.extract_strided_slice %184 {offsets = [0, 32], sizes = [8, 32], strides = [1, 1]} : vector<8x96xf32> to vector<8x32xf32>
    %195 = vector.extract_strided_slice %185 {offsets = [0, 32], sizes = [8, 32], strides = [1, 1]} : vector<8x96xf32> to vector<8x32xf32>
    %196 = arith.addf %194, %195 : vector<8x32xf32>
    %197 = arith.negf %196 : vector<8x32xf32>
    %198 = math.exp %197 : vector<8x32xf32>
    %cst_41 = arith.constant 1.000000e+00 : f32
    %199 = vector.broadcast %cst_41 : f32 to vector<8x32xf32>
    %200 = arith.addf %199, %198 : vector<8x32xf32>
    %201 = arith.divf %199, %200 : vector<8x32xf32>
    %202 = vector.extract_strided_slice %184 {offsets = [0, 64], sizes = [8, 32], strides = [1, 1]} : vector<8x96xf32> to vector<8x32xf32>
    %203 = vector.extract_strided_slice %185 {offsets = [0, 64], sizes = [8, 32], strides = [1, 1]} : vector<8x96xf32> to vector<8x32xf32>
    %204 = arith.mulf %193, %203 : vector<8x32xf32>
    %205 = arith.addf %202, %204 : vector<8x32xf32>
    %206 = math.tanh %205 : vector<8x32xf32>
    %cst_42 = arith.constant 1.000000e+00 : f32
    %207 = vector.broadcast %cst_42 : f32 to vector<8x32xf32>
    %208 = arith.subf %207, %201 : vector<8x32xf32>
    %209 = arith.mulf %208, %206 : vector<8x32xf32>
    %210 = arith.mulf %201, %146 : vector<8x32xf32>
    %211 = arith.addf %209, %210 : vector<8x32xf32>
    %212 = arith.index_cast %150 : i32 to index
    %c0_43 = arith.constant 0 : index
    %213 = vector.load %arg15[%212, %c0_43] : memref<64x32xf32, #tpu.memory_space<vmem>>, vector<8x32xf32>
    tpu.vector_store %arg15[%212, %c0_43], %211 {strides = array<i32>} : memref<64x32xf32, #tpu.memory_space<vmem>>, vector<8x32xf32>,
    %c3_i32 = arith.constant 3 : i32
    %c8_i32_44 = arith.constant 8 : i32
    %214 = arith.muli %c3_i32, %c8_i32_44 : i32
    %215 = tpu.assume_multiple %214, 8 : i32
    %216 = arith.index_cast %215 : i32 to index
    %c0_45 = arith.constant 0 : index
    %217 = vector.load %arg14[%216, %c0_45] : memref<64x96xf32, #tpu.memory_space<vmem>>, vector<8x96xf32>
    %218 = tpu.concatenate %182, %211 in 1 : vector<8x32xf32>, vector<8x32xf32> -> vector<8x64xf32>
    %cst_46 = arith.constant dense<0.000000e+00> : vector<8x192xf32>
    %219 = tpu.matmul %218, %1, %cst_46 {dimension_numbers = #tpu.dot_dimension_numbers<[1], [0], [0], [1], [0, 0, 1, 1], [], []>} : vector<8x64xf32>, vector<64x192xf32>, vector<8x192xf32> -> vector<8x192xf32>
    %220 = arith.addf %219, %9 : vector<8x192xf32>
    %221 = vector.extract_strided_slice %220 {offsets = [0, 0], sizes = [8, 96], strides = [1, 1]} : vector<8x192xf32> to vector<8x96xf32>
    %222 = vector.extract_strided_slice %217 {offsets = [0, 0], sizes = [8, 32], strides = [1, 1]} : vector<8x96xf32> to vector<8x32xf32>
    %223 = vector.extract_strided_slice %221 {offsets = [0, 0], sizes = [8, 32], strides = [1, 1]} : vector<8x96xf32> to vector<8x32xf32>
    %224 = arith.addf %222, %223 : vector<8x32xf32>
    %225 = arith.negf %224 : vector<8x32xf32>
    %226 = math.exp %225 : vector<8x32xf32>
    %cst_47 = arith.constant 1.000000e+00 : f32
    %227 = vector.broadcast %cst_47 : f32 to vector<8x32xf32>
    %228 = arith.addf %227, %226 : vector<8x32xf32>
    %229 = arith.divf %227, %228 : vector<8x32xf32>
    %230 = vector.extract_strided_slice %217 {offsets = [0, 32], sizes = [8, 32], strides = [1, 1]} : vector<8x96xf32> to vector<8x32xf32>
    %231 = vector.extract_strided_slice %221 {offsets = [0, 32], sizes = [8, 32], strides = [1, 1]} : vector<8x96xf32> to vector<8x32xf32>
    %232 = arith.addf %230, %231 : vector<8x32xf32>
    %233 = arith.negf %232 : vector<8x32xf32>
    %234 = math.exp %233 : vector<8x32xf32>
    %cst_48 = arith.constant 1.000000e+00 : f32
    %235 = vector.broadcast %cst_48 : f32 to vector<8x32xf32>
    %236 = arith.addf %235, %234 : vector<8x32xf32>
    %237 = arith.divf %235, %236 : vector<8x32xf32>
    %238 = vector.extract_strided_slice %217 {offsets = [0, 64], sizes = [8, 32], strides = [1, 1]} : vector<8x96xf32> to vector<8x32xf32>
    %239 = vector.extract_strided_slice %221 {offsets = [0, 64], sizes = [8, 32], strides = [1, 1]} : vector<8x96xf32> to vector<8x32xf32>
    %240 = arith.mulf %229, %239 : vector<8x32xf32>
    %241 = arith.addf %238, %240 : vector<8x32xf32>
    %242 = math.tanh %241 : vector<8x32xf32>
    %cst_49 = arith.constant 1.000000e+00 : f32
    %243 = vector.broadcast %cst_49 : f32 to vector<8x32xf32>
    %244 = arith.subf %243, %237 : vector<8x32xf32>
    %245 = arith.mulf %244, %242 : vector<8x32xf32>
    %246 = arith.mulf %237, %182 : vector<8x32xf32>
    %247 = arith.addf %245, %246 : vector<8x32xf32>
    %cst_50 = arith.constant dense<0.000000e+00> : vector<8x96xf32>
    %248 = tpu.matmul %247, %2, %cst_50 {dimension_numbers = #tpu.dot_dimension_numbers<[1], [0], [0], [1], [0, 0, 1, 1], [], []>} : vector<8x32xf32>, vector<32x96xf32>, vector<8x96xf32> -> vector<8x96xf32>
    %249 = arith.addf %248, %12 : vector<8x96xf32>
    %250 = vector.extract_strided_slice %220 {offsets = [0, 96], sizes = [8, 96], strides = [1, 1]} : vector<8x192xf32> to vector<8x96xf32>
    %251 = vector.extract_strided_slice %249 {offsets = [0, 0], sizes = [8, 32], strides = [1, 1]} : vector<8x96xf32> to vector<8x32xf32>
    %252 = vector.extract_strided_slice %250 {offsets = [0, 0], sizes = [8, 32], strides = [1, 1]} : vector<8x96xf32> to vector<8x32xf32>
    %253 = arith.addf %251, %252 : vector<8x32xf32>
    %254 = arith.negf %253 : vector<8x32xf32>
    %255 = math.exp %254 : vector<8x32xf32>
    %cst_51 = arith.constant 1.000000e+00 : f32
    %256 = vector.broadcast %cst_51 : f32 to vector<8x32xf32>
    %257 = arith.addf %256, %255 : vector<8x32xf32>
    %258 = arith.divf %256, %257 : vector<8x32xf32>
    %259 = vector.extract_strided_slice %249 {offsets = [0, 32], sizes = [8, 32], strides = [1, 1]} : vector<8x96xf32> to vector<8x32xf32>
    %260 = vector.extract_strided_slice %250 {offsets = [0, 32], sizes = [8, 32], strides = [1, 1]} : vector<8x96xf32> to vector<8x32xf32>
    %261 = arith.addf %259, %260 : vector<8x32xf32>
    %262 = arith.negf %261 : vector<8x32xf32>
    %263 = math.exp %262 : vector<8x32xf32>
    %cst_52 = arith.constant 1.000000e+00 : f32
    %264 = vector.broadcast %cst_52 : f32 to vector<8x32xf32>
    %265 = arith.addf %264, %263 : vector<8x32xf32>
    %266 = arith.divf %264, %265 : vector<8x32xf32>
    %267 = vector.extract_strided_slice %249 {offsets = [0, 64], sizes = [8, 32], strides = [1, 1]} : vector<8x96xf32> to vector<8x32xf32>
    %268 = vector.extract_strided_slice %250 {offsets = [0, 64], sizes = [8, 32], strides = [1, 1]} : vector<8x96xf32> to vector<8x32xf32>
    %269 = arith.mulf %258, %268 : vector<8x32xf32>
    %270 = arith.addf %267, %269 : vector<8x32xf32>
    %271 = math.tanh %270 : vector<8x32xf32>
    %cst_53 = arith.constant 1.000000e+00 : f32
    %272 = vector.broadcast %cst_53 : f32 to vector<8x32xf32>
    %273 = arith.subf %272, %266 : vector<8x32xf32>
    %274 = arith.mulf %273, %271 : vector<8x32xf32>
    %275 = arith.mulf %266, %211 : vector<8x32xf32>
    %276 = arith.addf %274, %275 : vector<8x32xf32>
    %277 = arith.index_cast %215 : i32 to index
    %c0_54 = arith.constant 0 : index
    %278 = vector.load %arg15[%277, %c0_54] : memref<64x32xf32, #tpu.memory_space<vmem>>, vector<8x32xf32>
    tpu.vector_store %arg15[%277, %c0_54], %276 {strides = array<i32>} : memref<64x32xf32, #tpu.memory_space<vmem>>, vector<8x32xf32>,
    %c4_i32 = arith.constant 4 : i32
    %c8_i32_55 = arith.constant 8 : i32
    %279 = arith.muli %c4_i32, %c8_i32_55 : i32
    %280 = tpu.assume_multiple %279, 8 : i32
    %281 = arith.index_cast %280 : i32 to index
    %c0_56 = arith.constant 0 : index
    %282 = vector.load %arg14[%281, %c0_56] : memref<64x96xf32, #tpu.memory_space<vmem>>, vector<8x96xf32>
    %283 = tpu.concatenate %247, %276 in 1 : vector<8x32xf32>, vector<8x32xf32> -> vector<8x64xf32>
    %cst_57 = arith.constant dense<0.000000e+00> : vector<8x192xf32>
    %284 = tpu.matmul %283, %1, %cst_57 {dimension_numbers = #tpu.dot_dimension_numbers<[1], [0], [0], [1], [0, 0, 1, 1], [], []>} : vector<8x64xf32>, vector<64x192xf32>, vector<8x192xf32> -> vector<8x192xf32>
    %285 = arith.addf %284, %9 : vector<8x192xf32>
    %286 = vector.extract_strided_slice %285 {offsets = [0, 0], sizes = [8, 96], strides = [1, 1]} : vector<8x192xf32> to vector<8x96xf32>
    %287 = vector.extract_strided_slice %282 {offsets = [0, 0], sizes = [8, 32], strides = [1, 1]} : vector<8x96xf32> to vector<8x32xf32>
    %288 = vector.extract_strided_slice %286 {offsets = [0, 0], sizes = [8, 32], strides = [1, 1]} : vector<8x96xf32> to vector<8x32xf32>
    %289 = arith.addf %287, %288 : vector<8x32xf32>
    %290 = arith.negf %289 : vector<8x32xf32>
    %291 = math.exp %290 : vector<8x32xf32>
    %cst_58 = arith.constant 1.000000e+00 : f32
    %292 = vector.broadcast %cst_58 : f32 to vector<8x32xf32>
    %293 = arith.addf %292, %291 : vector<8x32xf32>
    %294 = arith.divf %292, %293 : vector<8x32xf32>
    %295 = vector.extract_strided_slice %282 {offsets = [0, 32], sizes = [8, 32], strides = [1, 1]} : vector<8x96xf32> to vector<8x32xf32>
    %296 = vector.extract_strided_slice %286 {offsets = [0, 32], sizes = [8, 32], strides = [1, 1]} : vector<8x96xf32> to vector<8x32xf32>
    %297 = arith.addf %295, %296 : vector<8x32xf32>
    %298 = arith.negf %297 : vector<8x32xf32>
    %299 = math.exp %298 : vector<8x32xf32>
    %cst_59 = arith.constant 1.000000e+00 : f32
    %300 = vector.broadcast %cst_59 : f32 to vector<8x32xf32>
    %301 = arith.addf %300, %299 : vector<8x32xf32>
    %302 = arith.divf %300, %301 : vector<8x32xf32>
    %303 = vector.extract_strided_slice %282 {offsets = [0, 64], sizes = [8, 32], strides = [1, 1]} : vector<8x96xf32> to vector<8x32xf32>
    %304 = vector.extract_strided_slice %286 {offsets = [0, 64], sizes = [8, 32], strides = [1, 1]} : vector<8x96xf32> to vector<8x32xf32>
    %305 = arith.mulf %294, %304 : vector<8x32xf32>
    %306 = arith.addf %303, %305 : vector<8x32xf32>
    %307 = math.tanh %306 : vector<8x32xf32>
    %cst_60 = arith.constant 1.000000e+00 : f32
    %308 = vector.broadcast %cst_60 : f32 to vector<8x32xf32>
    %309 = arith.subf %308, %302 : vector<8x32xf32>
    %310 = arith.mulf %309, %307 : vector<8x32xf32>
    %311 = arith.mulf %302, %247 : vector<8x32xf32>
    %312 = arith.addf %310, %311 : vector<8x32xf32>
    %cst_61 = arith.constant dense<0.000000e+00> : vector<8x96xf32>
    %313 = tpu.matmul %312, %2, %cst_61 {dimension_numbers = #tpu.dot_dimension_numbers<[1], [0], [0], [1], [0, 0, 1, 1], [], []>} : vector<8x32xf32>, vector<32x96xf32>, vector<8x96xf32> -> vector<8x96xf32>
    %314 = arith.addf %313, %12 : vector<8x96xf32>
    %315 = vector.extract_strided_slice %285 {offsets = [0, 96], sizes = [8, 96], strides = [1, 1]} : vector<8x192xf32> to vector<8x96xf32>
    %316 = vector.extract_strided_slice %314 {offsets = [0, 0], sizes = [8, 32], strides = [1, 1]} : vector<8x96xf32> to vector<8x32xf32>
    %317 = vector.extract_strided_slice %315 {offsets = [0, 0], sizes = [8, 32], strides = [1, 1]} : vector<8x96xf32> to vector<8x32xf32>
    %318 = arith.addf %316, %317 : vector<8x32xf32>
    %319 = arith.negf %318 : vector<8x32xf32>
    %320 = math.exp %319 : vector<8x32xf32>
    %cst_62 = arith.constant 1.000000e+00 : f32
    %321 = vector.broadcast %cst_62 : f32 to vector<8x32xf32>
    %322 = arith.addf %321, %320 : vector<8x32xf32>
    %323 = arith.divf %321, %322 : vector<8x32xf32>
    %324 = vector.extract_strided_slice %314 {offsets = [0, 32], sizes = [8, 32], strides = [1, 1]} : vector<8x96xf32> to vector<8x32xf32>
    %325 = vector.extract_strided_slice %315 {offsets = [0, 32], sizes = [8, 32], strides = [1, 1]} : vector<8x96xf32> to vector<8x32xf32>
    %326 = arith.addf %324, %325 : vector<8x32xf32>
    %327 = arith.negf %326 : vector<8x32xf32>
    %328 = math.exp %327 : vector<8x32xf32>
    %cst_63 = arith.constant 1.000000e+00 : f32
    %329 = vector.broadcast %cst_63 : f32 to vector<8x32xf32>
    %330 = arith.addf %329, %328 : vector<8x32xf32>
    %331 = arith.divf %329, %330 : vector<8x32xf32>
    %332 = vector.extract_strided_slice %314 {offsets = [0, 64], sizes = [8, 32], strides = [1, 1]} : vector<8x96xf32> to vector<8x32xf32>
    %333 = vector.extract_strided_slice %315 {offsets = [0, 64], sizes = [8, 32], strides = [1, 1]} : vector<8x96xf32> to vector<8x32xf32>
    %334 = arith.mulf %323, %333 : vector<8x32xf32>
    %335 = arith.addf %332, %334 : vector<8x32xf32>
    %336 = math.tanh %335 : vector<8x32xf32>
    %cst_64 = arith.constant 1.000000e+00 : f32
    %337 = vector.broadcast %cst_64 : f32 to vector<8x32xf32>
    %338 = arith.subf %337, %331 : vector<8x32xf32>
    %339 = arith.mulf %338, %336 : vector<8x32xf32>
    %340 = arith.mulf %331, %276 : vector<8x32xf32>
    %341 = arith.addf %339, %340 : vector<8x32xf32>
    %342 = arith.index_cast %280 : i32 to index
    %c0_65 = arith.constant 0 : index
    %343 = vector.load %arg15[%342, %c0_65] : memref<64x32xf32, #tpu.memory_space<vmem>>, vector<8x32xf32>
    tpu.vector_store %arg15[%342, %c0_65], %341 {strides = array<i32>} : memref<64x32xf32, #tpu.memory_space<vmem>>, vector<8x32xf32>,
    %c5_i32 = arith.constant 5 : i32
    %c8_i32_66 = arith.constant 8 : i32
    %344 = arith.muli %c5_i32, %c8_i32_66 : i32
    %345 = tpu.assume_multiple %344, 8 : i32
    %346 = arith.index_cast %345 : i32 to index
    %c0_67 = arith.constant 0 : index
    %347 = vector.load %arg14[%346, %c0_67] : memref<64x96xf32, #tpu.memory_space<vmem>>, vector<8x96xf32>
    %348 = tpu.concatenate %312, %341 in 1 : vector<8x32xf32>, vector<8x32xf32> -> vector<8x64xf32>
    %cst_68 = arith.constant dense<0.000000e+00> : vector<8x192xf32>
    %349 = tpu.matmul %348, %1, %cst_68 {dimension_numbers = #tpu.dot_dimension_numbers<[1], [0], [0], [1], [0, 0, 1, 1], [], []>} : vector<8x64xf32>, vector<64x192xf32>, vector<8x192xf32> -> vector<8x192xf32>
    %350 = arith.addf %349, %9 : vector<8x192xf32>
    %351 = vector.extract_strided_slice %350 {offsets = [0, 0], sizes = [8, 96], strides = [1, 1]} : vector<8x192xf32> to vector<8x96xf32>
    %352 = vector.extract_strided_slice %347 {offsets = [0, 0], sizes = [8, 32], strides = [1, 1]} : vector<8x96xf32> to vector<8x32xf32>
    %353 = vector.extract_strided_slice %351 {offsets = [0, 0], sizes = [8, 32], strides = [1, 1]} : vector<8x96xf32> to vector<8x32xf32>
    %354 = arith.addf %352, %353 : vector<8x32xf32>
    %355 = arith.negf %354 : vector<8x32xf32>
    %356 = math.exp %355 : vector<8x32xf32>
    %cst_69 = arith.constant 1.000000e+00 : f32
    %357 = vector.broadcast %cst_69 : f32 to vector<8x32xf32>
    %358 = arith.addf %357, %356 : vector<8x32xf32>
    %359 = arith.divf %357, %358 : vector<8x32xf32>
    %360 = vector.extract_strided_slice %347 {offsets = [0, 32], sizes = [8, 32], strides = [1, 1]} : vector<8x96xf32> to vector<8x32xf32>
    %361 = vector.extract_strided_slice %351 {offsets = [0, 32], sizes = [8, 32], strides = [1, 1]} : vector<8x96xf32> to vector<8x32xf32>
    %362 = arith.addf %360, %361 : vector<8x32xf32>
    %363 = arith.negf %362 : vector<8x32xf32>
    %364 = math.exp %363 : vector<8x32xf32>
    %cst_70 = arith.constant 1.000000e+00 : f32
    %365 = vector.broadcast %cst_70 : f32 to vector<8x32xf32>
    %366 = arith.addf %365, %364 : vector<8x32xf32>
    %367 = arith.divf %365, %366 : vector<8x32xf32>
    %368 = vector.extract_strided_slice %347 {offsets = [0, 64], sizes = [8, 32], strides = [1, 1]} : vector<8x96xf32> to vector<8x32xf32>
    %369 = vector.extract_strided_slice %351 {offsets = [0, 64], sizes = [8, 32], strides = [1, 1]} : vector<8x96xf32> to vector<8x32xf32>
    %370 = arith.mulf %359, %369 : vector<8x32xf32>
    %371 = arith.addf %368, %370 : vector<8x32xf32>
    %372 = math.tanh %371 : vector<8x32xf32>
    %cst_71 = arith.constant 1.000000e+00 : f32
    %373 = vector.broadcast %cst_71 : f32 to vector<8x32xf32>
    %374 = arith.subf %373, %367 : vector<8x32xf32>
    %375 = arith.mulf %374, %372 : vector<8x32xf32>
    %376 = arith.mulf %367, %312 : vector<8x32xf32>
    %377 = arith.addf %375, %376 : vector<8x32xf32>
    %cst_72 = arith.constant dense<0.000000e+00> : vector<8x96xf32>
    %378 = tpu.matmul %377, %2, %cst_72 {dimension_numbers = #tpu.dot_dimension_numbers<[1], [0], [0], [1], [0, 0, 1, 1], [], []>} : vector<8x32xf32>, vector<32x96xf32>, vector<8x96xf32> -> vector<8x96xf32>
    %379 = arith.addf %378, %12 : vector<8x96xf32>
    %380 = vector.extract_strided_slice %350 {offsets = [0, 96], sizes = [8, 96], strides = [1, 1]} : vector<8x192xf32> to vector<8x96xf32>
    %381 = vector.extract_strided_slice %379 {offsets = [0, 0], sizes = [8, 32], strides = [1, 1]} : vector<8x96xf32> to vector<8x32xf32>
    %382 = vector.extract_strided_slice %380 {offsets = [0, 0], sizes = [8, 32], strides = [1, 1]} : vector<8x96xf32> to vector<8x32xf32>
    %383 = arith.addf %381, %382 : vector<8x32xf32>
    %384 = arith.negf %383 : vector<8x32xf32>
    %385 = math.exp %384 : vector<8x32xf32>
    %cst_73 = arith.constant 1.000000e+00 : f32
    %386 = vector.broadcast %cst_73 : f32 to vector<8x32xf32>
    %387 = arith.addf %386, %385 : vector<8x32xf32>
    %388 = arith.divf %386, %387 : vector<8x32xf32>
    %389 = vector.extract_strided_slice %379 {offsets = [0, 32], sizes = [8, 32], strides = [1, 1]} : vector<8x96xf32> to vector<8x32xf32>
    %390 = vector.extract_strided_slice %380 {offsets = [0, 32], sizes = [8, 32], strides = [1, 1]} : vector<8x96xf32> to vector<8x32xf32>
    %391 = arith.addf %389, %390 : vector<8x32xf32>
    %392 = arith.negf %391 : vector<8x32xf32>
    %393 = math.exp %392 : vector<8x32xf32>
    %cst_74 = arith.constant 1.000000e+00 : f32
    %394 = vector.broadcast %cst_74 : f32 to vector<8x32xf32>
    %395 = arith.addf %394, %393 : vector<8x32xf32>
    %396 = arith.divf %394, %395 : vector<8x32xf32>
    %397 = vector.extract_strided_slice %379 {offsets = [0, 64], sizes = [8, 32], strides = [1, 1]} : vector<8x96xf32> to vector<8x32xf32>
    %398 = vector.extract_strided_slice %380 {offsets = [0, 64], sizes = [8, 32], strides = [1, 1]} : vector<8x96xf32> to vector<8x32xf32>
    %399 = arith.mulf %388, %398 : vector<8x32xf32>
    %400 = arith.addf %397, %399 : vector<8x32xf32>
    %401 = math.tanh %400 : vector<8x32xf32>
    %cst_75 = arith.constant 1.000000e+00 : f32
    %402 = vector.broadcast %cst_75 : f32 to vector<8x32xf32>
    %403 = arith.subf %402, %396 : vector<8x32xf32>
    %404 = arith.mulf %403, %401 : vector<8x32xf32>
    %405 = arith.mulf %396, %341 : vector<8x32xf32>
    %406 = arith.addf %404, %405 : vector<8x32xf32>
    %407 = arith.index_cast %345 : i32 to index
    %c0_76 = arith.constant 0 : index
    %408 = vector.load %arg15[%407, %c0_76] : memref<64x32xf32, #tpu.memory_space<vmem>>, vector<8x32xf32>
    tpu.vector_store %arg15[%407, %c0_76], %406 {strides = array<i32>} : memref<64x32xf32, #tpu.memory_space<vmem>>, vector<8x32xf32>,
    %c6_i32 = arith.constant 6 : i32
    %c8_i32_77 = arith.constant 8 : i32
    %409 = arith.muli %c6_i32, %c8_i32_77 : i32
    %410 = tpu.assume_multiple %409, 8 : i32
    %411 = arith.index_cast %410 : i32 to index
    %c0_78 = arith.constant 0 : index
    %412 = vector.load %arg14[%411, %c0_78] : memref<64x96xf32, #tpu.memory_space<vmem>>, vector<8x96xf32>
    %413 = tpu.concatenate %377, %406 in 1 : vector<8x32xf32>, vector<8x32xf32> -> vector<8x64xf32>
    %cst_79 = arith.constant dense<0.000000e+00> : vector<8x192xf32>
    %414 = tpu.matmul %413, %1, %cst_79 {dimension_numbers = #tpu.dot_dimension_numbers<[1], [0], [0], [1], [0, 0, 1, 1], [], []>} : vector<8x64xf32>, vector<64x192xf32>, vector<8x192xf32> -> vector<8x192xf32>
    %415 = arith.addf %414, %9 : vector<8x192xf32>
    %416 = vector.extract_strided_slice %415 {offsets = [0, 0], sizes = [8, 96], strides = [1, 1]} : vector<8x192xf32> to vector<8x96xf32>
    %417 = vector.extract_strided_slice %412 {offsets = [0, 0], sizes = [8, 32], strides = [1, 1]} : vector<8x96xf32> to vector<8x32xf32>
    %418 = vector.extract_strided_slice %416 {offsets = [0, 0], sizes = [8, 32], strides = [1, 1]} : vector<8x96xf32> to vector<8x32xf32>
    %419 = arith.addf %417, %418 : vector<8x32xf32>
    %420 = arith.negf %419 : vector<8x32xf32>
    %421 = math.exp %420 : vector<8x32xf32>
    %cst_80 = arith.constant 1.000000e+00 : f32
    %422 = vector.broadcast %cst_80 : f32 to vector<8x32xf32>
    %423 = arith.addf %422, %421 : vector<8x32xf32>
    %424 = arith.divf %422, %423 : vector<8x32xf32>
    %425 = vector.extract_strided_slice %412 {offsets = [0, 32], sizes = [8, 32], strides = [1, 1]} : vector<8x96xf32> to vector<8x32xf32>
    %426 = vector.extract_strided_slice %416 {offsets = [0, 32], sizes = [8, 32], strides = [1, 1]} : vector<8x96xf32> to vector<8x32xf32>
    %427 = arith.addf %425, %426 : vector<8x32xf32>
    %428 = arith.negf %427 : vector<8x32xf32>
    %429 = math.exp %428 : vector<8x32xf32>
    %cst_81 = arith.constant 1.000000e+00 : f32
    %430 = vector.broadcast %cst_81 : f32 to vector<8x32xf32>
    %431 = arith.addf %430, %429 : vector<8x32xf32>
    %432 = arith.divf %430, %431 : vector<8x32xf32>
    %433 = vector.extract_strided_slice %412 {offsets = [0, 64], sizes = [8, 32], strides = [1, 1]} : vector<8x96xf32> to vector<8x32xf32>
    %434 = vector.extract_strided_slice %416 {offsets = [0, 64], sizes = [8, 32], strides = [1, 1]} : vector<8x96xf32> to vector<8x32xf32>
    %435 = arith.mulf %424, %434 : vector<8x32xf32>
    %436 = arith.addf %433, %435 : vector<8x32xf32>
    %437 = math.tanh %436 : vector<8x32xf32>
    %cst_82 = arith.constant 1.000000e+00 : f32
    %438 = vector.broadcast %cst_82 : f32 to vector<8x32xf32>
    %439 = arith.subf %438, %432 : vector<8x32xf32>
    %440 = arith.mulf %439, %437 : vector<8x32xf32>
    %441 = arith.mulf %432, %377 : vector<8x32xf32>
    %442 = arith.addf %440, %441 : vector<8x32xf32>
    %cst_83 = arith.constant dense<0.000000e+00> : vector<8x96xf32>
    %443 = tpu.matmul %442, %2, %cst_83 {dimension_numbers = #tpu.dot_dimension_numbers<[1], [0], [0], [1], [0, 0, 1, 1], [], []>} : vector<8x32xf32>, vector<32x96xf32>, vector<8x96xf32> -> vector<8x96xf32>
    %444 = arith.addf %443, %12 : vector<8x96xf32>
    %445 = vector.extract_strided_slice %415 {offsets = [0, 96], sizes = [8, 96], strides = [1, 1]} : vector<8x192xf32> to vector<8x96xf32>
    %446 = vector.extract_strided_slice %444 {offsets = [0, 0], sizes = [8, 32], strides = [1, 1]} : vector<8x96xf32> to vector<8x32xf32>
    %447 = vector.extract_strided_slice %445 {offsets = [0, 0], sizes = [8, 32], strides = [1, 1]} : vector<8x96xf32> to vector<8x32xf32>
    %448 = arith.addf %446, %447 : vector<8x32xf32>
    %449 = arith.negf %448 : vector<8x32xf32>
    %450 = math.exp %449 : vector<8x32xf32>
    %cst_84 = arith.constant 1.000000e+00 : f32
    %451 = vector.broadcast %cst_84 : f32 to vector<8x32xf32>
    %452 = arith.addf %451, %450 : vector<8x32xf32>
    %453 = arith.divf %451, %452 : vector<8x32xf32>
    %454 = vector.extract_strided_slice %444 {offsets = [0, 32], sizes = [8, 32], strides = [1, 1]} : vector<8x96xf32> to vector<8x32xf32>
    %455 = vector.extract_strided_slice %445 {offsets = [0, 32], sizes = [8, 32], strides = [1, 1]} : vector<8x96xf32> to vector<8x32xf32>
    %456 = arith.addf %454, %455 : vector<8x32xf32>
    %457 = arith.negf %456 : vector<8x32xf32>
    %458 = math.exp %457 : vector<8x32xf32>
    %cst_85 = arith.constant 1.000000e+00 : f32
    %459 = vector.broadcast %cst_85 : f32 to vector<8x32xf32>
    %460 = arith.addf %459, %458 : vector<8x32xf32>
    %461 = arith.divf %459, %460 : vector<8x32xf32>
    %462 = vector.extract_strided_slice %444 {offsets = [0, 64], sizes = [8, 32], strides = [1, 1]} : vector<8x96xf32> to vector<8x32xf32>
    %463 = vector.extract_strided_slice %445 {offsets = [0, 64], sizes = [8, 32], strides = [1, 1]} : vector<8x96xf32> to vector<8x32xf32>
    %464 = arith.mulf %453, %463 : vector<8x32xf32>
    %465 = arith.addf %462, %464 : vector<8x32xf32>
    %466 = math.tanh %465 : vector<8x32xf32>
    %cst_86 = arith.constant 1.000000e+00 : f32
    %467 = vector.broadcast %cst_86 : f32 to vector<8x32xf32>
    %468 = arith.subf %467, %461 : vector<8x32xf32>
    %469 = arith.mulf %468, %466 : vector<8x32xf32>
    %470 = arith.mulf %461, %406 : vector<8x32xf32>
    %471 = arith.addf %469, %470 : vector<8x32xf32>
    %472 = arith.index_cast %410 : i32 to index
    %c0_87 = arith.constant 0 : index
    %473 = vector.load %arg15[%472, %c0_87] : memref<64x32xf32, #tpu.memory_space<vmem>>, vector<8x32xf32>
    tpu.vector_store %arg15[%472, %c0_87], %471 {strides = array<i32>} : memref<64x32xf32, #tpu.memory_space<vmem>>, vector<8x32xf32>,
    %c7_i32 = arith.constant 7 : i32
    %c8_i32_88 = arith.constant 8 : i32
    %474 = arith.muli %c7_i32, %c8_i32_88 : i32
    %475 = tpu.assume_multiple %474, 8 : i32
    %476 = arith.index_cast %475 : i32 to index
    %c0_89 = arith.constant 0 : index
    %477 = vector.load %arg14[%476, %c0_89] : memref<64x96xf32, #tpu.memory_space<vmem>>, vector<8x96xf32>
    %478 = tpu.concatenate %442, %471 in 1 : vector<8x32xf32>, vector<8x32xf32> -> vector<8x64xf32>
    %cst_90 = arith.constant dense<0.000000e+00> : vector<8x192xf32>
    %479 = tpu.matmul %478, %1, %cst_90 {dimension_numbers = #tpu.dot_dimension_numbers<[1], [0], [0], [1], [0, 0, 1, 1], [], []>} : vector<8x64xf32>, vector<64x192xf32>, vector<8x192xf32> -> vector<8x192xf32>
    %480 = arith.addf %479, %9 : vector<8x192xf32>
    %481 = vector.extract_strided_slice %480 {offsets = [0, 0], sizes = [8, 96], strides = [1, 1]} : vector<8x192xf32> to vector<8x96xf32>
    %482 = vector.extract_strided_slice %477 {offsets = [0, 0], sizes = [8, 32], strides = [1, 1]} : vector<8x96xf32> to vector<8x32xf32>
    %483 = vector.extract_strided_slice %481 {offsets = [0, 0], sizes = [8, 32], strides = [1, 1]} : vector<8x96xf32> to vector<8x32xf32>
    %484 = arith.addf %482, %483 : vector<8x32xf32>
    %485 = arith.negf %484 : vector<8x32xf32>
    %486 = math.exp %485 : vector<8x32xf32>
    %cst_91 = arith.constant 1.000000e+00 : f32
    %487 = vector.broadcast %cst_91 : f32 to vector<8x32xf32>
    %488 = arith.addf %487, %486 : vector<8x32xf32>
    %489 = arith.divf %487, %488 : vector<8x32xf32>
    %490 = vector.extract_strided_slice %477 {offsets = [0, 32], sizes = [8, 32], strides = [1, 1]} : vector<8x96xf32> to vector<8x32xf32>
    %491 = vector.extract_strided_slice %481 {offsets = [0, 32], sizes = [8, 32], strides = [1, 1]} : vector<8x96xf32> to vector<8x32xf32>
    %492 = arith.addf %490, %491 : vector<8x32xf32>
    %493 = arith.negf %492 : vector<8x32xf32>
    %494 = math.exp %493 : vector<8x32xf32>
    %cst_92 = arith.constant 1.000000e+00 : f32
    %495 = vector.broadcast %cst_92 : f32 to vector<8x32xf32>
    %496 = arith.addf %495, %494 : vector<8x32xf32>
    %497 = arith.divf %495, %496 : vector<8x32xf32>
    %498 = vector.extract_strided_slice %477 {offsets = [0, 64], sizes = [8, 32], strides = [1, 1]} : vector<8x96xf32> to vector<8x32xf32>
    %499 = vector.extract_strided_slice %481 {offsets = [0, 64], sizes = [8, 32], strides = [1, 1]} : vector<8x96xf32> to vector<8x32xf32>
    %500 = arith.mulf %489, %499 : vector<8x32xf32>
    %501 = arith.addf %498, %500 : vector<8x32xf32>
    %502 = math.tanh %501 : vector<8x32xf32>
    %cst_93 = arith.constant 1.000000e+00 : f32
    %503 = vector.broadcast %cst_93 : f32 to vector<8x32xf32>
    %504 = arith.subf %503, %497 : vector<8x32xf32>
    %505 = arith.mulf %504, %502 : vector<8x32xf32>
    %506 = arith.mulf %497, %442 : vector<8x32xf32>
    %507 = arith.addf %505, %506 : vector<8x32xf32>
    %cst_94 = arith.constant dense<0.000000e+00> : vector<8x96xf32>
    %508 = tpu.matmul %507, %2, %cst_94 {dimension_numbers = #tpu.dot_dimension_numbers<[1], [0], [0], [1], [0, 0, 1, 1], [], []>} : vector<8x32xf32>, vector<32x96xf32>, vector<8x96xf32> -> vector<8x96xf32>
    %509 = arith.addf %508, %12 : vector<8x96xf32>
    %510 = vector.extract_strided_slice %480 {offsets = [0, 96], sizes = [8, 96], strides = [1, 1]} : vector<8x192xf32> to vector<8x96xf32>
    %511 = vector.extract_strided_slice %509 {offsets = [0, 0], sizes = [8, 32], strides = [1, 1]} : vector<8x96xf32> to vector<8x32xf32>
    %512 = vector.extract_strided_slice %510 {offsets = [0, 0], sizes = [8, 32], strides = [1, 1]} : vector<8x96xf32> to vector<8x32xf32>
    %513 = arith.addf %511, %512 : vector<8x32xf32>
    %514 = arith.negf %513 : vector<8x32xf32>
    %515 = math.exp %514 : vector<8x32xf32>
    %cst_95 = arith.constant 1.000000e+00 : f32
    %516 = vector.broadcast %cst_95 : f32 to vector<8x32xf32>
    %517 = arith.addf %516, %515 : vector<8x32xf32>
    %518 = arith.divf %516, %517 : vector<8x32xf32>
    %519 = vector.extract_strided_slice %509 {offsets = [0, 32], sizes = [8, 32], strides = [1, 1]} : vector<8x96xf32> to vector<8x32xf32>
    %520 = vector.extract_strided_slice %510 {offsets = [0, 32], sizes = [8, 32], strides = [1, 1]} : vector<8x96xf32> to vector<8x32xf32>
    %521 = arith.addf %519, %520 : vector<8x32xf32>
    %522 = arith.negf %521 : vector<8x32xf32>
    %523 = math.exp %522 : vector<8x32xf32>
    %cst_96 = arith.constant 1.000000e+00 : f32
    %524 = vector.broadcast %cst_96 : f32 to vector<8x32xf32>
    %525 = arith.addf %524, %523 : vector<8x32xf32>
    %526 = arith.divf %524, %525 : vector<8x32xf32>
    %527 = vector.extract_strided_slice %509 {offsets = [0, 64], sizes = [8, 32], strides = [1, 1]} : vector<8x96xf32> to vector<8x32xf32>
    %528 = vector.extract_strided_slice %510 {offsets = [0, 64], sizes = [8, 32], strides = [1, 1]} : vector<8x96xf32> to vector<8x32xf32>
    %529 = arith.mulf %518, %528 : vector<8x32xf32>
    %530 = arith.addf %527, %529 : vector<8x32xf32>
    %531 = math.tanh %530 : vector<8x32xf32>
    %cst_97 = arith.constant 1.000000e+00 : f32
    %532 = vector.broadcast %cst_97 : f32 to vector<8x32xf32>
    %533 = arith.subf %532, %526 : vector<8x32xf32>
    %534 = arith.mulf %533, %531 : vector<8x32xf32>
    %535 = arith.mulf %526, %471 : vector<8x32xf32>
    %536 = arith.addf %534, %535 : vector<8x32xf32>
    %537 = arith.index_cast %475 : i32 to index
    %c0_98 = arith.constant 0 : index
    %538 = vector.load %arg15[%537, %c0_98] : memref<64x32xf32, #tpu.memory_space<vmem>>, vector<8x32xf32>
    tpu.vector_store %arg15[%537, %c0_98], %536 {strides = array<i32>} : memref<64x32xf32, #tpu.memory_space<vmem>>, vector<8x32xf32>,
    %c8_i32_99 = arith.constant 8 : i32
    %c0_100 = arith.constant 0 : index
    %c0_101 = arith.constant 0 : index
    %539 = vector.load %arg9[%c0_100, %c0_101] : memref<6x32xf32, #tpu.memory_space<vmem>>, vector<6x32xf32>
    %c0_102 = arith.constant 0 : index
    %c0_103 = arith.constant 0 : index
    %540 = vector.load %arg10[%c0_102, %c0_103] : memref<3x16xf32, #tpu.memory_space<vmem>>, vector<3x16xf32>
    %c0_104 = arith.constant 0 : index
    %c0_105 = arith.constant 0 : index
    %541 = vector.load %arg15[%c0_104, %c0_105] : memref<64x32xf32, #tpu.memory_space<vmem>>, vector<64x32xf32>
    %c0_106 = arith.constant 0 : index
    %c0_107 = arith.constant 0 : index
    %542 = vector.load %arg6[%c0_106, %c0_107] : memref<32x32xf32, #tpu.memory_space<vmem>>, vector<32x32xf32>
    %cst_108 = arith.constant dense<0.000000e+00> : vector<64x32xf32>
    %543 = tpu.matmul %541, %542, %cst_108 {dimension_numbers = #tpu.dot_dimension_numbers<[1], [0], [0], [1], [0, 0, 1, 1], [], []>} : vector<64x32xf32>, vector<32x32xf32>, vector<64x32xf32> -> vector<64x32xf32>
    %544 = vector.extract_strided_slice %539 {offsets = [0, 0], sizes = [1, 32], strides = [1, 1]} : vector<6x32xf32> to vector<1x32xf32>
    %545 = vector.broadcast %544 : vector<1x32xf32> to vector<64x32xf32>
    %546 = arith.addf %543, %545 : vector<64x32xf32>
    %547 = vector.extract_strided_slice %539 {offsets = [1, 0], sizes = [1, 32], strides = [1, 1]} : vector<6x32xf32> to vector<1x32xf32>
    %548 = vector.extract_strided_slice %539 {offsets = [2, 0], sizes = [1, 32], strides = [1, 1]} : vector<6x32xf32> to vector<1x32xf32>
    %cst_109 = arith.constant dense<0.000000e+00> : vector<64xf32>
    %549 = vector.multi_reduction <add>, %546, %cst_109 [1] : vector<64x32xf32> to vector<64xf32>
    %550 = vector.shape_cast %549 : vector<64xf32> to vector<64x1xf32>
    %cst_110 = arith.constant 3.200000e+01 : f32
    %551 = vector.broadcast %cst_110 : f32 to vector<64x1xf32>
    %552 = arith.divf %550, %551 : vector<64x1xf32>
    %553 = vector.broadcast %552 : vector<64x1xf32> to vector<64x32xf32>
    %554 = arith.subf %546, %553 : vector<64x32xf32>
    %555 = arith.mulf %554, %554 : vector<64x32xf32>
    %cst_111 = arith.constant dense<0.000000e+00> : vector<64xf32>
    %556 = vector.multi_reduction <add>, %555, %cst_111 [1] : vector<64x32xf32> to vector<64xf32>
    %557 = vector.shape_cast %556 : vector<64xf32> to vector<64x1xf32>
    %cst_112 = arith.constant 3.200000e+01 : f32
    %558 = vector.broadcast %cst_112 : f32 to vector<64x1xf32>
    %559 = arith.divf %557, %558 : vector<64x1xf32>
    %560 = vector.broadcast %552 : vector<64x1xf32> to vector<64x32xf32>
    %561 = arith.subf %546, %560 : vector<64x32xf32>
    %cst_113 = arith.constant 9.99999974E-6 : f32
    %562 = vector.broadcast %cst_113 : f32 to vector<64x1xf32>
    %563 = arith.addf %559, %562 : vector<64x1xf32>
    %564 = math.rsqrt %563 : vector<64x1xf32>
    %565 = vector.broadcast %564 : vector<64x1xf32> to vector<64x32xf32>
    %566 = arith.mulf %561, %565 : vector<64x32xf32>
    %567 = vector.broadcast %547 : vector<1x32xf32> to vector<64x32xf32>
    %568 = arith.mulf %566, %567 : vector<64x32xf32>
    %569 = vector.broadcast %548 : vector<1x32xf32> to vector<64x32xf32>
    %570 = arith.addf %568, %569 : vector<64x32xf32>
    %cst_114 = arith.constant 0.000000e+00 : f32
    %571 = vector.broadcast %cst_114 : f32 to vector<64x32xf32>
    %572 = arith.cmpf ogt, %570, %571 : vector<64x32xf32>
    %cst_115 = arith.constant 1.000000e-01 : f32
    %573 = vector.broadcast %cst_115 : f32 to vector<64x32xf32>
    %574 = arith.mulf %573, %570 : vector<64x32xf32>
    %575 = arith.select %572, %570, %574 : vector<64x32xi1>, vector<64x32xf32>
    %c0_116 = arith.constant 0 : index
    %c0_117 = arith.constant 0 : index
    %576 = vector.load %arg7[%c0_116, %c0_117] : memref<32x32xf32, #tpu.memory_space<vmem>>, vector<32x32xf32>
    %cst_118 = arith.constant dense<0.000000e+00> : vector<64x32xf32>
    %577 = tpu.matmul %575, %576, %cst_118 {dimension_numbers = #tpu.dot_dimension_numbers<[1], [0], [0], [1], [0, 0, 1, 1], [], []>} : vector<64x32xf32>, vector<32x32xf32>, vector<64x32xf32> -> vector<64x32xf32>
    %578 = vector.extract_strided_slice %539 {offsets = [3, 0], sizes = [1, 32], strides = [1, 1]} : vector<6x32xf32> to vector<1x32xf32>
    %579 = vector.broadcast %578 : vector<1x32xf32> to vector<64x32xf32>
    %580 = arith.addf %577, %579 : vector<64x32xf32>
    %581 = vector.extract_strided_slice %539 {offsets = [4, 0], sizes = [1, 32], strides = [1, 1]} : vector<6x32xf32> to vector<1x32xf32>
    %582 = vector.extract_strided_slice %539 {offsets = [5, 0], sizes = [1, 32], strides = [1, 1]} : vector<6x32xf32> to vector<1x32xf32>
    %cst_119 = arith.constant dense<0.000000e+00> : vector<64xf32>
    %583 = vector.multi_reduction <add>, %580, %cst_119 [1] : vector<64x32xf32> to vector<64xf32>
    %584 = vector.shape_cast %583 : vector<64xf32> to vector<64x1xf32>
    %cst_120 = arith.constant 3.200000e+01 : f32
    %585 = vector.broadcast %cst_120 : f32 to vector<64x1xf32>
    %586 = arith.divf %584, %585 : vector<64x1xf32>
    %587 = vector.broadcast %586 : vector<64x1xf32> to vector<64x32xf32>
    %588 = arith.subf %580, %587 : vector<64x32xf32>
    %589 = arith.mulf %588, %588 : vector<64x32xf32>
    %cst_121 = arith.constant dense<0.000000e+00> : vector<64xf32>
    %590 = vector.multi_reduction <add>, %589, %cst_121 [1] : vector<64x32xf32> to vector<64xf32>
    %591 = vector.shape_cast %590 : vector<64xf32> to vector<64x1xf32>
    %cst_122 = arith.constant 3.200000e+01 : f32
    %592 = vector.broadcast %cst_122 : f32 to vector<64x1xf32>
    %593 = arith.divf %591, %592 : vector<64x1xf32>
    %594 = vector.broadcast %586 : vector<64x1xf32> to vector<64x32xf32>
    %595 = arith.subf %580, %594 : vector<64x32xf32>
    %cst_123 = arith.constant 9.99999974E-6 : f32
    %596 = vector.broadcast %cst_123 : f32 to vector<64x1xf32>
    %597 = arith.addf %593, %596 : vector<64x1xf32>
    %598 = math.rsqrt %597 : vector<64x1xf32>
    %599 = vector.broadcast %598 : vector<64x1xf32> to vector<64x32xf32>
    %600 = arith.mulf %595, %599 : vector<64x32xf32>
    %601 = vector.broadcast %581 : vector<1x32xf32> to vector<64x32xf32>
    %602 = arith.mulf %600, %601 : vector<64x32xf32>
    %603 = vector.broadcast %582 : vector<1x32xf32> to vector<64x32xf32>
    %604 = arith.addf %602, %603 : vector<64x32xf32>
    %cst_124 = arith.constant 0.000000e+00 : f32
    %605 = vector.broadcast %cst_124 : f32 to vector<64x32xf32>
    %606 = arith.cmpf ogt, %604, %605 : vector<64x32xf32>
    %cst_125 = arith.constant 1.000000e-01 : f32
    %607 = vector.broadcast %cst_125 : f32 to vector<64x32xf32>
    %608 = arith.mulf %607, %604 : vector<64x32xf32>
    %609 = arith.select %606, %604, %608 : vector<64x32xi1>, vector<64x32xf32>
    %c0_126 = arith.constant 0 : index
    %c0_127 = arith.constant 0 : index
    %610 = vector.load %arg8[%c0_126, %c0_127] : memref<32x16xf32, #tpu.memory_space<vmem>>, vector<32x16xf32>
    %cst_128 = arith.constant dense<0.000000e+00> : vector<64x16xf32>
    %611 = tpu.matmul %609, %610, %cst_128 {dimension_numbers = #tpu.dot_dimension_numbers<[1], [0], [0], [1], [0, 0, 1, 1], [], []>} : vector<64x32xf32>, vector<32x16xf32>, vector<64x16xf32> -> vector<64x16xf32>
    %612 = vector.extract_strided_slice %540 {offsets = [0, 0], sizes = [1, 16], strides = [1, 1]} : vector<3x16xf32> to vector<1x16xf32>
    %613 = vector.broadcast %612 : vector<1x16xf32> to vector<64x16xf32>
    %614 = arith.addf %611, %613 : vector<64x16xf32>
    %615 = vector.extract_strided_slice %540 {offsets = [1, 0], sizes = [1, 16], strides = [1, 1]} : vector<3x16xf32> to vector<1x16xf32>
    %616 = vector.extract_strided_slice %540 {offsets = [2, 0], sizes = [1, 16], strides = [1, 1]} : vector<3x16xf32> to vector<1x16xf32>
    %cst_129 = arith.constant dense<0.000000e+00> : vector<64xf32>
    %617 = vector.multi_reduction <add>, %614, %cst_129 [1] : vector<64x16xf32> to vector<64xf32>
    %618 = vector.shape_cast %617 : vector<64xf32> to vector<64x1xf32>
    %cst_130 = arith.constant 1.600000e+01 : f32
    %619 = vector.broadcast %cst_130 : f32 to vector<64x1xf32>
    %620 = arith.divf %618, %619 : vector<64x1xf32>
    %621 = vector.broadcast %620 : vector<64x1xf32> to vector<64x16xf32>
    %622 = arith.subf %614, %621 : vector<64x16xf32>
    %623 = arith.mulf %622, %622 : vector<64x16xf32>
    %cst_131 = arith.constant dense<0.000000e+00> : vector<64xf32>
    %624 = vector.multi_reduction <add>, %623, %cst_131 [1] : vector<64x16xf32> to vector<64xf32>
    %625 = vector.shape_cast %624 : vector<64xf32> to vector<64x1xf32>
    %cst_132 = arith.constant 1.600000e+01 : f32
    %626 = vector.broadcast %cst_132 : f32 to vector<64x1xf32>
    %627 = arith.divf %625, %626 : vector<64x1xf32>
    %628 = vector.broadcast %620 : vector<64x1xf32> to vector<64x16xf32>
    %629 = arith.subf %614, %628 : vector<64x16xf32>
    %cst_133 = arith.constant 9.99999974E-6 : f32
    %630 = vector.broadcast %cst_133 : f32 to vector<64x1xf32>
    %631 = arith.addf %627, %630 : vector<64x1xf32>
    %632 = math.rsqrt %631 : vector<64x1xf32>
    %633 = vector.broadcast %632 : vector<64x1xf32> to vector<64x16xf32>
    %634 = arith.mulf %629, %633 : vector<64x16xf32>
    %635 = vector.broadcast %615 : vector<1x16xf32> to vector<64x16xf32>
    %636 = arith.mulf %634, %635 : vector<64x16xf32>
    %637 = vector.broadcast %616 : vector<1x16xf32> to vector<64x16xf32>
    %638 = arith.addf %636, %637 : vector<64x16xf32>
    %cst_134 = arith.constant 0.000000e+00 : f32
    %639 = vector.broadcast %cst_134 : f32 to vector<64x16xf32>
    %640 = arith.cmpf ogt, %638, %639 : vector<64x16xf32>
    %cst_135 = arith.constant 1.000000e-01 : f32
    %641 = vector.broadcast %cst_135 : f32 to vector<64x16xf32>
    %642 = arith.mulf %641, %638 : vector<64x16xf32>
    %643 = arith.select %640, %638, %642 : vector<64x16xi1>, vector<64x16xf32>
    %c0_136 = arith.constant 0 : index
    %c0_137 = arith.constant 0 : index
    %644 = vector.load %arg11[%c0_136, %c0_137] : memref<16x256xf32, #tpu.memory_space<vmem>>, vector<16x256xf32>
    %cst_138 = arith.constant dense<0.000000e+00> : vector<64x256xf32>
    %645 = tpu.matmul %643, %644, %cst_138 {dimension_numbers = #tpu.dot_dimension_numbers<[1], [0], [0], [1], [0, 0, 1, 1], [], []>} : vector<64x16xf32>, vector<16x256xf32>, vector<64x256xf32> -> vector<64x256xf32>
    %c0_139 = arith.constant 0 : index
    %c0_140 = arith.constant 0 : index
    %646 = vector.load %arg12[%c0_139, %c0_140] : memref<1x256xf32, #tpu.memory_space<vmem>>, vector<1x256xf32>
    %647 = vector.broadcast %646 : vector<1x256xf32> to vector<64x256xf32>
    %648 = arith.addf %645, %647 : vector<64x256xf32>
    %649 = vector.extract_strided_slice %648 {offsets = [0, 0], sizes = [64, 128], strides = [1, 1]} : vector<64x256xf32> to vector<64x128xf32>
    %650 = vector.extract_strided_slice %648 {offsets = [0, 128], sizes = [64, 128], strides = [1, 1]} : vector<64x256xf32> to vector<64x128xf32>
    %651 = math.exp %650 : vector<64x128xf32>
    %c0_141 = arith.constant 0 : index
    %c0_142 = arith.constant 0 : index
    %652 = vector.load %arg1[%c0_141, %c0_142] : memref<64x128xf32, #tpu.memory_space<vmem>>, vector<64x128xf32>
    %653 = arith.mulf %651, %652 : vector<64x128xf32>
    %654 = arith.addf %649, %653 : vector<64x128xf32>
    %c0_143 = arith.constant 0 : index
    %c0_144 = arith.constant 0 : index
    %655 = vector.load %arg13[%c0_143, %c0_144] : memref<64x128xf32, #tpu.memory_space<vmem>>, vector<64x128xf32>
    tpu.vector_store %arg13[%c0_143, %c0_144], %654 {strides = array<i32>} : memref<64x128xf32, #tpu.memory_space<vmem>>, vector<64x128xf32>,
    return
  }
}

</mosaic_0001>

<llo_original>
// kernel: _lambda_.1
$region0: #{_lambda_.1}
  #allocation0 [shape = 'u32[]', space=smem, size = 0x4, offset = 0x4, fixed_abs, tag = 'smem constant byte address 0x4 - core index']
  #allocation1 [shape = 'u32[144,128]{1,0:T(1,128)}', space=vmem, size = 0x12000, scoped, tag = 'internal scratch']
  #allocation2 [shape = 'f32[64,96]{1,0:T(8,128)}', space=vmem, size = 0x8000, scoped, tag = 'scratch operand']
  #allocation3 [shape = 'f32[64,32]{1,0:T(8,128)}', space=vmem, size = 0x8000, scoped, tag = 'scratch operand']
  %s0 = inlined_call_operand.vmem [shape: f32[64,16], index: 0, kind: input, shape index: {}]
  %s1 = inlined_call_operand.vmem [shape: f32[64,128], index: 1, kind: input, shape index: {}]
  %s2 = inlined_call_operand.hbm [shape: f32[16,96], index: 2, kind: input, shape index: {}]
  %s3 = inlined_call_operand.vmem [shape: f32[64,192], index: 3, kind: input, shape index: {}]
  %s4 = inlined_call_operand.vmem [shape: f32[32,96], index: 4, kind: input, shape index: {}]
  %s5 = inlined_call_operand.vmem [shape: f32[4,96], index: 5, kind: input, shape index: {}]
  %s6 = inlined_call_operand.vmem [shape: f32[32,32], index: 6, kind: input, shape index: {}]
  %s7 = inlined_call_operand.vmem [shape: f32[32,32], index: 7, kind: input, shape index: {}]
  %s8 = inlined_call_operand.vmem [shape: f32[32,16], index: 8, kind: input, shape index: {}]
  %s9 = inlined_call_operand.vmem [shape: f32[6,32], index: 9, kind: input, shape index: {}]
  %s10 = inlined_call_operand.vmem [shape: f32[3,16], index: 10, kind: input, shape index: {}]
  %s11 = inlined_call_operand.vmem [shape: f32[16,256], index: 11, kind: input, shape index: {}]
  %s12 = inlined_call_operand.vmem [shape: f32[1,256], index: 12, kind: input, shape index: {}]
  %s13 = inlined_call_operand.vmem [shape: f32[64,128], index: 13, kind: output, shape index: {}]
  %s14 = sld [smem:[#allocation0]]
  $region66: #{_lambda_.1} parent=0
    _
  %s16 = ssub.s32 1, %s14
  %s17 = scalar_select 0, %s16, %s14
  $region1: #{_lambda_.1} parent=0
    #allocation4 [shape = 'u8[8192]{0}', space=vmem, size = 0x2000, scoped, tag = 'input window, operand 2, single buffered']
    #allocation5 [shape = 's32[1]{0}', space=sflag, size = 0x4, scoped, tag = 'scoped memory for _lambda_.1']
    %18 = vsyncpa [#allocation5], 0
    // Predicated region
    $region2: #{_lambda_.1} parent=1 // pred_check
      _
    $region3: #{_lambda_.1} parent=1 // pred_check_branch
      %20 = sbr.rel (0) target = $region5
    $region4: #{_lambda_.1} parent=1 // pred_region
      _
    $region5: #{_lambda_.1} parent=1 // pred_fallthru
      _
    // Predicated region
    $region6: #{_lambda_.1} parent=1 // pred_check
      _
    $region7: #{_lambda_.1} parent=1 // pred_check_branch
      %22 = sbr.rel (0) target = $region9
    $region8: #{_lambda_.1} parent=1 // pred_region
      _
    $region9: #{_lambda_.1} parent=1 // pred_fallthru
      _
    // Predicated region
    $region10: #{_lambda_.1} parent=1 // pred_check
      _
    $region11: #{_lambda_.1} parent=1 // pred_check_branch
      %24 = sbr.rel (0) target = $region13
    $region12: #{_lambda_.1} parent=1 // pred_region
      %s26 = ssub.s32 256, 256
      %27 = vsyncadd [#allocation5], %s26
      %s28 = sshll.u32 [#allocation4], 4
      %s29 = int_to_ptr.vmem [resolvable:$true] %s28
      %34 = dma.hbm_to_vmem [thread:$0]  %s2, 256, %s29, [#allocation5], 128, 128, 8
    $region13: #{_lambda_.1} parent=1 // pred_fallthru
      _
    // Predicated region
    $region14: #{_lambda_.1} parent=1 // pred_check
      _
    $region15: #{_lambda_.1} parent=1 // pred_check_branch
      %36 = sbr.rel (0) target = $region17
    $region16: #{_lambda_.1} parent=1 // pred_region
      _
    $region17: #{_lambda_.1} parent=1 // pred_fallthru
      _
    // Predicated region
    $region18: #{_lambda_.1} parent=1 // pred_check
      _
    $region19: #{_lambda_.1} parent=1 // pred_check_branch
      %38 = sbr.rel (0) target = $region21
    $region20: #{_lambda_.1} parent=1 // pred_region
      _
    $region21: #{_lambda_.1} parent=1 // pred_fallthru
      _
    // Predicated region
    $region22: #{_lambda_.1} parent=1 // pred_check
      _
    $region23: #{_lambda_.1} parent=1 // pred_check_branch
      %40 = sbr.rel (0) target = $region25
    $region24: #{_lambda_.1} parent=1 // pred_region
      _
    $region25: #{_lambda_.1} parent=1 // pred_fallthru
      _
    // Predicated region
    $region26: #{_lambda_.1} parent=1 // pred_check
      _
    $region27: #{_lambda_.1} parent=1 // pred_check_branch
      %42 = sbr.rel (0) target = $region29
    $region28: #{_lambda_.1} parent=1 // pred_region
      _
    $region29: #{_lambda_.1} parent=1 // pred_fallthru
      _
    // Predicated region
    $region30: #{_lambda_.1} parent=1 // pred_check
      _
    $region31: #{_lambda_.1} parent=1 // pred_check_branch
      %44 = sbr.rel (0) target = $region33
    $region32: #{_lambda_.1} parent=1 // pred_region
      _
    $region33: #{_lambda_.1} parent=1 // pred_fallthru
      _
    // Predicated region
    $region34: #{_lambda_.1} parent=1 // pred_check
      _
    $region35: #{_lambda_.1} parent=1 // pred_check_branch
      %46 = sbr.rel (0) target = $region37
    $region36: #{_lambda_.1} parent=1 // pred_region
      _
    $region37: #{_lambda_.1} parent=1 // pred_fallthru
      _
    // Predicated region
    $region38: #{_lambda_.1} parent=1 // pred_check
      _
    $region39: #{_lambda_.1} parent=1 // pred_check_branch
      %48 = sbr.rel (0) target = $region41
    $region40: #{_lambda_.1} parent=1 // pred_region
      _
    $region41: #{_lambda_.1} parent=1 // pred_fallthru
      _
    // Predicated region
    $region42: #{_lambda_.1} parent=1 // pred_check
      _
    $region43: #{_lambda_.1} parent=1 // pred_check_branch
      %50 = sbr.rel (0) target = $region45
    $region44: #{_lambda_.1} parent=1 // pred_region
      _
    $region45: #{_lambda_.1} parent=1 // pred_fallthru
      _
    // Predicated region
    $region46: #{_lambda_.1} parent=1 // pred_check
      _
    $region47: #{_lambda_.1} parent=1 // pred_check_branch
      %52 = sbr.rel (0) target = $region49
    $region48: #{_lambda_.1} parent=1 // pred_region
      _
    $region49: #{_lambda_.1} parent=1 // pred_fallthru
      _
    // Predicated region
    $region50: #{_lambda_.1} parent=1 // pred_check
      _
    $region51: #{_lambda_.1} parent=1 // pred_check_branch
      %54 = sbr.rel (0) target = $region53
    $region52: #{_lambda_.1} parent=1 // pred_region
      _
    $region53: #{_lambda_.1} parent=1 // pred_fallthru
      _
    // Predicated region
    $region54: #{_lambda_.1} parent=1 // pred_check
      _
    $region55: #{_lambda_.1} parent=1 // pred_check_branch
      %56 = sbr.rel (0) target = $region57
    $region56: #{_lambda_.1} parent=1 // pred_region
      %57 = dma.done [#allocation5], 256
    $region57: #{_lambda_.1} parent=1 // pred_fallthru
      _
    %v58 = vld [vmem:[#allocation4] sm:$0xff]
    %v59 = vld [vmem:[#allocation4 + $0x8] sm:$0xff]
    %v60 = vld [vmem:[%s3] sm:$0xff]
    %v61 = vld [vmem:[%s3 + $0x8] sm:$0xff]
    %v62 = vld [vmem:[%s3 + $0x10] sm:$0xff]
    %v63 = vld [vmem:[%s3 + $0x18] sm:$0xff]
    %v64 = vld [vmem:[%s3 + $0x20] sm:$0xff]
    %v65 = vld [vmem:[%s3 + $0x28] sm:$0xff]
    %v66 = vld [vmem:[%s3 + $0x30] sm:$0xff]
    %v67 = vld [vmem:[%s3 + $0x38] sm:$0xff]
    %v68 = vld [vmem:[%s3 + $0x40] sm:$0xff]
    %v69 = vld [vmem:[%s3 + $0x48] sm:$0xff]
    %v70 = vld [vmem:[%s3 + $0x50] sm:$0xff]
    %v71 = vld [vmem:[%s3 + $0x58] sm:$0xff]
    %v72 = vld [vmem:[%s3 + $0x60] sm:$0xff]
    %v73 = vld [vmem:[%s3 + $0x68] sm:$0xff]
    %v74 = vld [vmem:[%s3 + $0x70] sm:$0xff]
    %v75 = vld [vmem:[%s3 + $0x78] sm:$0xff]
    %v76 = vld [vmem:[%s4] sm:$0xff]
    %v77 = vld [vmem:[%s4 + $0x8] sm:$0xff]
    %v78 = vld [vmem:[%s4 + $0x10] sm:$0xff]
    %v79 = vld [vmem:[%s4 + $0x18] sm:$0xff]
    %v80 = vld [vmem:[%s5] sm:$0xf]
    %v82 = vrot.slane %v80, 2
    %83 = vrot.lane.b32.xlu0 %v82, 96
    %v84 = vpop.permute.xlu0 %83
    %vm86 = vcmask 785408
    %v87 = vsel %vm86, %v80, %v84
    %v88 = vlaneseq
    %v89 = vshrl.u32 %v88, 7
    %v90 = vsub.s32 1, %v89
    %v91 = vrot.slane %v87, %v90
    %v92 = vlaneseq
    %v93 = vshrl.u32 %v92, 7
    %v94 = vsub.s32 1, %v93
    %v95 = vrot.slane %v84, %v94
    %v96 = vlaneseq
    %v97 = vshrl.u32 %v96, 7
    %v98 = vsub.s32 2, %v97
    %v99 = vrot.slane %v80, %v98
    %v100 = vld [vmem:[%s0] sm:$0xff]
    %v101 = vld [vmem:[%s0 + $0x8] sm:$0xff]
    %v102 = vld [vmem:[%s0 + $0x10] sm:$0xff]
    %v103 = vld [vmem:[%s0 + $0x18] sm:$0xff]
    %v104 = vld [vmem:[%s0 + $0x20] sm:$0xff]
    %v105 = vld [vmem:[%s0 + $0x28] sm:$0xff]
    %v106 = vld [vmem:[%s0 + $0x30] sm:$0xff]
    %v107 = vld [vmem:[%s0 + $0x38] sm:$0xff]
    %v108 = vlaneseq
    %v109 = vshrl.u32 %v108, 7
    %v110 = vsub.s32 0, %v109
    %v111 = vrot.slane %v80, %v110
    %vm112 = vcmask 130048
    %v114 = vsel %vm112, %v100, 0
    %v117 = vsel %vm112, %v101, 0
    %v120 = vsel %vm112, %v102, 0
    %v123 = vsel %vm112, %v103, 0
    %v126 = vsel %vm112, %v104, 0
    %v129 = vsel %vm112, %v105, 0
    %v132 = vsel %vm112, %v106, 0
    %v135 = vsel %vm112, %v107, 0
    %137 = vmatprep.subr.mxu0 0.0
    %138 = vmatpush1.msra.mxu0 %v58
    %139 = vmatprep.subr.mxu0 0.0
    %140 = vmatpush1.msra.mxu0 %v59
    %141 = vmatprep.subr.mxu0 0.0
    %142 = vmatpush1.msra.mxu0 0.0
    %143 = vmatprep.subr.mxu0 0.0
    %144 = vmatpush1.msra.mxu0 0.0
    %145 = vmatprep.subr.mxu0 0.0
    %146 = vmatpush1.msra.mxu0 0.0
    %147 = vmatprep.subr.mxu0 0.0
    %148 = vmatpush1.msra.mxu0 0.0
    %149 = vmatprep.subr.mxu0 0.0
    %150 = vmatpush1.msra.mxu0 0.0
    %151 = vmatprep.subr.mxu0 0.0
    %152 = vmatpush1.msra.mxu0 0.0
    %153 = vmatprep.subr.mxu0 0.0
    %154 = vmatpush1.msra.mxu0 0.0
    %155 = vmatprep.subr.mxu0 0.0
    %156 = vmatpush1.msra.mxu0 0.0
    %157 = vmatprep.subr.mxu0 0.0
    %158 = vmatpush1.msra.mxu0 0.0
    %159 = vmatprep.subr.mxu0 0.0
    %160 = vmatpush1.msra.mxu0 0.0
    %161 = vmatprep.subr.mxu0 0.0
    %162 = vmatpush1.msra.mxu0 0.0
    %163 = vmatprep.subr.mxu0 0.0
    %164 = vmatpush1.msra.mxu0 0.0
    %165 = vmatprep.subr.mxu0 0.0
    %166 = vmatpush1.msra.mxu0 0.0
    %167 = vmatprep.subr.mxu0 0.0
    %168 = vmatpush1.msra.mxu0 0.0
    %169 = vmatprep.subr.mxu0 0.0
    %170 = vmatpush1.msra.mxu0 0.0
    %171 = vmatprep.subr.mxu0 0.0
    %172 = vmatpush1.msra.mxu0 0.0
    %173 = vmatprep.subr.mxu0 0.0
    %174 = vmatpush1.msra.mxu0 0.0
    %175 = vmatprep.subr.mxu0 0.0
    %176 = vmatpush1.msra.mxu0 0.0
    %177 = vmatprep.subr.mxu0 0.0
    %178 = vmatpush1.msra.mxu0 0.0
    %179 = vmatprep.subr.mxu0 0.0
    %180 = vmatpush1.msra.mxu0 0.0
    %181 = vmatprep.subr.mxu0 0.0
    %182 = vmatpush1.msra.mxu0 0.0
    %183 = vmatprep.subr.mxu0 0.0
    %184 = vmatpush1.msra.mxu0 0.0
    %185 = vmatprep.subr.mxu0 0.0
    %186 = vmatpush1.msra.mxu0 0.0
    %187 = vmatprep.subr.mxu0 0.0
    %188 = vmatpush1.msra.mxu0 0.0
    %189 = vmatprep.subr.mxu0 0.0
    %190 = vmatpush1.msra.mxu0 0.0
    %191 = vmatprep.subr.mxu0 0.0
    %192 = vmatpush1.msra.mxu0 0.0
    %193 = vmatprep.subr.mxu0 0.0
    %194 = vmatpush1.msra.mxu0 0.0
    %195 = vmatprep.subr.mxu0 0.0
    %196 = vmatpush1.msra.mxu0 0.0
    %197 = vmatprep.subr.mxu0 0.0
    %198 = vmatpush1.msra.mxu0 0.0
    %199 = vmatprep.subr.mxu0 0.0
    %200 = vmatpush1.msra.mxu0 0.0
    %201 = vmatprep.mubr.f32.mxu0 0.0
    %202 = vmatmul.mubr.f32.gmra.mrb[0].mxu0 %v114
    %v203 = vpop.f32.mrb[0].mxu0
    %v204 = vadd.f32 %v111, %v203
    %v205 = vpop.f32.mrb[0].mxu0
    %206 = vmatprep.mubr.f32.mxu0 0.0
    %207 = vmatmul.mubr.f32.gmra.mrb[0].mxu0 %v117
    %v208 = vpop.f32.mrb[0].mxu0
    %v209 = vadd.f32 %v111, %v208
    %v210 = vpop.f32.mrb[0].mxu0
    %211 = vmatprep.mubr.f32.mxu0 0.0
    %212 = vmatmul.mubr.f32.gmra.mrb[0].mxu0 %v120
    %v213 = vpop.f32.mrb[0].mxu0
    %v214 = vadd.f32 %v111, %v213
    %v215 = vpop.f32.mrb[0].mxu0
    %216 = vmatprep.mubr.f32.mxu0 0.0
    %217 = vmatmul.mubr.f32.gmra.mrb[0].mxu0 %v123
    %v218 = vpop.f32.mrb[0].mxu0
    %v219 = vadd.f32 %v111, %v218
    %v220 = vpop.f32.mrb[0].mxu0
    %221 = vmatprep.mubr.f32.mxu0 0.0
    %222 = vmatmul.mubr.f32.gmra.mrb[0].mxu0 %v126
    %v223 = vpop.f32.mrb[0].mxu0
    %v224 = vadd.f32 %v111, %v223
    %v225 = vpop.f32.mrb[0].mxu0
    %226 = vmatprep.mubr.f32.mxu0 0.0
    %227 = vmatmul.mubr.f32.gmra.mrb[0].mxu0 %v129
    %v228 = vpop.f32.mrb[0].mxu0
    %v229 = vadd.f32 %v111, %v228
    %v230 = vpop.f32.mrb[0].mxu0
    %231 = vmatprep.mubr.f32.mxu0 0.0
    %232 = vmatmul.mubr.f32.gmra.mrb[0].mxu0 %v132
    %v233 = vpop.f32.mrb[0].mxu0
    %v234 = vadd.f32 %v111, %v233
    %v235 = vpop.f32.mrb[0].mxu0
    %236 = vmatprep.mubr.f32.mxu0 0.0
    %237 = vmatmul.mubr.f32.gmra.mrb[0].mxu0 %v135
    %v238 = vpop.f32.mrb[0].mxu0
    %v239 = vadd.f32 %v111, %v238
    %v240 = vpop.f32.mrb[0].mxu0
    %241 = vdwg.mxu0
    %242 = vst.msk [vmem:[#allocation2] sm:$0xff] %vm86, %v204
    %243 = vst.msk [vmem:[#allocation2 + $0x8] sm:$0xff] %vm86, %v209
    %244 = vst.msk [vmem:[#allocation2 + $0x10] sm:$0xff] %vm86, %v214
    %245 = vst.msk [vmem:[#allocation2 + $0x18] sm:$0xff] %vm86, %v219
    %246 = vst.msk [vmem:[#allocation2 + $0x20] sm:$0xff] %vm86, %v224
    %247 = vst.msk [vmem:[#allocation2 + $0x28] sm:$0xff] %vm86, %v229
    %248 = vst.msk [vmem:[#allocation2 + $0x30] sm:$0xff] %vm86, %v234
    %249 = vst.msk [vmem:[#allocation2 + $0x38] sm:$0xff] %vm86, %v239
    %v250 = vld [vmem:[#allocation2] sm:$0xff]
    %vm251 = vcmask 523264
    %v253 = vsel %vm251, 0.0, 0
    %255 = vmatprep.subr.mxu0 %v61
    %256 = vmatpush1.msra.mxu0 %v60
    %257 = vmatprep.subr.mxu0 %v63
    %258 = vmatpush1.msra.mxu0 %v62
    %259 = vmatprep.subr.mxu0 %v65
    %260 = vmatpush1.msra.mxu0 %v64
    %261 = vmatprep.subr.mxu0 %v67
    %262 = vmatpush1.msra.mxu0 %v66
    %263 = vmatprep.subr.mxu0 %v69
    %264 = vmatpush1.msra.mxu0 %v68
    %265 = vmatprep.subr.mxu0 %v71
    %266 = vmatpush1.msra.mxu0 %v70
    %267 = vmatprep.subr.mxu0 %v73
    %268 = vmatpush1.msra.mxu0 %v72
    %269 = vmatprep.subr.mxu0 %v75
    %270 = vmatpush1.msra.mxu0 %v74
    %271 = vmatprep.subr.mxu0 0.0
    %272 = vmatpush1.msra.mxu0 0.0
    %273 = vmatprep.subr.mxu0 0.0
    %274 = vmatpush1.msra.mxu0 0.0
    %275 = vmatprep.subr.mxu0 0.0
    %276 = vmatpush1.msra.mxu0 0.0
    %277 = vmatprep.subr.mxu0 0.0
    %278 = vmatpush1.msra.mxu0 0.0
    %279 = vmatprep.subr.mxu0 0.0
    %280 = vmatpush1.msra.mxu0 0.0
    %281 = vmatprep.subr.mxu0 0.0
    %282 = vmatpush1.msra.mxu0 0.0
    %283 = vmatprep.subr.mxu0 0.0
    %284 = vmatpush1.msra.mxu0 0.0
    %285 = vmatprep.subr.mxu0 0.0
    %286 = vmatpush1.msra.mxu0 0.0
    %287 = vmatprep.subr.mxu0 0.0
    %288 = vmatpush1.msra.mxu0 0.0
    %289 = vmatprep.subr.mxu0 0.0
    %290 = vmatpush1.msra.mxu0 0.0
    %291 = vmatprep.subr.mxu0 0.0
    %292 = vmatpush1.msra.mxu0 0.0
    %293 = vmatprep.subr.mxu0 0.0
    %294 = vmatpush1.msra.mxu0 0.0
    %295 = vmatprep.subr.mxu0 0.0
    %296 = vmatpush1.msra.mxu0 0.0
    %297 = vmatprep.subr.mxu0 0.0
    %298 = vmatpush1.msra.mxu0 0.0
    %299 = vmatprep.subr.mxu0 0.0
    %300 = vmatpush1.msra.mxu0 0.0
    %301 = vmatprep.subr.mxu0 0.0
    %302 = vmatpush1.msra.mxu0 0.0
    %303 = vmatprep.subr.mxu0 0.0
    %304 = vmatpush1.msra.mxu0 0.0
    %305 = vmatprep.subr.mxu0 0.0
    %306 = vmatpush1.msra.mxu0 0.0
    %307 = vmatprep.subr.mxu0 0.0
    %308 = vmatpush1.msra.mxu0 0.0
    %309 = vmatprep.subr.mxu0 0.0
    %310 = vmatpush1.msra.mxu0 0.0
    %311 = vmatprep.subr.mxu0 0.0
    %312 = vmatpush1.msra.mxu0 0.0
    %313 = vmatprep.subr.mxu0 0.0
    %314 = vmatpush1.msra.mxu0 0.0
    %315 = vmatprep.subr.mxu0 0.0
    %316 = vmatpush1.msra.mxu0 0.0
    %317 = vmatprep.subr.mxu0 0.0
    %318 = vmatpush1.msra.mxu0 0.0
    %319 = vmatprep.mubr.f32.mxu0 0.0
    %320 = vmatmul.mubr.f32.gmra.mrb[0].mxu0 %v253
    %v321 = vpop.f32.mrb[0].mxu0
    %v322 = vadd.f32 %v91, %v321
    %v323 = vpop.f32.mrb[0].mxu0
    %v324 = vadd.f32 %v95, %v323
    %325 = vdwg.mxu0
    %v326 = vadd.f32 %v250, %v322
    %v327 = vxor.u32 %v326, 2147483648
    %v328 = vmul.f32 %v327, 1.442695
    %v329 = vpow.pop %v328
    %v330 = vadd.f32 %v329, 1.0
    %v331 = vrcp.pop %v330
    %v332 = vmul.f32 1.0, %v331
    %334 = vrot.lane.b32.xlu0 %v322, 64
    %v335 = vpop.permute.xlu0 %334
    %v337 = vmul.f32 %v332, %v335
    %339 = vrot.lane.b32.xlu0 %v337, 64
    %v340 = vpop.permute.xlu0 %339
    %v342 = vadd.f32 %v250, %v340
    %v343 = vtanh.pop %v342
    %v344 = vsub.f32 1.0, %v332
    %346 = vrot.lane.b32.xlu0 %v343, 96
    %v347 = vpop.permute.xlu0 %346
    %v349 = vmul.f32 %v344, %v347
    %v350 = vmul.f32 %v332, 0.0
    %v351 = vadd.f32 %v349, %v350
    %353 = vrot.lane.b32.xlu0 %v351, 96
    %v354 = vpop.permute.xlu0 %353
    %vm355 = vcmask 261120
    %v356 = vsel %vm355, %v354, 0
    %358 = vmatprep.subr.mxu0 0.0
    %359 = vmatpush1.msra.mxu0 %v76
    %360 = vmatprep.subr.mxu0 0.0
    %361 = vmatpush1.msra.mxu0 %v77
    %362 = vmatprep.subr.mxu0 0.0
    %363 = vmatpush1.msra.mxu0 %v78
    %364 = vmatprep.subr.mxu0 0.0
    %365 = vmatpush1.msra.mxu0 %v79
    %366 = vmatprep.subr.mxu0 0.0
    %367 = vmatpush1.msra.mxu0 0.0
    %368 = vmatprep.subr.mxu0 0.0
    %369 = vmatpush1.msra.mxu0 0.0
    %370 = vmatprep.subr.mxu0 0.0
    %371 = vmatpush1.msra.mxu0 0.0
    %372 = vmatprep.subr.mxu0 0.0
    %373 = vmatpush1.msra.mxu0 0.0
    %374 = vmatprep.subr.mxu0 0.0
    %375 = vmatpush1.msra.mxu0 0.0
    %376 = vmatprep.subr.mxu0 0.0
    %377 = vmatpush1.msra.mxu0 0.0
    %378 = vmatprep.subr.mxu0 0.0
    %379 = vmatpush1.msra.mxu0 0.0
    %380 = vmatprep.subr.mxu0 0.0
    %381 = vmatpush1.msra.mxu0 0.0
    %382 = vmatprep.subr.mxu0 0.0
    %383 = vmatpush1.msra.mxu0 0.0
    %384 = vmatprep.subr.mxu0 0.0
    %385 = vmatpush1.msra.mxu0 0.0
    %386 = vmatprep.subr.mxu0 0.0
    %387 = vmatpush1.msra.mxu0 0.0
    %388 = vmatprep.subr.mxu0 0.0
    %389 = vmatpush1.msra.mxu0 0.0
    %390 = vmatprep.subr.mxu0 0.0
    %391 = vmatpush1.msra.mxu0 0.0
    %392 = vmatprep.subr.mxu0 0.0
    %393 = vmatpush1.msra.mxu0 0.0
    %394 = vmatprep.subr.mxu0 0.0
    %395 = vmatpush1.msra.mxu0 0.0
    %396 = vmatprep.subr.mxu0 0.0
    %397 = vmatpush1.msra.mxu0 0.0
    %398 = vmatprep.subr.mxu0 0.0
    %399 = vmatpush1.msra.mxu0 0.0
    %400 = vmatprep.subr.mxu0 0.0
    %401 = vmatpush1.msra.mxu0 0.0
    %402 = vmatprep.subr.mxu0 0.0
    %403 = vmatpush1.msra.mxu0 0.0
    %404 = vmatprep.subr.mxu0 0.0
    %405 = vmatpush1.msra.mxu0 0.0
    %406 = vmatprep.subr.mxu0 0.0
    %407 = vmatpush1.msra.mxu0 0.0
    %408 = vmatprep.subr.mxu0 0.0
    %409 = vmatpush1.msra.mxu0 0.0
    %410 = vmatprep.subr.mxu0 0.0
    %411 = vmatpush1.msra.mxu0 0.0
    %412 = vmatprep.subr.mxu0 0.0
    %413 = vmatpush1.msra.mxu0 0.0
    %414 = vmatprep.subr.mxu0 0.0
    %415 = vmatpush1.msra.mxu0 0.0
    %416 = vmatprep.subr.mxu0 0.0
    %417 = vmatpush1.msra.mxu0 0.0
    %418 = vmatprep.subr.mxu0 0.0
    %419 = vmatpush1.msra.mxu0 0.0
    %420 = vmatprep.subr.mxu0 0.0
    %421 = vmatpush1.msra.mxu0 0.0
    %422 = vmatprep.mubr.f32.mxu0 0.0
    %423 = vmatmul.mubr.f32.gmra.mrb[0].mxu0 %v356
    %v424 = vpop.f32.mrb[0].mxu0
    %v425 = vadd.f32 %v99, %v424
    %v426 = vpop.f32.mrb[0].mxu0
    %427 = vdwg.mxu0
    %428 = vrot.lane.b32.xlu0 %v322, 32
    %v429 = vpop.permute.xlu0 %428
    %v431 = vadd.f32 %v425, %v429
    %v432 = vxor.u32 %v431, 2147483648
    %v433 = vmul.f32 %v432, 1.442695
    %v434 = vpow.pop %v433
    %v435 = vadd.f32 %v434, 1.0
    %v436 = vrcp.pop %v435
    %v437 = vmul.f32 1.0, %v436
    %439 = vrot.lane.b32.xlu0 %v324, 32
    %v440 = vpop.permute.xlu0 %439
    %v442 = vadd.f32 %v425, %v440
    %v443 = vxor.u32 %v442, 2147483648
    %v444 = vmul.f32 %v443, 1.442695
    %v445 = vpow.pop %v444
    %v446 = vadd.f32 %v445, 1.0
    %v447 = vrcp.pop %v446
    %v448 = vmul.f32 1.0, %v447
    %449 = vrot.lane.b32.xlu0 %v324, 96
    %v450 = vpop.permute.xlu0 %449
    %v452 = vmul.f32 %v437, %v450
    %454 = vrot.lane.b32.xlu0 %v452, 64
    %v455 = vpop.permute.xlu0 %454
    %v457 = vadd.f32 %v425, %v455
    %v458 = vtanh.pop %v457
    %v459 = vsub.f32 1.0, %v448
    %461 = vrot.lane.b32.xlu0 %v458, 96
    %v462 = vpop.permute.xlu0 %461
    %v464 = vmul.f32 %v459, %v462
    %v465 = vmul.f32 %v448, 0.0
    %v466 = vadd.f32 %v464, %v465
    %468 = vrot.lane.b32.xlu0 %v466, 96
    %v469 = vpop.permute.xlu0 %468
    %471 = vst.msk [vmem:[#allocation3] sm:$0xff] %vm355, %v469
    %s472 = scalar_lea.vmem [#allocation2], 8
    %v473 = vld [vmem:[%s472] sm:$0xff]
    %v475 = vsel %vm355, %v354, %v466
    %v477 = vsel %vm251, %v475, 0
    %479 = vmatprep.subr.mxu0 %v61
    %480 = vmatpush1.msra.mxu0 %v60
    %481 = vmatprep.subr.mxu0 %v63
    %482 = vmatpush1.msra.mxu0 %v62
    %483 = vmatprep.subr.mxu0 %v65
    %484 = vmatpush1.msra.mxu0 %v64
    %485 = vmatprep.subr.mxu0 %v67
    %486 = vmatpush1.msra.mxu0 %v66
    %487 = vmatprep.subr.mxu0 %v69
    %488 = vmatpush1.msra.mxu0 %v68
    %489 = vmatprep.subr.mxu0 %v71
    %490 = vmatpush1.msra.mxu0 %v70
    %491 = vmatprep.subr.mxu0 %v73
    %492 = vmatpush1.msra.mxu0 %v72
    %493 = vmatprep.subr.mxu0 %v75
    %494 = vmatpush1.msra.mxu0 %v74
    %495 = vmatprep.subr.mxu0 0.0
    %496 = vmatpush1.msra.mxu0 0.0
    %497 = vmatprep.subr.mxu0 0.0
    %498 = vmatpush1.msra.mxu0 0.0
    %499 = vmatprep.subr.mxu0 0.0
    %500 = vmatpush1.msra.mxu0 0.0
    %501 = vmatprep.subr.mxu0 0.0
    %502 = vmatpush1.msra.mxu0 0.0
    %503 = vmatprep.subr.mxu0 0.0
    %504 = vmatpush1.msra.mxu0 0.0
    %505 = vmatprep.subr.mxu0 0.0
    %506 = vmatpush1.msra.mxu0 0.0
    %507 = vmatprep.subr.mxu0 0.0
    %508 = vmatpush1.msra.mxu0 0.0
    %509 = vmatprep.subr.mxu0 0.0
    %510 = vmatpush1.msra.mxu0 0.0
    %511 = vmatprep.subr.mxu0 0.0
    %512 = vmatpush1.msra.mxu0 0.0
    %513 = vmatprep.subr.mxu0 0.0
    %514 = vmatpush1.msra.mxu0 0.0
    %515 = vmatprep.subr.mxu0 0.0
    %516 = vmatpush1.msra.mxu0 0.0
    %517 = vmatprep.subr.mxu0 0.0
    %518 = vmatpush1.msra.mxu0 0.0
    %519 = vmatprep.subr.mxu0 0.0
    %520 = vmatpush1.msra.mxu0 0.0
    %521 = vmatprep.subr.mxu0 0.0
    %522 = vmatpush1.msra.mxu0 0.0
    %523 = vmatprep.subr.mxu0 0.0
    %524 = vmatpush1.msra.mxu0 0.0
    %525 = vmatprep.subr.mxu0 0.0
    %526 = vmatpush1.msra.mxu0 0.0
    %527 = vmatprep.subr.mxu0 0.0
    %528 = vmatpush1.msra.mxu0 0.0
    %529 = vmatprep.subr.mxu0 0.0
    %530 = vmatpush1.msra.mxu0 0.0
    %531 = vmatprep.subr.mxu0 0.0
    %532 = vmatpush1.msra.mxu0 0.0
    %533 = vmatprep.subr.mxu0 0.0
    %534 = vmatpush1.msra.mxu0 0.0
    %535 = vmatprep.subr.mxu0 0.0
    %536 = vmatpush1.msra.mxu0 0.0
    %537 = vmatprep.subr.mxu0 0.0
    %538 = vmatpush1.msra.mxu0 0.0
    %539 = vmatprep.subr.mxu0 0.0
    %540 = vmatpush1.msra.mxu0 0.0
    %541 = vmatprep.subr.mxu0 0.0
    %542 = vmatpush1.msra.mxu0 0.0
    %543 = vmatprep.mubr.f32.mxu0 0.0
    %544 = vmatmul.mubr.f32.gmra.mrb[0].mxu0 %v477
    %v545 = vpop.f32.mrb[0].mxu0
    %v546 = vadd.f32 %v91, %v545
    %v547 = vpop.f32.mrb[0].mxu0
    %v548 = vadd.f32 %v95, %v547
    %549 = vdwg.mxu0
    %v550 = vadd.f32 %v473, %v546
    %v551 = vxor.u32 %v550, 2147483648
    %v552 = vmul.f32 %v551, 1.442695
    %v553 = vpow.pop %v552
    %v554 = vadd.f32 %v553, 1.0
    %v555 = vrcp.pop %v554
    %v556 = vmul.f32 1.0, %v555
    %558 = vrot.lane.b32.xlu0 %v546, 64
    %v559 = vpop.permute.xlu0 %558
    %v561 = vmul.f32 %v556, %v559
    %563 = vrot.lane.b32.xlu0 %v561, 64
    %v564 = vpop.permute.xlu0 %563
    %v566 = vadd.f32 %v473, %v564
    %v567 = vtanh.pop %v566
    %v568 = vsub.f32 1.0, %v556
    %570 = vrot.lane.b32.xlu0 %v567, 96
    %v571 = vpop.permute.xlu0 %570
    %v573 = vmul.f32 %v568, %v571
    %v574 = vmul.f32 %v556, %v351
    %v575 = vadd.f32 %v573, %v574
    %577 = vrot.lane.b32.xlu0 %v575, 96
    %v578 = vpop.permute.xlu0 %577
    %v579 = vsel %vm355, %v578, 0
    %581 = vmatprep.subr.mxu0 0.0
    %582 = vmatpush1.msra.mxu0 %v76
    %583 = vmatprep.subr.mxu0 0.0
    %584 = vmatpush1.msra.mxu0 %v77
    %585 = vmatprep.subr.mxu0 0.0
    %586 = vmatpush1.msra.mxu0 %v78
    %587 = vmatprep.subr.mxu0 0.0
    %588 = vmatpush1.msra.mxu0 %v79
    %589 = vmatprep.subr.mxu0 0.0
    %590 = vmatpush1.msra.mxu0 0.0
    %591 = vmatprep.subr.mxu0 0.0
    %592 = vmatpush1.msra.mxu0 0.0
    %593 = vmatprep.subr.mxu0 0.0
    %594 = vmatpush1.msra.mxu0 0.0
    %595 = vmatprep.subr.mxu0 0.0
    %596 = vmatpush1.msra.mxu0 0.0
    %597 = vmatprep.subr.mxu0 0.0
    %598 = vmatpush1.msra.mxu0 0.0
    %599 = vmatprep.subr.mxu0 0.0
    %600 = vmatpush1.msra.mxu0 0.0
    %601 = vmatprep.subr.mxu0 0.0
    %602 = vmatpush1.msra.mxu0 0.0
    %603 = vmatprep.subr.mxu0 0.0
    %604 = vmatpush1.msra.mxu0 0.0
    %605 = vmatprep.subr.mxu0 0.0
    %606 = vmatpush1.msra.mxu0 0.0
    %607 = vmatprep.subr.mxu0 0.0
    %608 = vmatpush1.msra.mxu0 0.0
    %609 = vmatprep.subr.mxu0 0.0
    %610 = vmatpush1.msra.mxu0 0.0
    %611 = vmatprep.subr.mxu0 0.0
    %612 = vmatpush1.msra.mxu0 0.0
    %613 = vmatprep.subr.mxu0 0.0
    %614 = vmatpush1.msra.mxu0 0.0
    %615 = vmatprep.subr.mxu0 0.0
    %616 = vmatpush1.msra.mxu0 0.0
    %617 = vmatprep.subr.mxu0 0.0
    %618 = vmatpush1.msra.mxu0 0.0
    %619 = vmatprep.subr.mxu0 0.0
    %620 = vmatpush1.msra.mxu0 0.0
    %621 = vmatprep.subr.mxu0 0.0
    %622 = vmatpush1.msra.mxu0 0.0
    %623 = vmatprep.subr.mxu0 0.0
    %624 = vmatpush1.msra.mxu0 0.0
    %625 = vmatprep.subr.mxu0 0.0
    %626 = vmatpush1.msra.mxu0 0.0
    %627 = vmatprep.subr.mxu0 0.0
    %628 = vmatpush1.msra.mxu0 0.0
    %629 = vmatprep.subr.mxu0 0.0
    %630 = vmatpush1.msra.mxu0 0.0
    %631 = vmatprep.subr.mxu0 0.0
    %632 = vmatpush1.msra.mxu0 0.0
    %633 = vmatprep.subr.mxu0 0.0
    %634 = vmatpush1.msra.mxu0 0.0
    %635 = vmatprep.subr.mxu0 0.0
    %636 = vmatpush1.msra.mxu0 0.0
    %637 = vmatprep.subr.mxu0 0.0
    %638 = vmatpush1.msra.mxu0 0.0
    %639 = vmatprep.subr.mxu0 0.0
    %640 = vmatpush1.msra.mxu0 0.0
    %641 = vmatprep.subr.mxu0 0.0
    %642 = vmatpush1.msra.mxu0 0.0
    %643 = vmatprep.subr.mxu0 0.0
    %644 = vmatpush1.msra.mxu0 0.0
    %645 = vmatprep.mubr.f32.mxu0 0.0
    %646 = vmatmul.mubr.f32.gmra.mrb[0].mxu0 %v579
    %v647 = vpop.f32.mrb[0].mxu0
    %v648 = vadd.f32 %v99, %v647
    %v649 = vpop.f32.mrb[0].mxu0
    %650 = vdwg.mxu0
    %651 = vrot.lane.b32.xlu0 %v546, 32
    %v652 = vpop.permute.xlu0 %651
    %v654 = vadd.f32 %v648, %v652
    %v655 = vxor.u32 %v654, 2147483648
    %v656 = vmul.f32 %v655, 1.442695
    %v657 = vpow.pop %v656
    %v658 = vadd.f32 %v657, 1.0
    %v659 = vrcp.pop %v658
    %v660 = vmul.f32 1.0, %v659
    %662 = vrot.lane.b32.xlu0 %v548, 32
    %v663 = vpop.permute.xlu0 %662
    %v665 = vadd.f32 %v648, %v663
    %v666 = vxor.u32 %v665, 2147483648
    %v667 = vmul.f32 %v666, 1.442695
    %v668 = vpow.pop %v667
    %v669 = vadd.f32 %v668, 1.0
    %v670 = vrcp.pop %v669
    %v671 = vmul.f32 1.0, %v670
    %672 = vrot.lane.b32.xlu0 %v548, 96
    %v673 = vpop.permute.xlu0 %672
    %v675 = vmul.f32 %v660, %v673
    %677 = vrot.lane.b32.xlu0 %v675, 64
    %v678 = vpop.permute.xlu0 %677
    %v680 = vadd.f32 %v648, %v678
    %v681 = vtanh.pop %v680
    %v682 = vsub.f32 1.0, %v671
    %684 = vrot.lane.b32.xlu0 %v681, 96
    %v685 = vpop.permute.xlu0 %684
    %v687 = vmul.f32 %v682, %v685
    %v688 = vmul.f32 %v671, %v466
    %v689 = vadd.f32 %v687, %v688
    %691 = vrot.lane.b32.xlu0 %v689, 96
    %v692 = vpop.permute.xlu0 %691
    %s694 = scalar_lea.vmem [#allocation3], 8
    %695 = vst.msk [vmem:[%s694] sm:$0xff] %vm355, %v692
    %s696 = scalar_lea.vmem [#allocation2], 16
    %v697 = vld [vmem:[%s696] sm:$0xff]
    %v699 = vsel %vm355, %v578, %v689
    %v701 = vsel %vm251, %v699, 0
    %703 = vmatprep.subr.mxu0 %v61
    %704 = vmatpush1.msra.mxu0 %v60
    %705 = vmatprep.subr.mxu0 %v63
    %706 = vmatpush1.msra.mxu0 %v62
    %707 = vmatprep.subr.mxu0 %v65
    %708 = vmatpush1.msra.mxu0 %v64
    %709 = vmatprep.subr.mxu0 %v67
    %710 = vmatpush1.msra.mxu0 %v66
    %711 = vmatprep.subr.mxu0 %v69
    %712 = vmatpush1.msra.mxu0 %v68
    %713 = vmatprep.subr.mxu0 %v71
    %714 = vmatpush1.msra.mxu0 %v70
    %715 = vmatprep.subr.mxu0 %v73
    %716 = vmatpush1.msra.mxu0 %v72
    %717 = vmatprep.subr.mxu0 %v75
    %718 = vmatpush1.msra.mxu0 %v74
    %719 = vmatprep.subr.mxu0 0.0
    %720 = vmatpush1.msra.mxu0 0.0
    %721 = vmatprep.subr.mxu0 0.0
    %722 = vmatpush1.msra.mxu0 0.0
    %723 = vmatprep.subr.mxu0 0.0
    %724 = vmatpush1.msra.mxu0 0.0
    %725 = vmatprep.subr.mxu0 0.0
    %726 = vmatpush1.msra.mxu0 0.0
    %727 = vmatprep.subr.mxu0 0.0
    %728 = vmatpush1.msra.mxu0 0.0
    %729 = vmatprep.subr.mxu0 0.0
    %730 = vmatpush1.msra.mxu0 0.0
    %731 = vmatprep.subr.mxu0 0.0
    %732 = vmatpush1.msra.mxu0 0.0
    %733 = vmatprep.subr.mxu0 0.0
    %734 = vmatpush1.msra.mxu0 0.0
    %735 = vmatprep.subr.mxu0 0.0
    %736 = vmatpush1.msra.mxu0 0.0
    %737 = vmatprep.subr.mxu0 0.0
    %738 = vmatpush1.msra.mxu0 0.0
    %739 = vmatprep.subr.mxu0 0.0
    %740 = vmatpush1.msra.mxu0 0.0
    %741 = vmatprep.subr.mxu0 0.0
    %742 = vmatpush1.msra.mxu0 0.0
    %743 = vmatprep.subr.mxu0 0.0
    %744 = vmatpush1.msra.mxu0 0.0
    %745 = vmatprep.subr.mxu0 0.0
    %746 = vmatpush1.msra.mxu0 0.0
    %747 = vmatprep.subr.mxu0 0.0
    %748 = vmatpush1.msra.mxu0 0.0
    %749 = vmatprep.subr.mxu0 0.0
    %750 = vmatpush1.msra.mxu0 0.0
    %751 = vmatprep.subr.mxu0 0.0
    %752 = vmatpush1.msra.mxu0 0.0
    %753 = vmatprep.subr.mxu0 0.0
    %754 = vmatpush1.msra.mxu0 0.0
    %755 = vmatprep.subr.mxu0 0.0
    %756 = vmatpush1.msra.mxu0 0.0
    %757 = vmatprep.subr.mxu0 0.0
    %758 = vmatpush1.msra.mxu0 0.0
    %759 = vmatprep.subr.mxu0 0.0
    %760 = vmatpush1.msra.mxu0 0.0
    %761 = vmatprep.subr.mxu0 0.0
    %762 = vmatpush1.msra.mxu0 0.0
    %763 = vmatprep.subr.mxu0 0.0
    %764 = vmatpush1.msra.mxu0 0.0
    %765 = vmatprep.subr.mxu0 0.0
    %766 = vmatpush1.msra.mxu0 0.0
    %767 = vmatprep.mubr.f32.mxu0 0.0
    %768 = vmatmul.mubr.f32.gmra.mrb[0].mxu0 %v701
    %v769 = vpop.f32.mrb[0].mxu0
    %v770 = vadd.f32 %v91, %v769
    %v771 = vpop.f32.mrb[0].mxu0
    %v772 = vadd.f32 %v95, %v771
    %773 = vdwg.mxu0
    %v774 = vadd.f32 %v697, %v770
    %v775 = vxor.u32 %v774, 2147483648
    %v776 = vmul.f32 %v775, 1.442695
    %v777 = vpow.pop %v776
    %v778 = vadd.f32 %v777, 1.0
    %v779 = vrcp.pop %v778
    %v780 = vmul.f32 1.0, %v779
    %782 = vrot.lane.b32.xlu0 %v770, 64
    %v783 = vpop.permute.xlu0 %782
    %v785 = vmul.f32 %v780, %v783
    %787 = vrot.lane.b32.xlu0 %v785, 64
    %v788 = vpop.permute.xlu0 %787
    %v790 = vadd.f32 %v697, %v788
    %v791 = vtanh.pop %v790
    %v792 = vsub.f32 1.0, %v780
    %794 = vrot.lane.b32.xlu0 %v791, 96
    %v795 = vpop.permute.xlu0 %794
    %v797 = vmul.f32 %v792, %v795
    %v798 = vmul.f32 %v780, %v575
    %v799 = vadd.f32 %v797, %v798
    %801 = vrot.lane.b32.xlu0 %v799, 96
    %v802 = vpop.permute.xlu0 %801
    %v803 = vsel %vm355, %v802, 0
    %805 = vmatprep.subr.mxu0 0.0
    %806 = vmatpush1.msra.mxu0 %v76
    %807 = vmatprep.subr.mxu0 0.0
    %808 = vmatpush1.msra.mxu0 %v77
    %809 = vmatprep.subr.mxu0 0.0
    %810 = vmatpush1.msra.mxu0 %v78
    %811 = vmatprep.subr.mxu0 0.0
    %812 = vmatpush1.msra.mxu0 %v79
    %813 = vmatprep.subr.mxu0 0.0
    %814 = vmatpush1.msra.mxu0 0.0
    %815 = vmatprep.subr.mxu0 0.0
    %816 = vmatpush1.msra.mxu0 0.0
    %817 = vmatprep.subr.mxu0 0.0
    %818 = vmatpush1.msra.mxu0 0.0
    %819 = vmatprep.subr.mxu0 0.0
    %820 = vmatpush1.msra.mxu0 0.0
    %821 = vmatprep.subr.mxu0 0.0
    %822 = vmatpush1.msra.mxu0 0.0
    %823 = vmatprep.subr.mxu0 0.0
    %824 = vmatpush1.msra.mxu0 0.0
    %825 = vmatprep.subr.mxu0 0.0
    %826 = vmatpush1.msra.mxu0 0.0
    %827 = vmatprep.subr.mxu0 0.0
    %828 = vmatpush1.msra.mxu0 0.0
    %829 = vmatprep.subr.mxu0 0.0
    %830 = vmatpush1.msra.mxu0 0.0
    %831 = vmatprep.subr.mxu0 0.0
    %832 = vmatpush1.msra.mxu0 0.0
    %833 = vmatprep.subr.mxu0 0.0
    %834 = vmatpush1.msra.mxu0 0.0
    %835 = vmatprep.subr.mxu0 0.0
    %836 = vmatpush1.msra.mxu0 0.0
    %837 = vmatprep.subr.mxu0 0.0
    %838 = vmatpush1.msra.mxu0 0.0
    %839 = vmatprep.subr.mxu0 0.0
    %840 = vmatpush1.msra.mxu0 0.0
    %841 = vmatprep.subr.mxu0 0.0
    %842 = vmatpush1.msra.mxu0 0.0
    %843 = vmatprep.subr.mxu0 0.0
    %844 = vmatpush1.msra.mxu0 0.0
    %845 = vmatprep.subr.mxu0 0.0
    %846 = vmatpush1.msra.mxu0 0.0
    %847 = vmatprep.subr.mxu0 0.0
    %848 = vmatpush1.msra.mxu0 0.0
    %849 = vmatprep.subr.mxu0 0.0
    %850 = vmatpush1.msra.mxu0 0.0
    %851 = vmatprep.subr.mxu0 0.0
    %852 = vmatpush1.msra.mxu0 0.0
    %853 = vmatprep.subr.mxu0 0.0
    %854 = vmatpush1.msra.mxu0 0.0
    %855 = vmatprep.subr.mxu0 0.0
    %856 = vmatpush1.msra.mxu0 0.0
    %857 = vmatprep.subr.mxu0 0.0
    %858 = vmatpush1.msra.mxu0 0.0
    %859 = vmatprep.subr.mxu0 0.0
    %860 = vmatpush1.msra.mxu0 0.0
    %861 = vmatprep.subr.mxu0 0.0
    %862 = vmatpush1.msra.mxu0 0.0
    %863 = vmatprep.subr.mxu0 0.0
    %864 = vmatpush1.msra.mxu0 0.0
    %865 = vmatprep.subr.mxu0 0.0
    %866 = vmatpush1.msra.mxu0 0.0
    %867 = vmatprep.subr.mxu0 0.0
    %868 = vmatpush1.msra.mxu0 0.0
    %869 = vmatprep.mubr.f32.mxu0 0.0
    %870 = vmatmul.mubr.f32.gmra.mrb[0].mxu0 %v803
    %v871 = vpop.f32.mrb[0].mxu0
    %v872 = vadd.f32 %v99, %v871
    %v873 = vpop.f32.mrb[0].mxu0
    %874 = vdwg.mxu0
    %875 = vrot.lane.b32.xlu0 %v770, 32
    %v876 = vpop.permute.xlu0 %875
    %v878 = vadd.f32 %v872, %v876
    %v879 = vxor.u32 %v878, 2147483648
    %v880 = vmul.f32 %v879, 1.442695
    %v881 = vpow.pop %v880
    %v882 = vadd.f32 %v881, 1.0
    %v883 = vrcp.pop %v882
    %v884 = vmul.f32 1.0, %v883
    %886 = vrot.lane.b32.xlu0 %v772, 32
    %v887 = vpop.permute.xlu0 %886
    %v889 = vadd.f32 %v872, %v887
    %v890 = vxor.u32 %v889, 2147483648
    %v891 = vmul.f32 %v890, 1.442695
    %v892 = vpow.pop %v891
    %v893 = vadd.f32 %v892, 1.0
    %v894 = vrcp.pop %v893
    %v895 = vmul.f32 1.0, %v894
    %896 = vrot.lane.b32.xlu0 %v772, 96
    %v897 = vpop.permute.xlu0 %896
    %v899 = vmul.f32 %v884, %v897
    %901 = vrot.lane.b32.xlu0 %v899, 64
    %v902 = vpop.permute.xlu0 %901
    %v904 = vadd.f32 %v872, %v902
    %v905 = vtanh.pop %v904
    %v906 = vsub.f32 1.0, %v895
    %908 = vrot.lane.b32.xlu0 %v905, 96
    %v909 = vpop.permute.xlu0 %908
    %v911 = vmul.f32 %v906, %v909
    %v912 = vmul.f32 %v895, %v689
    %v913 = vadd.f32 %v911, %v912
    %915 = vrot.lane.b32.xlu0 %v913, 96
    %v916 = vpop.permute.xlu0 %915
    %s918 = scalar_lea.vmem [#allocation3], 16
    %919 = vst.msk [vmem:[%s918] sm:$0xff] %vm355, %v916
    %s920 = scalar_lea.vmem [#allocation2], 24
    %v921 = vld [vmem:[%s920] sm:$0xff]
    %v923 = vsel %vm355, %v802, %v913
    %v925 = vsel %vm251, %v923, 0
    %927 = vmatprep.subr.mxu0 %v61
    %928 = vmatpush1.msra.mxu0 %v60
    %929 = vmatprep.subr.mxu0 %v63
    %930 = vmatpush1.msra.mxu0 %v62
    %931 = vmatprep.subr.mxu0 %v65
    %932 = vmatpush1.msra.mxu0 %v64
    %933 = vmatprep.subr.mxu0 %v67
    %934 = vmatpush1.msra.mxu0 %v66
    %935 = vmatprep.subr.mxu0 %v69
    %936 = vmatpush1.msra.mxu0 %v68
    %937 = vmatprep.subr.mxu0 %v71
    %938 = vmatpush1.msra.mxu0 %v70
    %939 = vmatprep.subr.mxu0 %v73
    %940 = vmatpush1.msra.mxu0 %v72
    %941 = vmatprep.subr.mxu0 %v75
    %942 = vmatpush1.msra.mxu0 %v74
    %943 = vmatprep.subr.mxu0 0.0
    %944 = vmatpush1.msra.mxu0 0.0
    %945 = vmatprep.subr.mxu0 0.0
    %946 = vmatpush1.msra.mxu0 0.0
    %947 = vmatprep.subr.mxu0 0.0
    %948 = vmatpush1.msra.mxu0 0.0
    %949 = vmatprep.subr.mxu0 0.0
    %950 = vmatpush1.msra.mxu0 0.0
    %951 = vmatprep.subr.mxu0 0.0
    %952 = vmatpush1.msra.mxu0 0.0
    %953 = vmatprep.subr.mxu0 0.0
    %954 = vmatpush1.msra.mxu0 0.0
    %955 = vmatprep.subr.mxu0 0.0
    %956 = vmatpush1.msra.mxu0 0.0
    %957 = vmatprep.subr.mxu0 0.0
    %958 = vmatpush1.msra.mxu0 0.0
    %959 = vmatprep.subr.mxu0 0.0
    %960 = vmatpush1.msra.mxu0 0.0
    %961 = vmatprep.subr.mxu0 0.0
    %962 = vmatpush1.msra.mxu0 0.0
    %963 = vmatprep.subr.mxu0 0.0
    %964 = vmatpush1.msra.mxu0 0.0
    %965 = vmatprep.subr.mxu0 0.0
    %966 = vmatpush1.msra.mxu0 0.0
    %967 = vmatprep.subr.mxu0 0.0
    %968 = vmatpush1.msra.mxu0 0.0
    %969 = vmatprep.subr.mxu0 0.0
    %970 = vmatpush1.msra.mxu0 0.0
    %971 = vmatprep.subr.mxu0 0.0
    %972 = vmatpush1.msra.mxu0 0.0
    %973 = vmatprep.subr.mxu0 0.0
    %974 = vmatpush1.msra.mxu0 0.0
    %975 = vmatprep.subr.mxu0 0.0
    %976 = vmatpush1.msra.mxu0 0.0
    %977 = vmatprep.subr.mxu0 0.0
    %978 = vmatpush1.msra.mxu0 0.0
    %979 = vmatprep.subr.mxu0 0.0
    %980 = vmatpush1.msra.mxu0 0.0
    %981 = vmatprep.subr.mxu0 0.0
    %982 = vmatpush1.msra.mxu0 0.0
    %983 = vmatprep.subr.mxu0 0.0
    %984 = vmatpush1.msra.mxu0 0.0
    %985 = vmatprep.subr.mxu0 0.0
    %986 = vmatpush1.msra.mxu0 0.0
    %987 = vmatprep.subr.mxu0 0.0
    %988 = vmatpush1.msra.mxu0 0.0
    %989 = vmatprep.subr.mxu0 0.0
    %990 = vmatpush1.msra.mxu0 0.0
    %991 = vmatprep.mubr.f32.mxu0 0.0
    %992 = vmatmul.mubr.f32.gmra.mrb[0].mxu0 %v925
    %v993 = vpop.f32.mrb[0].mxu0
    %v994 = vadd.f32 %v91, %v993
    %v995 = vpop.f32.mrb[0].mxu0
    %v996 = vadd.f32 %v95, %v995
    %997 = vdwg.mxu0
    %v998 = vadd.f32 %v921, %v994
    %v999 = vxor.u32 %v998, 2147483648
    %v1000 = vmul.f32 %v999, 1.442695
    %v1001 = vpow.pop %v1000
    %v1002 = vadd.f32 %v1001, 1.0
    %v1003 = vrcp.pop %v1002
    %v1004 = vmul.f32 1.0, %v1003
    %1006 = vrot.lane.b32.xlu0 %v994, 64
    %v1007 = vpop.permute.xlu0 %1006
    %v1009 = vmul.f32 %v1004, %v1007
    %1011 = vrot.lane.b32.xlu0 %v1009, 64
    %v1012 = vpop.permute.xlu0 %1011
    %v1014 = vadd.f32 %v921, %v1012
    %v1015 = vtanh.pop %v1014
    %v1016 = vsub.f32 1.0, %v1004
    %1018 = vrot.lane.b32.xlu0 %v1015, 96
    %v1019 = vpop.permute.xlu0 %1018
    %v1021 = vmul.f32 %v1016, %v1019
    %v1022 = vmul.f32 %v1004, %v799
    %v1023 = vadd.f32 %v1021, %v1022
    %1025 = vrot.lane.b32.xlu0 %v1023, 96
    %v1026 = vpop.permute.xlu0 %1025
    %v1027 = vsel %vm355, %v1026, 0
    %1029 = vmatprep.subr.mxu0 0.0
    %1030 = vmatpush1.msra.mxu0 %v76
    %1031 = vmatprep.subr.mxu0 0.0
    %1032 = vmatpush1.msra.mxu0 %v77
    %1033 = vmatprep.subr.mxu0 0.0
    %1034 = vmatpush1.msra.mxu0 %v78
    %1035 = vmatprep.subr.mxu0 0.0
    %1036 = vmatpush1.msra.mxu0 %v79
    %1037 = vmatprep.subr.mxu0 0.0
    %1038 = vmatpush1.msra.mxu0 0.0
    %1039 = vmatprep.subr.mxu0 0.0
    %1040 = vmatpush1.msra.mxu0 0.0
    %1041 = vmatprep.subr.mxu0 0.0
    %1042 = vmatpush1.msra.mxu0 0.0
    %1043 = vmatprep.subr.mxu0 0.0
    %1044 = vmatpush1.msra.mxu0 0.0
    %1045 = vmatprep.subr.mxu0 0.0
    %1046 = vmatpush1.msra.mxu0 0.0
    %1047 = vmatprep.subr.mxu0 0.0
    %1048 = vmatpush1.msra.mxu0 0.0
    %1049 = vmatprep.subr.mxu0 0.0
    %1050 = vmatpush1.msra.mxu0 0.0
    %1051 = vmatprep.subr.mxu0 0.0
    %1052 = vmatpush1.msra.mxu0 0.0
    %1053 = vmatprep.subr.mxu0 0.0
    %1054 = vmatpush1.msra.mxu0 0.0
    %1055 = vmatprep.subr.mxu0 0.0
    %1056 = vmatpush1.msra.mxu0 0.0
    %1057 = vmatprep.subr.mxu0 0.0
    %1058 = vmatpush1.msra.mxu0 0.0
    %1059 = vmatprep.subr.mxu0 0.0
    %1060 = vmatpush1.msra.mxu0 0.0
    %1061 = vmatprep.subr.mxu0 0.0
    %1062 = vmatpush1.msra.mxu0 0.0
    %1063 = vmatprep.subr.mxu0 0.0
    %1064 = vmatpush1.msra.mxu0 0.0
    %1065 = vmatprep.subr.mxu0 0.0
    %1066 = vmatpush1.msra.mxu0 0.0
    %1067 = vmatprep.subr.mxu0 0.0
    %1068 = vmatpush1.msra.mxu0 0.0
    %1069 = vmatprep.subr.mxu0 0.0
    %1070 = vmatpush1.msra.mxu0 0.0
    %1071 = vmatprep.subr.mxu0 0.0
    %1072 = vmatpush1.msra.mxu0 0.0
    %1073 = vmatprep.subr.mxu0 0.0
    %1074 = vmatpush1.msra.mxu0 0.0
    %1075 = vmatprep.subr.mxu0 0.0
    %1076 = vmatpush1.msra.mxu0 0.0
    %1077 = vmatprep.subr.mxu0 0.0
    %1078 = vmatpush1.msra.mxu0 0.0
    %1079 = vmatprep.subr.mxu0 0.0
    %1080 = vmatpush1.msra.mxu0 0.0
    %1081 = vmatprep.subr.mxu0 0.0
    %1082 = vmatpush1.msra.mxu0 0.0
    %1083 = vmatprep.subr.mxu0 0.0
    %1084 = vmatpush1.msra.mxu0 0.0
    %1085 = vmatprep.subr.mxu0 0.0
    %1086 = vmatpush1.msra.mxu0 0.0
    %1087 = vmatprep.subr.mxu0 0.0
    %1088 = vmatpush1.msra.mxu0 0.0
    %1089 = vmatprep.subr.mxu0 0.0
    %1090 = vmatpush1.msra.mxu0 0.0
    %1091 = vmatprep.subr.mxu0 0.0
    %1092 = vmatpush1.msra.mxu0 0.0
    %1093 = vmatprep.mubr.f32.mxu0 0.0
    %1094 = vmatmul.mubr.f32.gmra.mrb[0].mxu0 %v1027
    %v1095 = vpop.f32.mrb[0].mxu0
    %v1096 = vadd.f32 %v99, %v1095
    %v1097 = vpop.f32.mrb[0].mxu0
    %1098 = vdwg.mxu0
    %1099 = vrot.lane.b32.xlu0 %v994, 32
    %v1100 = vpop.permute.xlu0 %1099
    %v1102 = vadd.f32 %v1096, %v1100
    %v1103 = vxor.u32 %v1102, 2147483648
    %v1104 = vmul.f32 %v1103, 1.442695
    %v1105 = vpow.pop %v1104
    %v1106 = vadd.f32 %v1105, 1.0
    %v1107 = vrcp.pop %v1106
    %v1108 = vmul.f32 1.0, %v1107
    %1110 = vrot.lane.b32.xlu0 %v996, 32
    %v1111 = vpop.permute.xlu0 %1110
    %v1113 = vadd.f32 %v1096, %v1111
    %v1114 = vxor.u32 %v1113, 2147483648
    %v1115 = vmul.f32 %v1114, 1.442695
    %v1116 = vpow.pop %v1115
    %v1117 = vadd.f32 %v1116, 1.0
    %v1118 = vrcp.pop %v1117
    %v1119 = vmul.f32 1.0, %v1118
    %1120 = vrot.lane.b32.xlu0 %v996, 96
    %v1121 = vpop.permute.xlu0 %1120
    %v1123 = vmul.f32 %v1108, %v1121
    %1125 = vrot.lane.b32.xlu0 %v1123, 64
    %v1126 = vpop.permute.xlu0 %1125
    %v1128 = vadd.f32 %v1096, %v1126
    %v1129 = vtanh.pop %v1128
    %v1130 = vsub.f32 1.0, %v1119
    %1132 = vrot.lane.b32.xlu0 %v1129, 96
    %v1133 = vpop.permute.xlu0 %1132
    %v1135 = vmul.f32 %v1130, %v1133
    %v1136 = vmul.f32 %v1119, %v913
    %v1137 = vadd.f32 %v1135, %v1136
    %1139 = vrot.lane.b32.xlu0 %v1137, 96
    %v1140 = vpop.permute.xlu0 %1139
    %s1142 = scalar_lea.vmem [#allocation3], 24
    %1143 = vst.msk [vmem:[%s1142] sm:$0xff] %vm355, %v1140
    %s1144 = scalar_lea.vmem [#allocation2], 32
    %v1145 = vld [vmem:[%s1144] sm:$0xff]
    %v1147 = vsel %vm355, %v1026, %v1137
    %v1149 = vsel %vm251, %v1147, 0
    %1151 = vmatprep.subr.mxu0 %v61
    %1152 = vmatpush1.msra.mxu0 %v60
    %1153 = vmatprep.subr.mxu0 %v63
    %1154 = vmatpush1.msra.mxu0 %v62
    %1155 = vmatprep.subr.mxu0 %v65
    %1156 = vmatpush1.msra.mxu0 %v64
    %1157 = vmatprep.subr.mxu0 %v67
    %1158 = vmatpush1.msra.mxu0 %v66
    %1159 = vmatprep.subr.mxu0 %v69
    %1160 = vmatpush1.msra.mxu0 %v68
    %1161 = vmatprep.subr.mxu0 %v71
    %1162 = vmatpush1.msra.mxu0 %v70
    %1163 = vmatprep.subr.mxu0 %v73
    %1164 = vmatpush1.msra.mxu0 %v72
    %1165 = vmatprep.subr.mxu0 %v75
    %1166 = vmatpush1.msra.mxu0 %v74
    %1167 = vmatprep.subr.mxu0 0.0
    %1168 = vmatpush1.msra.mxu0 0.0
    %1169 = vmatprep.subr.mxu0 0.0
    %1170 = vmatpush1.msra.mxu0 0.0
    %1171 = vmatprep.subr.mxu0 0.0
    %1172 = vmatpush1.msra.mxu0 0.0
    %1173 = vmatprep.subr.mxu0 0.0
    %1174 = vmatpush1.msra.mxu0 0.0
    %1175 = vmatprep.subr.mxu0 0.0
    %1176 = vmatpush1.msra.mxu0 0.0
    %1177 = vmatprep.subr.mxu0 0.0
    %1178 = vmatpush1.msra.mxu0 0.0
    %1179 = vmatprep.subr.mxu0 0.0
    %1180 = vmatpush1.msra.mxu0 0.0
    %1181 = vmatprep.subr.mxu0 0.0
    %1182 = vmatpush1.msra.mxu0 0.0
    %1183 = vmatprep.subr.mxu0 0.0
    %1184 = vmatpush1.msra.mxu0 0.0
    %1185 = vmatprep.subr.mxu0 0.0
    %1186 = vmatpush1.msra.mxu0 0.0
    %1187 = vmatprep.subr.mxu0 0.0
    %1188 = vmatpush1.msra.mxu0 0.0
    %1189 = vmatprep.subr.mxu0 0.0
    %1190 = vmatpush1.msra.mxu0 0.0
    %1191 = vmatprep.subr.mxu0 0.0
    %1192 = vmatpush1.msra.mxu0 0.0
    %1193 = vmatprep.subr.mxu0 0.0
    %1194 = vmatpush1.msra.mxu0 0.0
    %1195 = vmatprep.subr.mxu0 0.0
    %1196 = vmatpush1.msra.mxu0 0.0
    %1197 = vmatprep.subr.mxu0 0.0
    %1198 = vmatpush1.msra.mxu0 0.0
    %1199 = vmatprep.subr.mxu0 0.0
    %1200 = vmatpush1.msra.mxu0 0.0
    %1201 = vmatprep.subr.mxu0 0.0
    %1202 = vmatpush1.msra.mxu0 0.0
    %1203 = vmatprep.subr.mxu0 0.0
    %1204 = vmatpush1.msra.mxu0 0.0
    %1205 = vmatprep.subr.mxu0 0.0
    %1206 = vmatpush1.msra.mxu0 0.0
    %1207 = vmatprep.subr.mxu0 0.0
    %1208 = vmatpush1.msra.mxu0 0.0
    %1209 = vmatprep.subr.mxu0 0.0
    %1210 = vmatpush1.msra.mxu0 0.0
    %1211 = vmatprep.subr.mxu0 0.0
    %1212 = vmatpush1.msra.mxu0 0.0
    %1213 = vmatprep.subr.mxu0 0.0
    %1214 = vmatpush1.msra.mxu0 0.0
    %1215 = vmatprep.mubr.f32.mxu0 0.0
    %1216 = vmatmul.mubr.f32.gmra.mrb[0].mxu0 %v1149
    %v1217 = vpop.f32.mrb[0].mxu0
    %v1218 = vadd.f32 %v91, %v1217
    %v1219 = vpop.f32.mrb[0].mxu0
    %v1220 = vadd.f32 %v95, %v1219
    %1221 = vdwg.mxu0
    %v1222 = vadd.f32 %v1145, %v1218
    %v1223 = vxor.u32 %v1222, 2147483648
    %v1224 = vmul.f32 %v1223, 1.442695
    %v1225 = vpow.pop %v1224
    %v1226 = vadd.f32 %v1225, 1.0
    %v1227 = vrcp.pop %v1226
    %v1228 = vmul.f32 1.0, %v1227
    %1230 = vrot.lane.b32.xlu0 %v1218, 64
    %v1231 = vpop.permute.xlu0 %1230
    %v1233 = vmul.f32 %v1228, %v1231
    %1235 = vrot.lane.b32.xlu0 %v1233, 64
    %v1236 = vpop.permute.xlu0 %1235
    %v1238 = vadd.f32 %v1145, %v1236
    %v1239 = vtanh.pop %v1238
    %v1240 = vsub.f32 1.0, %v1228
    %1242 = vrot.lane.b32.xlu0 %v1239, 96
    %v1243 = vpop.permute.xlu0 %1242
    %v1245 = vmul.f32 %v1240, %v1243
    %v1246 = vmul.f32 %v1228, %v1023
    %v1247 = vadd.f32 %v1245, %v1246
    %1249 = vrot.lane.b32.xlu0 %v1247, 96
    %v1250 = vpop.permute.xlu0 %1249
    %v1251 = vsel %vm355, %v1250, 0
    %1253 = vmatprep.subr.mxu0 0.0
    %1254 = vmatpush1.msra.mxu0 %v76
    %1255 = vmatprep.subr.mxu0 0.0
    %1256 = vmatpush1.msra.mxu0 %v77
    %1257 = vmatprep.subr.mxu0 0.0
    %1258 = vmatpush1.msra.mxu0 %v78
    %1259 = vmatprep.subr.mxu0 0.0
    %1260 = vmatpush1.msra.mxu0 %v79
    %1261 = vmatprep.subr.mxu0 0.0
    %1262 = vmatpush1.msra.mxu0 0.0
    %1263 = vmatprep.subr.mxu0 0.0
    %1264 = vmatpush1.msra.mxu0 0.0
    %1265 = vmatprep.subr.mxu0 0.0
    %1266 = vmatpush1.msra.mxu0 0.0
    %1267 = vmatprep.subr.mxu0 0.0
    %1268 = vmatpush1.msra.mxu0 0.0
    %1269 = vmatprep.subr.mxu0 0.0
    %1270 = vmatpush1.msra.mxu0 0.0
    %1271 = vmatprep.subr.mxu0 0.0
    %1272 = vmatpush1.msra.mxu0 0.0
    %1273 = vmatprep.subr.mxu0 0.0
    %1274 = vmatpush1.msra.mxu0 0.0
    %1275 = vmatprep.subr.mxu0 0.0
    %1276 = vmatpush1.msra.mxu0 0.0
    %1277 = vmatprep.subr.mxu0 0.0
    %1278 = vmatpush1.msra.mxu0 0.0
    %1279 = vmatprep.subr.mxu0 0.0
    %1280 = vmatpush1.msra.mxu0 0.0
    %1281 = vmatprep.subr.mxu0 0.0
    %1282 = vmatpush1.msra.mxu0 0.0
    %1283 = vmatprep.subr.mxu0 0.0
    %1284 = vmatpush1.msra.mxu0 0.0
    %1285 = vmatprep.subr.mxu0 0.0
    %1286 = vmatpush1.msra.mxu0 0.0
    %1287 = vmatprep.subr.mxu0 0.0
    %1288 = vmatpush1.msra.mxu0 0.0
    %1289 = vmatprep.subr.mxu0 0.0
    %1290 = vmatpush1.msra.mxu0 0.0
    %1291 = vmatprep.subr.mxu0 0.0
    %1292 = vmatpush1.msra.mxu0 0.0
    %1293 = vmatprep.subr.mxu0 0.0
    %1294 = vmatpush1.msra.mxu0 0.0
    %1295 = vmatprep.subr.mxu0 0.0
    %1296 = vmatpush1.msra.mxu0 0.0
    %1297 = vmatprep.subr.mxu0 0.0
    %1298 = vmatpush1.msra.mxu0 0.0
    %1299 = vmatprep.subr.mxu0 0.0
    %1300 = vmatpush1.msra.mxu0 0.0
    %1301 = vmatprep.subr.mxu0 0.0
    %1302 = vmatpush1.msra.mxu0 0.0
    %1303 = vmatprep.subr.mxu0 0.0
    %1304 = vmatpush1.msra.mxu0 0.0
    %1305 = vmatprep.subr.mxu0 0.0
    %1306 = vmatpush1.msra.mxu0 0.0
    %1307 = vmatprep.subr.mxu0 0.0
    %1308 = vmatpush1.msra.mxu0 0.0
    %1309 = vmatprep.subr.mxu0 0.0
    %1310 = vmatpush1.msra.mxu0 0.0
    %1311 = vmatprep.subr.mxu0 0.0
    %1312 = vmatpush1.msra.mxu0 0.0
    %1313 = vmatprep.subr.mxu0 0.0
    %1314 = vmatpush1.msra.mxu0 0.0
    %1315 = vmatprep.subr.mxu0 0.0
    %1316 = vmatpush1.msra.mxu0 0.0
    %1317 = vmatprep.mubr.f32.mxu0 0.0
    %1318 = vmatmul.mubr.f32.gmra.mrb[0].mxu0 %v1251
    %v1319 = vpop.f32.mrb[0].mxu0
    %v1320 = vadd.f32 %v99, %v1319
    %v1321 = vpop.f32.mrb[0].mxu0
    %1322 = vdwg.mxu0
    %1323 = vrot.lane.b32.xlu0 %v1218, 32
    %v1324 = vpop.permute.xlu0 %1323
    %v1326 = vadd.f32 %v1320, %v1324
    %v1327 = vxor.u32 %v1326, 2147483648
    %v1328 = vmul.f32 %v1327, 1.442695
    %v1329 = vpow.pop %v1328
    %v1330 = vadd.f32 %v1329, 1.0
    %v1331 = vrcp.pop %v1330
    %v1332 = vmul.f32 1.0, %v1331
    %1334 = vrot.lane.b32.xlu0 %v1220, 32
    %v1335 = vpop.permute.xlu0 %1334
    %v1337 = vadd.f32 %v1320, %v1335
    %v1338 = vxor.u32 %v1337, 2147483648
    %v1339 = vmul.f32 %v1338, 1.442695
    %v1340 = vpow.pop %v1339
    %v1341 = vadd.f32 %v1340, 1.0
    %v1342 = vrcp.pop %v1341
    %v1343 = vmul.f32 1.0, %v1342
    %1344 = vrot.lane.b32.xlu0 %v1220, 96
    %v1345 = vpop.permute.xlu0 %1344
    %v1347 = vmul.f32 %v1332, %v1345
    %1349 = vrot.lane.b32.xlu0 %v1347, 64
    %v1350 = vpop.permute.xlu0 %1349
    %v1352 = vadd.f32 %v1320, %v1350
    %v1353 = vtanh.pop %v1352
    %v1354 = vsub.f32 1.0, %v1343
    %1356 = vrot.lane.b32.xlu0 %v1353, 96
    %v1357 = vpop.permute.xlu0 %1356
    %v1359 = vmul.f32 %v1354, %v1357
    %v1360 = vmul.f32 %v1343, %v1137
    %v1361 = vadd.f32 %v1359, %v1360
    %1363 = vrot.lane.b32.xlu0 %v1361, 96
    %v1364 = vpop.permute.xlu0 %1363
    %s1366 = scalar_lea.vmem [#allocation3], 32
    %1367 = vst.msk [vmem:[%s1366] sm:$0xff] %vm355, %v1364
    %s1368 = scalar_lea.vmem [#allocation2], 40
    %v1369 = vld [vmem:[%s1368] sm:$0xff]
    %v1371 = vsel %vm355, %v1250, %v1361
    %v1373 = vsel %vm251, %v1371, 0
    %1375 = vmatprep.subr.mxu0 %v61
    %1376 = vmatpush1.msra.mxu0 %v60
    %1377 = vmatprep.subr.mxu0 %v63
    %1378 = vmatpush1.msra.mxu0 %v62
    %1379 = vmatprep.subr.mxu0 %v65
    %1380 = vmatpush1.msra.mxu0 %v64
    %1381 = vmatprep.subr.mxu0 %v67
    %1382 = vmatpush1.msra.mxu0 %v66
    %1383 = vmatprep.subr.mxu0 %v69
    %1384 = vmatpush1.msra.mxu0 %v68
    %1385 = vmatprep.subr.mxu0 %v71
    %1386 = vmatpush1.msra.mxu0 %v70
    %1387 = vmatprep.subr.mxu0 %v73
    %1388 = vmatpush1.msra.mxu0 %v72
    %1389 = vmatprep.subr.mxu0 %v75
    %1390 = vmatpush1.msra.mxu0 %v74
    %1391 = vmatprep.subr.mxu0 0.0
    %1392 = vmatpush1.msra.mxu0 0.0
    %1393 = vmatprep.subr.mxu0 0.0
    %1394 = vmatpush1.msra.mxu0 0.0
    %1395 = vmatprep.subr.mxu0 0.0
    %1396 = vmatpush1.msra.mxu0 0.0
    %1397 = vmatprep.subr.mxu0 0.0
    %1398 = vmatpush1.msra.mxu0 0.0
    %1399 = vmatprep.subr.mxu0 0.0
    %1400 = vmatpush1.msra.mxu0 0.0
    %1401 = vmatprep.subr.mxu0 0.0
    %1402 = vmatpush1.msra.mxu0 0.0
    %1403 = vmatprep.subr.mxu0 0.0
    %1404 = vmatpush1.msra.mxu0 0.0
    %1405 = vmatprep.subr.mxu0 0.0
    %1406 = vmatpush1.msra.mxu0 0.0
    %1407 = vmatprep.subr.mxu0 0.0
    %1408 = vmatpush1.msra.mxu0 0.0
    %1409 = vmatprep.subr.mxu0 0.0
    %1410 = vmatpush1.msra.mxu0 0.0
    %1411 = vmatprep.subr.mxu0 0.0
    %1412 = vmatpush1.msra.mxu0 0.0
    %1413 = vmatprep.subr.mxu0 0.0
    %1414 = vmatpush1.msra.mxu0 0.0
    %1415 = vmatprep.subr.mxu0 0.0
    %1416 = vmatpush1.msra.mxu0 0.0
    %1417 = vmatprep.subr.mxu0 0.0
    %1418 = vmatpush1.msra.mxu0 0.0
    %1419 = vmatprep.subr.mxu0 0.0
    %1420 = vmatpush1.msra.mxu0 0.0
    %1421 = vmatprep.subr.mxu0 0.0
    %1422 = vmatpush1.msra.mxu0 0.0
    %1423 = vmatprep.subr.mxu0 0.0
    %1424 = vmatpush1.msra.mxu0 0.0
    %1425 = vmatprep.subr.mxu0 0.0
    %1426 = vmatpush1.msra.mxu0 0.0
    %1427 = vmatprep.subr.mxu0 0.0
    %1428 = vmatpush1.msra.mxu0 0.0
    %1429 = vmatprep.subr.mxu0 0.0
    %1430 = vmatpush1.msra.mxu0 0.0
    %1431 = vmatprep.subr.mxu0 0.0
    %1432 = vmatpush1.msra.mxu0 0.0
    %1433 = vmatprep.subr.mxu0 0.0
    %1434 = vmatpush1.msra.mxu0 0.0
    %1435 = vmatprep.subr.mxu0 0.0
    %1436 = vmatpush1.msra.mxu0 0.0
    %1437 = vmatprep.subr.mxu0 0.0
    %1438 = vmatpush1.msra.mxu0 0.0
    %1439 = vmatprep.mubr.f32.mxu0 0.0
    %1440 = vmatmul.mubr.f32.gmra.mrb[0].mxu0 %v1373
    %v1441 = vpop.f32.mrb[0].mxu0
    %v1442 = vadd.f32 %v91, %v1441
    %v1443 = vpop.f32.mrb[0].mxu0
    %v1444 = vadd.f32 %v95, %v1443
    %1445 = vdwg.mxu0
    %v1446 = vadd.f32 %v1369, %v1442
    %v1447 = vxor.u32 %v1446, 2147483648
    %v1448 = vmul.f32 %v1447, 1.442695
    %v1449 = vpow.pop %v1448
    %v1450 = vadd.f32 %v1449, 1.0
    %v1451 = vrcp.pop %v1450
    %v1452 = vmul.f32 1.0, %v1451
    %1454 = vrot.lane.b32.xlu0 %v1442, 64
    %v1455 = vpop.permute.xlu0 %1454
    %v1457 = vmul.f32 %v1452, %v1455
    %1459 = vrot.lane.b32.xlu0 %v1457, 64
    %v1460 = vpop.permute.xlu0 %1459
    %v1462 = vadd.f32 %v1369, %v1460
    %v1463 = vtanh.pop %v1462
    %v1464 = vsub.f32 1.0, %v1452
    %1466 = vrot.lane.b32.xlu0 %v1463, 96
    %v1467 = vpop.permute.xlu0 %1466
    %v1469 = vmul.f32 %v1464, %v1467
    %v1470 = vmul.f32 %v1452, %v1247
    %v1471 = vadd.f32 %v1469, %v1470
    %1473 = vrot.lane.b32.xlu0 %v1471, 96
    %v1474 = vpop.permute.xlu0 %1473
    %v1475 = vsel %vm355, %v1474, 0
    %1477 = vmatprep.subr.mxu0 0.0
    %1478 = vmatpush1.msra.mxu0 %v76
    %1479 = vmatprep.subr.mxu0 0.0
    %1480 = vmatpush1.msra.mxu0 %v77
    %1481 = vmatprep.subr.mxu0 0.0
    %1482 = vmatpush1.msra.mxu0 %v78
    %1483 = vmatprep.subr.mxu0 0.0
    %1484 = vmatpush1.msra.mxu0 %v79
    %1485 = vmatprep.subr.mxu0 0.0
    %1486 = vmatpush1.msra.mxu0 0.0
    %1487 = vmatprep.subr.mxu0 0.0
    %1488 = vmatpush1.msra.mxu0 0.0
    %1489 = vmatprep.subr.mxu0 0.0
    %1490 = vmatpush1.msra.mxu0 0.0
    %1491 = vmatprep.subr.mxu0 0.0
    %1492 = vmatpush1.msra.mxu0 0.0
    %1493 = vmatprep.subr.mxu0 0.0
    %1494 = vmatpush1.msra.mxu0 0.0
    %1495 = vmatprep.subr.mxu0 0.0
    %1496 = vmatpush1.msra.mxu0 0.0
    %1497 = vmatprep.subr.mxu0 0.0
    %1498 = vmatpush1.msra.mxu0 0.0
    %1499 = vmatprep.subr.mxu0 0.0
    %1500 = vmatpush1.msra.mxu0 0.0
    %1501 = vmatprep.subr.mxu0 0.0
    %1502 = vmatpush1.msra.mxu0 0.0
    %1503 = vmatprep.subr.mxu0 0.0
    %1504 = vmatpush1.msra.mxu0 0.0
    %1505 = vmatprep.subr.mxu0 0.0
    %1506 = vmatpush1.msra.mxu0 0.0
    %1507 = vmatprep.subr.mxu0 0.0
    %1508 = vmatpush1.msra.mxu0 0.0
    %1509 = vmatprep.subr.mxu0 0.0
    %1510 = vmatpush1.msra.mxu0 0.0
    %1511 = vmatprep.subr.mxu0 0.0
    %1512 = vmatpush1.msra.mxu0 0.0
    %1513 = vmatprep.subr.mxu0 0.0
    %1514 = vmatpush1.msra.mxu0 0.0
    %1515 = vmatprep.subr.mxu0 0.0
    %1516 = vmatpush1.msra.mxu0 0.0
    %1517 = vmatprep.subr.mxu0 0.0
    %1518 = vmatpush1.msra.mxu0 0.0
    %1519 = vmatprep.subr.mxu0 0.0
    %1520 = vmatpush1.msra.mxu0 0.0
    %1521 = vmatprep.subr.mxu0 0.0
    %1522 = vmatpush1.msra.mxu0 0.0
    %1523 = vmatprep.subr.mxu0 0.0
    %1524 = vmatpush1.msra.mxu0 0.0
    %1525 = vmatprep.subr.mxu0 0.0
    %1526 = vmatpush1.msra.mxu0 0.0
    %1527 = vmatprep.subr.mxu0 0.0
    %1528 = vmatpush1.msra.mxu0 0.0
    %1529 = vmatprep.subr.mxu0 0.0
    %1530 = vmatpush1.msra.mxu0 0.0
    %1531 = vmatprep.subr.mxu0 0.0
    %1532 = vmatpush1.msra.mxu0 0.0
    %1533 = vmatprep.subr.mxu0 0.0
    %1534 = vmatpush1.msra.mxu0 0.0
    %1535 = vmatprep.subr.mxu0 0.0
    %1536 = vmatpush1.msra.mxu0 0.0
    %1537 = vmatprep.subr.mxu0 0.0
    %1538 = vmatpush1.msra.mxu0 0.0
    %1539 = vmatprep.subr.mxu0 0.0
    %1540 = vmatpush1.msra.mxu0 0.0
    %1541 = vmatprep.mubr.f32.mxu0 0.0
    %1542 = vmatmul.mubr.f32.gmra.mrb[0].mxu0 %v1475
    %v1543 = vpop.f32.mrb[0].mxu0
    %v1544 = vadd.f32 %v99, %v1543
    %v1545 = vpop.f32.mrb[0].mxu0
    %1546 = vdwg.mxu0
    %1547 = vrot.lane.b32.xlu0 %v1442, 32
    %v1548 = vpop.permute.xlu0 %1547
    %v1550 = vadd.f32 %v1544, %v1548
    %v1551 = vxor.u32 %v1550, 2147483648
    %v1552 = vmul.f32 %v1551, 1.442695
    %v1553 = vpow.pop %v1552
    %v1554 = vadd.f32 %v1553, 1.0
    %v1555 = vrcp.pop %v1554
    %v1556 = vmul.f32 1.0, %v1555
    %1558 = vrot.lane.b32.xlu0 %v1444, 32
    %v1559 = vpop.permute.xlu0 %1558
    %v1561 = vadd.f32 %v1544, %v1559
    %v1562 = vxor.u32 %v1561, 2147483648
    %v1563 = vmul.f32 %v1562, 1.442695
    %v1564 = vpow.pop %v1563
    %v1565 = vadd.f32 %v1564, 1.0
    %v1566 = vrcp.pop %v1565
    %v1567 = vmul.f32 1.0, %v1566
    %1568 = vrot.lane.b32.xlu0 %v1444, 96
    %v1569 = vpop.permute.xlu0 %1568
    %v1571 = vmul.f32 %v1556, %v1569
    %1573 = vrot.lane.b32.xlu0 %v1571, 64
    %v1574 = vpop.permute.xlu0 %1573
    %v1576 = vadd.f32 %v1544, %v1574
    %v1577 = vtanh.pop %v1576
    %v1578 = vsub.f32 1.0, %v1567
    %1580 = vrot.lane.b32.xlu0 %v1577, 96
    %v1581 = vpop.permute.xlu0 %1580
    %v1583 = vmul.f32 %v1578, %v1581
    %v1584 = vmul.f32 %v1567, %v1361
    %v1585 = vadd.f32 %v1583, %v1584
    %1587 = vrot.lane.b32.xlu0 %v1585, 96
    %v1588 = vpop.permute.xlu0 %1587
    %s1590 = scalar_lea.vmem [#allocation3], 40
    %1591 = vst.msk [vmem:[%s1590] sm:$0xff] %vm355, %v1588
    %s1592 = scalar_lea.vmem [#allocation2], 48
    %v1593 = vld [vmem:[%s1592] sm:$0xff]
    %v1595 = vsel %vm355, %v1474, %v1585
    %v1597 = vsel %vm251, %v1595, 0
    %1599 = vmatprep.subr.mxu0 %v61
    %1600 = vmatpush1.msra.mxu0 %v60
    %1601 = vmatprep.subr.mxu0 %v63
    %1602 = vmatpush1.msra.mxu0 %v62
    %1603 = vmatprep.subr.mxu0 %v65
    %1604 = vmatpush1.msra.mxu0 %v64
    %1605 = vmatprep.subr.mxu0 %v67
    %1606 = vmatpush1.msra.mxu0 %v66
    %1607 = vmatprep.subr.mxu0 %v69
    %1608 = vmatpush1.msra.mxu0 %v68
    %1609 = vmatprep.subr.mxu0 %v71
    %1610 = vmatpush1.msra.mxu0 %v70
    %1611 = vmatprep.subr.mxu0 %v73
    %1612 = vmatpush1.msra.mxu0 %v72
    %1613 = vmatprep.subr.mxu0 %v75
    %1614 = vmatpush1.msra.mxu0 %v74
    %1615 = vmatprep.subr.mxu0 0.0
    %1616 = vmatpush1.msra.mxu0 0.0
    %1617 = vmatprep.subr.mxu0 0.0
    %1618 = vmatpush1.msra.mxu0 0.0
    %1619 = vmatprep.subr.mxu0 0.0
    %1620 = vmatpush1.msra.mxu0 0.0
    %1621 = vmatprep.subr.mxu0 0.0
    %1622 = vmatpush1.msra.mxu0 0.0
    %1623 = vmatprep.subr.mxu0 0.0
    %1624 = vmatpush1.msra.mxu0 0.0
    %1625 = vmatprep.subr.mxu0 0.0
    %1626 = vmatpush1.msra.mxu0 0.0
    %1627 = vmatprep.subr.mxu0 0.0
    %1628 = vmatpush1.msra.mxu0 0.0
    %1629 = vmatprep.subr.mxu0 0.0
    %1630 = vmatpush1.msra.mxu0 0.0
    %1631 = vmatprep.subr.mxu0 0.0
    %1632 = vmatpush1.msra.mxu0 0.0
    %1633 = vmatprep.subr.mxu0 0.0
    %1634 = vmatpush1.msra.mxu0 0.0
    %1635 = vmatprep.subr.mxu0 0.0
    %1636 = vmatpush1.msra.mxu0 0.0
    %1637 = vmatprep.subr.mxu0 0.0
    %1638 = vmatpush1.msra.mxu0 0.0
    %1639 = vmatprep.subr.mxu0 0.0
    %1640 = vmatpush1.msra.mxu0 0.0
    %1641 = vmatprep.subr.mxu0 0.0
    %1642 = vmatpush1.msra.mxu0 0.0
    %1643 = vmatprep.subr.mxu0 0.0
    %1644 = vmatpush1.msra.mxu0 0.0
    %1645 = vmatprep.subr.mxu0 0.0
    %1646 = vmatpush1.msra.mxu0 0.0
    %1647 = vmatprep.subr.mxu0 0.0
    %1648 = vmatpush1.msra.mxu0 0.0
    %1649 = vmatprep.subr.mxu0 0.0
    %1650 = vmatpush1.msra.mxu0 0.0
    %1651 = vmatprep.subr.mxu0 0.0
    %1652 = vmatpush1.msra.mxu0 0.0
    %1653 = vmatprep.subr.mxu0 0.0
    %1654 = vmatpush1.msra.mxu0 0.0
    %1655 = vmatprep.subr.mxu0 0.0
    %1656 = vmatpush1.msra.mxu0 0.0
    %1657 = vmatprep.subr.mxu0 0.0
    %1658 = vmatpush1.msra.mxu0 0.0
    %1659 = vmatprep.subr.mxu0 0.0
    %1660 = vmatpush1.msra.mxu0 0.0
    %1661 = vmatprep.subr.mxu0 0.0
    %1662 = vmatpush1.msra.mxu0 0.0
    %1663 = vmatprep.mubr.f32.mxu0 0.0
    %1664 = vmatmul.mubr.f32.gmra.mrb[0].mxu0 %v1597
    %v1665 = vpop.f32.mrb[0].mxu0
    %v1666 = vadd.f32 %v91, %v1665
    %v1667 = vpop.f32.mrb[0].mxu0
    %v1668 = vadd.f32 %v95, %v1667
    %1669 = vdwg.mxu0
    %v1670 = vadd.f32 %v1593, %v1666
    %v1671 = vxor.u32 %v1670, 2147483648
    %v1672 = vmul.f32 %v1671, 1.442695
    %v1673 = vpow.pop %v1672
    %v1674 = vadd.f32 %v1673, 1.0
    %v1675 = vrcp.pop %v1674
    %v1676 = vmul.f32 1.0, %v1675
    %1678 = vrot.lane.b32.xlu0 %v1666, 64
    %v1679 = vpop.permute.xlu0 %1678
    %v1681 = vmul.f32 %v1676, %v1679
    %1683 = vrot.lane.b32.xlu0 %v1681, 64
    %v1684 = vpop.permute.xlu0 %1683
    %v1686 = vadd.f32 %v1593, %v1684
    %v1687 = vtanh.pop %v1686
    %v1688 = vsub.f32 1.0, %v1676
    %1690 = vrot.lane.b32.xlu0 %v1687, 96
    %v1691 = vpop.permute.xlu0 %1690
    %v1693 = vmul.f32 %v1688, %v1691
    %v1694 = vmul.f32 %v1676, %v1471
    %v1695 = vadd.f32 %v1693, %v1694
    %1697 = vrot.lane.b32.xlu0 %v1695, 96
    %v1698 = vpop.permute.xlu0 %1697
    %v1699 = vsel %vm355, %v1698, 0
    %1701 = vmatprep.subr.mxu0 0.0
    %1702 = vmatpush1.msra.mxu0 %v76
    %1703 = vmatprep.subr.mxu0 0.0
    %1704 = vmatpush1.msra.mxu0 %v77
    %1705 = vmatprep.subr.mxu0 0.0
    %1706 = vmatpush1.msra.mxu0 %v78
    %1707 = vmatprep.subr.mxu0 0.0
    %1708 = vmatpush1.msra.mxu0 %v79
    %1709 = vmatprep.subr.mxu0 0.0
    %1710 = vmatpush1.msra.mxu0 0.0
    %1711 = vmatprep.subr.mxu0 0.0
    %1712 = vmatpush1.msra.mxu0 0.0
    %1713 = vmatprep.subr.mxu0 0.0
    %1714 = vmatpush1.msra.mxu0 0.0
    %1715 = vmatprep.subr.mxu0 0.0
    %1716 = vmatpush1.msra.mxu0 0.0
    %1717 = vmatprep.subr.mxu0 0.0
    %1718 = vmatpush1.msra.mxu0 0.0
    %1719 = vmatprep.subr.mxu0 0.0
    %1720 = vmatpush1.msra.mxu0 0.0
    %1721 = vmatprep.subr.mxu0 0.0
    %1722 = vmatpush1.msra.mxu0 0.0
    %1723 = vmatprep.subr.mxu0 0.0
    %1724 = vmatpush1.msra.mxu0 0.0
    %1725 = vmatprep.subr.mxu0 0.0
    %1726 = vmatpush1.msra.mxu0 0.0
    %1727 = vmatprep.subr.mxu0 0.0
    %1728 = vmatpush1.msra.mxu0 0.0
    %1729 = vmatprep.subr.mxu0 0.0
    %1730 = vmatpush1.msra.mxu0 0.0
    %1731 = vmatprep.subr.mxu0 0.0
    %1732 = vmatpush1.msra.mxu0 0.0
    %1733 = vmatprep.subr.mxu0 0.0
    %1734 = vmatpush1.msra.mxu0 0.0
    %1735 = vmatprep.subr.mxu0 0.0
    %1736 = vmatpush1.msra.mxu0 0.0
    %1737 = vmatprep.subr.mxu0 0.0
    %1738 = vmatpush1.msra.mxu0 0.0
    %1739 = vmatprep.subr.mxu0 0.0
    %1740 = vmatpush1.msra.mxu0 0.0
    %1741 = vmatprep.subr.mxu0 0.0
    %1742 = vmatpush1.msra.mxu0 0.0
    %1743 = vmatprep.subr.mxu0 0.0
    %1744 = vmatpush1.msra.mxu0 0.0
    %1745 = vmatprep.subr.mxu0 0.0
    %1746 = vmatpush1.msra.mxu0 0.0
    %1747 = vmatprep.subr.mxu0 0.0
    %1748 = vmatpush1.msra.mxu0 0.0
    %1749 = vmatprep.subr.mxu0 0.0
    %1750 = vmatpush1.msra.mxu0 0.0
    %1751 = vmatprep.subr.mxu0 0.0
    %1752 = vmatpush1.msra.mxu0 0.0
    %1753 = vmatprep.subr.mxu0 0.0
    %1754 = vmatpush1.msra.mxu0 0.0
    %1755 = vmatprep.subr.mxu0 0.0
    %1756 = vmatpush1.msra.mxu0 0.0
    %1757 = vmatprep.subr.mxu0 0.0
    %1758 = vmatpush1.msra.mxu0 0.0
    %1759 = vmatprep.subr.mxu0 0.0
    %1760 = vmatpush1.msra.mxu0 0.0
    %1761 = vmatprep.subr.mxu0 0.0
    %1762 = vmatpush1.msra.mxu0 0.0
    %1763 = vmatprep.subr.mxu0 0.0
    %1764 = vmatpush1.msra.mxu0 0.0
    %1765 = vmatprep.mubr.f32.mxu0 0.0
    %1766 = vmatmul.mubr.f32.gmra.mrb[0].mxu0 %v1699
    %v1767 = vpop.f32.mrb[0].mxu0
    %v1768 = vadd.f32 %v99, %v1767
    %v1769 = vpop.f32.mrb[0].mxu0
    %1770 = vdwg.mxu0
    %1771 = vrot.lane.b32.xlu0 %v1666, 32
    %v1772 = vpop.permute.xlu0 %1771
    %v1774 = vadd.f32 %v1768, %v1772
    %v1775 = vxor.u32 %v1774, 2147483648
    %v1776 = vmul.f32 %v1775, 1.442695
    %v1777 = vpow.pop %v1776
    %v1778 = vadd.f32 %v1777, 1.0
    %v1779 = vrcp.pop %v1778
    %v1780 = vmul.f32 1.0, %v1779
    %1782 = vrot.lane.b32.xlu0 %v1668, 32
    %v1783 = vpop.permute.xlu0 %1782
    %v1785 = vadd.f32 %v1768, %v1783
    %v1786 = vxor.u32 %v1785, 2147483648
    %v1787 = vmul.f32 %v1786, 1.442695
    %v1788 = vpow.pop %v1787
    %v1789 = vadd.f32 %v1788, 1.0
    %v1790 = vrcp.pop %v1789
    %v1791 = vmul.f32 1.0, %v1790
    %1792 = vrot.lane.b32.xlu0 %v1668, 96
    %v1793 = vpop.permute.xlu0 %1792
    %v1795 = vmul.f32 %v1780, %v1793
    %1797 = vrot.lane.b32.xlu0 %v1795, 64
    %v1798 = vpop.permute.xlu0 %1797
    %v1800 = vadd.f32 %v1768, %v1798
    %v1801 = vtanh.pop %v1800
    %v1802 = vsub.f32 1.0, %v1791
    %1804 = vrot.lane.b32.xlu0 %v1801, 96
    %v1805 = vpop.permute.xlu0 %1804
    %v1807 = vmul.f32 %v1802, %v1805
    %v1808 = vmul.f32 %v1791, %v1585
    %v1809 = vadd.f32 %v1807, %v1808
    %1811 = vrot.lane.b32.xlu0 %v1809, 96
    %v1812 = vpop.permute.xlu0 %1811
    %s1814 = scalar_lea.vmem [#allocation3], 48
    %1815 = vst.msk [vmem:[%s1814] sm:$0xff] %vm355, %v1812
    %s1816 = scalar_lea.vmem [#allocation2], 56
    %v1817 = vld [vmem:[%s1816] sm:$0xff]
    %v1819 = vsel %vm355, %v1698, %v1809
    %v1821 = vsel %vm251, %v1819, 0
    %1823 = vmatprep.subr.mxu0 %v61
    %1824 = vmatpush1.msra.mxu0 %v60
    %1825 = vmatprep.subr.mxu0 %v63
    %1826 = vmatpush1.msra.mxu0 %v62
    %1827 = vmatprep.subr.mxu0 %v65
    %1828 = vmatpush1.msra.mxu0 %v64
    %1829 = vmatprep.subr.mxu0 %v67
    %1830 = vmatpush1.msra.mxu0 %v66
    %1831 = vmatprep.subr.mxu0 %v69
    %1832 = vmatpush1.msra.mxu0 %v68
    %1833 = vmatprep.subr.mxu0 %v71
    %1834 = vmatpush1.msra.mxu0 %v70
    %1835 = vmatprep.subr.mxu0 %v73
    %1836 = vmatpush1.msra.mxu0 %v72
    %1837 = vmatprep.subr.mxu0 %v75
    %1838 = vmatpush1.msra.mxu0 %v74
    %1839 = vmatprep.subr.mxu0 0.0
    %1840 = vmatpush1.msra.mxu0 0.0
    %1841 = vmatprep.subr.mxu0 0.0
    %1842 = vmatpush1.msra.mxu0 0.0
    %1843 = vmatprep.subr.mxu0 0.0
    %1844 = vmatpush1.msra.mxu0 0.0
    %1845 = vmatprep.subr.mxu0 0.0
    %1846 = vmatpush1.msra.mxu0 0.0
    %1847 = vmatprep.subr.mxu0 0.0
    %1848 = vmatpush1.msra.mxu0 0.0
    %1849 = vmatprep.subr.mxu0 0.0
    %1850 = vmatpush1.msra.mxu0 0.0
    %1851 = vmatprep.subr.mxu0 0.0
    %1852 = vmatpush1.msra.mxu0 0.0
    %1853 = vmatprep.subr.mxu0 0.0
    %1854 = vmatpush1.msra.mxu0 0.0
    %1855 = vmatprep.subr.mxu0 0.0
    %1856 = vmatpush1.msra.mxu0 0.0
    %1857 = vmatprep.subr.mxu0 0.0
    %1858 = vmatpush1.msra.mxu0 0.0
    %1859 = vmatprep.subr.mxu0 0.0
    %1860 = vmatpush1.msra.mxu0 0.0
    %1861 = vmatprep.subr.mxu0 0.0
    %1862 = vmatpush1.msra.mxu0 0.0
    %1863 = vmatprep.subr.mxu0 0.0
    %1864 = vmatpush1.msra.mxu0 0.0
    %1865 = vmatprep.subr.mxu0 0.0
    %1866 = vmatpush1.msra.mxu0 0.0
    %1867 = vmatprep.subr.mxu0 0.0
    %1868 = vmatpush1.msra.mxu0 0.0
    %1869 = vmatprep.subr.mxu0 0.0
    %1870 = vmatpush1.msra.mxu0 0.0
    %1871 = vmatprep.subr.mxu0 0.0
    %1872 = vmatpush1.msra.mxu0 0.0
    %1873 = vmatprep.subr.mxu0 0.0
    %1874 = vmatpush1.msra.mxu0 0.0
    %1875 = vmatprep.subr.mxu0 0.0
    %1876 = vmatpush1.msra.mxu0 0.0
    %1877 = vmatprep.subr.mxu0 0.0
    %1878 = vmatpush1.msra.mxu0 0.0
    %1879 = vmatprep.subr.mxu0 0.0
    %1880 = vmatpush1.msra.mxu0 0.0
    %1881 = vmatprep.subr.mxu0 0.0
    %1882 = vmatpush1.msra.mxu0 0.0
    %1883 = vmatprep.subr.mxu0 0.0
    %1884 = vmatpush1.msra.mxu0 0.0
    %1885 = vmatprep.subr.mxu0 0.0
    %1886 = vmatpush1.msra.mxu0 0.0
    %1887 = vmatprep.mubr.f32.mxu0 0.0
    %1888 = vmatmul.mubr.f32.gmra.mrb[0].mxu0 %v1821
    %v1889 = vpop.f32.mrb[0].mxu0
    %v1890 = vadd.f32 %v91, %v1889
    %v1891 = vpop.f32.mrb[0].mxu0
    %v1892 = vadd.f32 %v95, %v1891
    %1893 = vdwg.mxu0
    %v1894 = vadd.f32 %v1817, %v1890
    %v1895 = vxor.u32 %v1894, 2147483648
    %v1896 = vmul.f32 %v1895, 1.442695
    %v1897 = vpow.pop %v1896
    %v1898 = vadd.f32 %v1897, 1.0
    %v1899 = vrcp.pop %v1898
    %v1900 = vmul.f32 1.0, %v1899
    %1902 = vrot.lane.b32.xlu0 %v1890, 64
    %v1903 = vpop.permute.xlu0 %1902
    %v1905 = vmul.f32 %v1900, %v1903
    %1907 = vrot.lane.b32.xlu0 %v1905, 64
    %v1908 = vpop.permute.xlu0 %1907
    %v1910 = vadd.f32 %v1817, %v1908
    %v1911 = vtanh.pop %v1910
    %v1912 = vsub.f32 1.0, %v1900
    %1914 = vrot.lane.b32.xlu0 %v1911, 96
    %v1915 = vpop.permute.xlu0 %1914
    %v1917 = vmul.f32 %v1912, %v1915
    %v1918 = vmul.f32 %v1900, %v1695
    %v1919 = vadd.f32 %v1917, %v1918
    %1921 = vrot.lane.b32.xlu0 %v1919, 96
    %v1922 = vpop.permute.xlu0 %1921
    %v1923 = vsel %vm355, %v1922, 0
    %1925 = vmatprep.subr.mxu0 0.0
    %1926 = vmatpush1.msra.mxu0 %v76
    %1927 = vmatprep.subr.mxu0 0.0
    %1928 = vmatpush1.msra.mxu0 %v77
    %1929 = vmatprep.subr.mxu0 0.0
    %1930 = vmatpush1.msra.mxu0 %v78
    %1931 = vmatprep.subr.mxu0 0.0
    %1932 = vmatpush1.msra.mxu0 %v79
    %1933 = vmatprep.subr.mxu0 0.0
    %1934 = vmatpush1.msra.mxu0 0.0
    %1935 = vmatprep.subr.mxu0 0.0
    %1936 = vmatpush1.msra.mxu0 0.0
    %1937 = vmatprep.subr.mxu0 0.0
    %1938 = vmatpush1.msra.mxu0 0.0
    %1939 = vmatprep.subr.mxu0 0.0
    %1940 = vmatpush1.msra.mxu0 0.0
    %1941 = vmatprep.subr.mxu0 0.0
    %1942 = vmatpush1.msra.mxu0 0.0
    %1943 = vmatprep.subr.mxu0 0.0
    %1944 = vmatpush1.msra.mxu0 0.0
    %1945 = vmatprep.subr.mxu0 0.0
    %1946 = vmatpush1.msra.mxu0 0.0
    %1947 = vmatprep.subr.mxu0 0.0
    %1948 = vmatpush1.msra.mxu0 0.0
    %1949 = vmatprep.subr.mxu0 0.0
    %1950 = vmatpush1.msra.mxu0 0.0
    %1951 = vmatprep.subr.mxu0 0.0
    %1952 = vmatpush1.msra.mxu0 0.0
    %1953 = vmatprep.subr.mxu0 0.0
    %1954 = vmatpush1.msra.mxu0 0.0
    %1955 = vmatprep.subr.mxu0 0.0
    %1956 = vmatpush1.msra.mxu0 0.0
    %1957 = vmatprep.subr.mxu0 0.0
    %1958 = vmatpush1.msra.mxu0 0.0
    %1959 = vmatprep.subr.mxu0 0.0
    %1960 = vmatpush1.msra.mxu0 0.0
    %1961 = vmatprep.subr.mxu0 0.0
    %1962 = vmatpush1.msra.mxu0 0.0
    %1963 = vmatprep.subr.mxu0 0.0
    %1964 = vmatpush1.msra.mxu0 0.0
    %1965 = vmatprep.subr.mxu0 0.0
    %1966 = vmatpush1.msra.mxu0 0.0
    %1967 = vmatprep.subr.mxu0 0.0
    %1968 = vmatpush1.msra.mxu0 0.0
    %1969 = vmatprep.subr.mxu0 0.0
    %1970 = vmatpush1.msra.mxu0 0.0
    %1971 = vmatprep.subr.mxu0 0.0
    %1972 = vmatpush1.msra.mxu0 0.0
    %1973 = vmatprep.subr.mxu0 0.0
    %1974 = vmatpush1.msra.mxu0 0.0
    %1975 = vmatprep.subr.mxu0 0.0
    %1976 = vmatpush1.msra.mxu0 0.0
    %1977 = vmatprep.subr.mxu0 0.0
    %1978 = vmatpush1.msra.mxu0 0.0
    %1979 = vmatprep.subr.mxu0 0.0
    %1980 = vmatpush1.msra.mxu0 0.0
    %1981 = vmatprep.subr.mxu0 0.0
    %1982 = vmatpush1.msra.mxu0 0.0
    %1983 = vmatprep.subr.mxu0 0.0
    %1984 = vmatpush1.msra.mxu0 0.0
    %1985 = vmatprep.subr.mxu0 0.0
    %1986 = vmatpush1.msra.mxu0 0.0
    %1987 = vmatprep.subr.mxu0 0.0
    %1988 = vmatpush1.msra.mxu0 0.0
    %1989 = vmatprep.mubr.f32.mxu0 0.0
    %1990 = vmatmul.mubr.f32.gmra.mrb[0].mxu0 %v1923
    %v1991 = vpop.f32.mrb[0].mxu0
    %v1992 = vadd.f32 %v99, %v1991
    %v1993 = vpop.f32.mrb[0].mxu0
    %1994 = vdwg.mxu0
    %1995 = vrot.lane.b32.xlu0 %v1890, 32
    %v1996 = vpop.permute.xlu0 %1995
    %v1998 = vadd.f32 %v1992, %v1996
    %v1999 = vxor.u32 %v1998, 2147483648
    %v2000 = vmul.f32 %v1999, 1.442695
    %v2001 = vpow.pop %v2000
    %v2002 = vadd.f32 %v2001, 1.0
    %v2003 = vrcp.pop %v2002
    %v2004 = vmul.f32 1.0, %v2003
    %2006 = vrot.lane.b32.xlu0 %v1892, 32
    %v2007 = vpop.permute.xlu0 %2006
    %v2009 = vadd.f32 %v1992, %v2007
    %v2010 = vxor.u32 %v2009, 2147483648
    %v2011 = vmul.f32 %v2010, 1.442695
    %v2012 = vpow.pop %v2011
    %v2013 = vadd.f32 %v2012, 1.0
    %v2014 = vrcp.pop %v2013
    %v2015 = vmul.f32 1.0, %v2014
    %2016 = vrot.lane.b32.xlu0 %v1892, 96
    %v2017 = vpop.permute.xlu0 %2016
    %v2019 = vmul.f32 %v2004, %v2017
    %2021 = vrot.lane.b32.xlu0 %v2019, 64
    %v2022 = vpop.permute.xlu0 %2021
    %v2024 = vadd.f32 %v1992, %v2022
    %v2025 = vtanh.pop %v2024
    %v2026 = vsub.f32 1.0, %v2015
    %2028 = vrot.lane.b32.xlu0 %v2025, 96
    %v2029 = vpop.permute.xlu0 %2028
    %v2031 = vmul.f32 %v2026, %v2029
    %v2032 = vmul.f32 %v2015, %v1809
    %v2033 = vadd.f32 %v2031, %v2032
    %2035 = vrot.lane.b32.xlu0 %v2033, 96
    %v2036 = vpop.permute.xlu0 %2035
    %s2038 = scalar_lea.vmem [#allocation3], 56
    %2039 = vst.msk [vmem:[%s2038] sm:$0xff] %vm355, %v2036
    %v2040 = vld [vmem:[%s9] sm:$0x3f]
    %v2041 = vld [vmem:[%s10] sm:$0x7]
    %v2042 = vld [vmem:[#allocation3] sm:$0xff]
    %v2043 = vld [vmem:[#allocation3 + $0x8] sm:$0xff]
    %v2044 = vld [vmem:[#allocation3 + $0x10] sm:$0xff]
    %v2045 = vld [vmem:[#allocation3 + $0x18] sm:$0xff]
    %v2046 = vld [vmem:[#allocation3 + $0x20] sm:$0xff]
    %v2047 = vld [vmem:[#allocation3 + $0x28] sm:$0xff]
    %v2048 = vld [vmem:[#allocation3 + $0x30] sm:$0xff]
    %v2049 = vld [vmem:[#allocation3 + $0x38] sm:$0xff]
    %v2050 = vld [vmem:[%s6] sm:$0xff]
    %v2051 = vld [vmem:[%s6 + $0x8] sm:$0xff]
    %v2052 = vld [vmem:[%s6 + $0x10] sm:$0xff]
    %v2053 = vld [vmem:[%s6 + $0x18] sm:$0xff]
    %v2054 = vlaneseq
    %v2055 = vshrl.u32 %v2054, 7
    %v2056 = vsub.s32 0, %v2055
    %v2057 = vrot.slane %v2040, %v2056
    %v2059 = vsel %vm355, %v2042, 0
    %v2062 = vsel %vm355, %v2043, 0
    %v2065 = vsel %vm355, %v2044, 0
    %v2068 = vsel %vm355, %v2045, 0
    %v2071 = vsel %vm355, %v2046, 0
    %v2074 = vsel %vm355, %v2047, 0
    %v2077 = vsel %vm355, %v2048, 0
    %v2080 = vsel %vm355, %v2049, 0
    %2082 = vmatprep.subr.mxu0 0.0
    %2083 = vmatpush1.msra.mxu0 %v2050
    %2084 = vmatprep.subr.mxu0 0.0
    %2085 = vmatpush1.msra.mxu0 %v2051
    %2086 = vmatprep.subr.mxu0 0.0
    %2087 = vmatpush1.msra.mxu0 %v2052
    %2088 = vmatprep.subr.mxu0 0.0
    %2089 = vmatpush1.msra.mxu0 %v2053
    %2090 = vmatprep.subr.mxu0 0.0
    %2091 = vmatpush1.msra.mxu0 0.0
    %2092 = vmatprep.subr.mxu0 0.0
    %2093 = vmatpush1.msra.mxu0 0.0
    %2094 = vmatprep.subr.mxu0 0.0
    %2095 = vmatpush1.msra.mxu0 0.0
    %2096 = vmatprep.subr.mxu0 0.0
    %2097 = vmatpush1.msra.mxu0 0.0
    %2098 = vmatprep.subr.mxu0 0.0
    %2099 = vmatpush1.msra.mxu0 0.0
    %2100 = vmatprep.subr.mxu0 0.0
    %2101 = vmatpush1.msra.mxu0 0.0
    %2102 = vmatprep.subr.mxu0 0.0
    %2103 = vmatpush1.msra.mxu0 0.0
    %2104 = vmatprep.subr.mxu0 0.0
    %2105 = vmatpush1.msra.mxu0 0.0
    %2106 = vmatprep.subr.mxu0 0.0
    %2107 = vmatpush1.msra.mxu0 0.0
    %2108 = vmatprep.subr.mxu0 0.0
    %2109 = vmatpush1.msra.mxu0 0.0
    %2110 = vmatprep.subr.mxu0 0.0
    %2111 = vmatpush1.msra.mxu0 0.0
    %2112 = vmatprep.subr.mxu0 0.0
    %2113 = vmatpush1.msra.mxu0 0.0
    %2114 = vmatprep.subr.mxu0 0.0
    %2115 = vmatpush1.msra.mxu0 0.0
    %2116 = vmatprep.subr.mxu0 0.0
    %2117 = vmatpush1.msra.mxu0 0.0
    %2118 = vmatprep.subr.mxu0 0.0
    %2119 = vmatpush1.msra.mxu0 0.0
    %2120 = vmatprep.subr.mxu0 0.0
    %2121 = vmatpush1.msra.mxu0 0.0
    %2122 = vmatprep.subr.mxu0 0.0
    %2123 = vmatpush1.msra.mxu0 0.0
    %2124 = vmatprep.subr.mxu0 0.0
    %2125 = vmatpush1.msra.mxu0 0.0
    %2126 = vmatprep.subr.mxu0 0.0
    %2127 = vmatpush1.msra.mxu0 0.0
    %2128 = vmatprep.subr.mxu0 0.0
    %2129 = vmatpush1.msra.mxu0 0.0
    %2130 = vmatprep.subr.mxu0 0.0
    %2131 = vmatpush1.msra.mxu0 0.0
    %2132 = vmatprep.subr.mxu0 0.0
    %2133 = vmatpush1.msra.mxu0 0.0
    %2134 = vmatprep.subr.mxu0 0.0
    %2135 = vmatpush1.msra.mxu0 0.0
    %2136 = vmatprep.subr.mxu0 0.0
    %2137 = vmatpush1.msra.mxu0 0.0
    %2138 = vmatprep.subr.mxu0 0.0
    %2139 = vmatpush1.msra.mxu0 0.0
    %2140 = vmatprep.subr.mxu0 0.0
    %2141 = vmatpush1.msra.mxu0 0.0
    %2142 = vmatprep.subr.mxu0 0.0
    %2143 = vmatpush1.msra.mxu0 0.0
    %2144 = vmatprep.subr.mxu0 0.0
    %2145 = vmatpush1.msra.mxu0 0.0
    %2146 = vmatprep.mubr.f32.mxu0 0.0
    %2147 = vmatmul.mubr.f32.gmra.mrb[0].mxu0 %v2059
    %v2148 = vpop.f32.mrb[0].mxu0
    %v2149 = vadd.f32 %v2057, %v2148
    %v2150 = vpop.f32.mrb[0].mxu0
    %2151 = vmatprep.mubr.f32.mxu0 0.0
    %2152 = vmatmul.mubr.f32.gmra.mrb[0].mxu0 %v2062
    %v2153 = vpop.f32.mrb[0].mxu0
    %v2154 = vadd.f32 %v2057, %v2153
    %v2155 = vpop.f32.mrb[0].mxu0
    %2156 = vmatprep.mubr.f32.mxu0 0.0
    %2157 = vmatmul.mubr.f32.gmra.mrb[0].mxu0 %v2065
    %v2158 = vpop.f32.mrb[0].mxu0
    %v2159 = vadd.f32 %v2057, %v2158
    %v2160 = vpop.f32.mrb[0].mxu0
    %2161 = vmatprep.mubr.f32.mxu0 0.0
    %2162 = vmatmul.mubr.f32.gmra.mrb[0].mxu0 %v2068
    %v2163 = vpop.f32.mrb[0].mxu0
    %v2164 = vadd.f32 %v2057, %v2163
    %v2165 = vpop.f32.mrb[0].mxu0
    %2166 = vmatprep.mubr.f32.mxu0 0.0
    %2167 = vmatmul.mubr.f32.gmra.mrb[0].mxu0 %v2071
    %v2168 = vpop.f32.mrb[0].mxu0
    %v2169 = vadd.f32 %v2057, %v2168
    %v2170 = vpop.f32.mrb[0].mxu0
    %2171 = vmatprep.mubr.f32.mxu0 0.0
    %2172 = vmatmul.mubr.f32.gmra.mrb[0].mxu0 %v2074
    %v2173 = vpop.f32.mrb[0].mxu0
    %v2174 = vadd.f32 %v2057, %v2173
    %v2175 = vpop.f32.mrb[0].mxu0
    %2176 = vmatprep.mubr.f32.mxu0 0.0
    %2177 = vmatmul.mubr.f32.gmra.mrb[0].mxu0 %v2077
    %v2178 = vpop.f32.mrb[0].mxu0
    %v2179 = vadd.f32 %v2057, %v2178
    %v2180 = vpop.f32.mrb[0].mxu0
    %2181 = vmatprep.mubr.f32.mxu0 0.0
    %2182 = vmatmul.mubr.f32.gmra.mrb[0].mxu0 %v2080
    %v2183 = vpop.f32.mrb[0].mxu0
    %v2184 = vadd.f32 %v2057, %v2183
    %v2185 = vpop.f32.mrb[0].mxu0
    %2186 = vdwg.mxu0
    %v2187 = vsel %vm355, %v2149, 0.0
    %2188 = vadd.xlane.f32.xlu0 %v2187
    %v2189 = vpop.xlane.xlu0 %2188
    %v2190 = vsel %vm355, %v2154, 0.0
    %2191 = vadd.xlane.f32.xlu0 %v2190
    %v2192 = vpop.xlane.xlu0 %2191
    %v2193 = vsel %vm355, %v2159, 0.0
    %2194 = vadd.xlane.f32.xlu0 %v2193
    %v2195 = vpop.xlane.xlu0 %2194
    %v2196 = vsel %vm355, %v2164, 0.0
    %2197 = vadd.xlane.f32.xlu0 %v2196
    %v2198 = vpop.xlane.xlu0 %2197
    %v2199 = vsel %vm355, %v2169, 0.0
    %2200 = vadd.xlane.f32.xlu0 %v2199
    %v2201 = vpop.xlane.xlu0 %2200
    %v2202 = vsel %vm355, %v2174, 0.0
    %2203 = vadd.xlane.f32.xlu0 %v2202
    %v2204 = vpop.xlane.xlu0 %2203
    %v2205 = vsel %vm355, %v2179, 0.0
    %2206 = vadd.xlane.f32.xlu0 %v2205
    %v2207 = vpop.xlane.xlu0 %2206
    %v2208 = vsel %vm355, %v2184, 0.0
    %2209 = vadd.xlane.f32.xlu0 %v2208
    %v2210 = vpop.xlane.xlu0 %2209
    %v2211 = vrcp.pop 32.0
    %v2212 = vmul.f32 %v2189, %v2211
    %v2213 = vmul.f32 %v2192, %v2211
    %v2214 = vmul.f32 %v2195, %v2211
    %v2215 = vmul.f32 %v2198, %v2211
    %v2216 = vmul.f32 %v2201, %v2211
    %v2217 = vmul.f32 %v2204, %v2211
    %v2218 = vmul.f32 %v2207, %v2211
    %v2219 = vmul.f32 %v2210, %v2211
    %v2220 = vsub.f32 %v2149, %v2212
    %v2221 = vsub.f32 %v2154, %v2213
    %v2222 = vsub.f32 %v2159, %v2214
    %v2223 = vsub.f32 %v2164, %v2215
    %v2224 = vsub.f32 %v2169, %v2216
    %v2225 = vsub.f32 %v2174, %v2217
    %v2226 = vsub.f32 %v2179, %v2218
    %v2227 = vsub.f32 %v2184, %v2219
    %v2228 = vmul.f32 %v2220, %v2220
    %v2229 = vmul.f32 %v2221, %v2221
    %v2230 = vmul.f32 %v2222, %v2222
    %v2231 = vmul.f32 %v2223, %v2223
    %v2232 = vmul.f32 %v2224, %v2224
    %v2233 = vmul.f32 %v2225, %v2225
    %v2234 = vmul.f32 %v2226, %v2226
    %v2235 = vmul.f32 %v2227, %v2227
    %v2236 = vsel %vm355, %v2228, 0.0
    %2237 = vadd.xlane.f32.xlu0 %v2236
    %v2238 = vpop.xlane.xlu0 %2237
    %v2239 = vsel %vm355, %v2229, 0.0
    %2240 = vadd.xlane.f32.xlu0 %v2239
    %v2241 = vpop.xlane.xlu0 %2240
    %v2242 = vsel %vm355, %v2230, 0.0
    %2243 = vadd.xlane.f32.xlu0 %v2242
    %v2244 = vpop.xlane.xlu0 %2243
    %v2245 = vsel %vm355, %v2231, 0.0
    %2246 = vadd.xlane.f32.xlu0 %v2245
    %v2247 = vpop.xlane.xlu0 %2246
    %v2248 = vsel %vm355, %v2232, 0.0
    %2249 = vadd.xlane.f32.xlu0 %v2248
    %v2250 = vpop.xlane.xlu0 %2249
    %v2251 = vsel %vm355, %v2233, 0.0
    %2252 = vadd.xlane.f32.xlu0 %v2251
    %v2253 = vpop.xlane.xlu0 %2252
    %v2254 = vsel %vm355, %v2234, 0.0
    %2255 = vadd.xlane.f32.xlu0 %v2254
    %v2256 = vpop.xlane.xlu0 %2255
    %v2257 = vsel %vm355, %v2235, 0.0
    %2258 = vadd.xlane.f32.xlu0 %v2257
    %v2259 = vpop.xlane.xlu0 %2258
    %v2260 = vmul.f32 %v2238, %v2211
    %v2261 = vmul.f32 %v2241, %v2211
    %v2262 = vmul.f32 %v2244, %v2211
    %v2263 = vmul.f32 %v2247, %v2211
    %v2264 = vmul.f32 %v2250, %v2211
    %v2265 = vmul.f32 %v2253, %v2211
    %v2266 = vmul.f32 %v2256, %v2211
    %v2267 = vmul.f32 %v2259, %v2211
    %v2268 = vadd.f32 %v2260, 1e-05
    %v2269 = vadd.f32 %v2261, 1e-05
    %v2270 = vadd.f32 %v2262, 1e-05
    %v2271 = vadd.f32 %v2263, 1e-05
    %v2272 = vadd.f32 %v2264, 1e-05
    %v2273 = vadd.f32 %v2265, 1e-05
    %v2274 = vadd.f32 %v2266, 1e-05
    %v2275 = vadd.f32 %v2267, 1e-05
    %v2276 = vrsqrt.pop %v2268
    %v2277 = vrsqrt.pop %v2269
    %v2278 = vrsqrt.pop %v2270
    %v2279 = vrsqrt.pop %v2271
    %v2280 = vrsqrt.pop %v2272
    %v2281 = vrsqrt.pop %v2273
    %v2282 = vrsqrt.pop %v2274
    %v2283 = vrsqrt.pop %v2275
    %v2284 = vmul.f32 %v2220, %v2276
    %v2285 = vmul.f32 %v2221, %v2277
    %v2286 = vmul.f32 %v2222, %v2278
    %v2287 = vmul.f32 %v2223, %v2279
    %v2288 = vmul.f32 %v2224, %v2280
    %v2289 = vmul.f32 %v2225, %v2281
    %v2290 = vmul.f32 %v2226, %v2282
    %v2291 = vmul.f32 %v2227, %v2283
    %v2292 = vlaneseq
    %v2293 = vshrl.u32 %v2292, 7
    %v2294 = vsub.s32 1, %v2293
    %v2295 = vrot.slane %v2040, %v2294
    %v2296 = vmul.f32 %v2284, %v2295
    %v2297 = vmul.f32 %v2285, %v2295
    %v2298 = vmul.f32 %v2286, %v2295
    %v2299 = vmul.f32 %v2287, %v2295
    %v2300 = vmul.f32 %v2288, %v2295
    %v2301 = vmul.f32 %v2289, %v2295
    %v2302 = vmul.f32 %v2290, %v2295
    %v2303 = vmul.f32 %v2291, %v2295
    %v2304 = vlaneseq
    %v2305 = vshrl.u32 %v2304, 7
    %v2306 = vsub.s32 2, %v2305
    %v2307 = vrot.slane %v2040, %v2306
    %v2308 = vadd.f32 %v2296, %v2307
    %v2309 = vadd.f32 %v2297, %v2307
    %v2310 = vadd.f32 %v2298, %v2307
    %v2311 = vadd.f32 %v2299, %v2307
    %v2312 = vadd.f32 %v2300, %v2307
    %v2313 = vadd.f32 %v2301, %v2307
    %v2314 = vadd.f32 %v2302, %v2307
    %v2315 = vadd.f32 %v2303, %v2307
    %vm2316 = vcmp.gt.f32.partialorder %v2308, 0.0
    %vm2317 = vcmp.gt.f32.partialorder %v2309, 0.0
    %vm2318 = vcmp.gt.f32.partialorder %v2310, 0.0
    %vm2319 = vcmp.gt.f32.partialorder %v2311, 0.0
    %vm2320 = vcmp.gt.f32.partialorder %v2312, 0.0
    %vm2321 = vcmp.gt.f32.partialorder %v2313, 0.0
    %vm2322 = vcmp.gt.f32.partialorder %v2314, 0.0
    %vm2323 = vcmp.gt.f32.partialorder %v2315, 0.0
    %v2324 = vmul.f32 %v2308, 0.1
    %v2325 = vmul.f32 %v2309, 0.1
    %v2326 = vmul.f32 %v2310, 0.1
    %v2327 = vmul.f32 %v2311, 0.1
    %v2328 = vmul.f32 %v2312, 0.1
    %v2329 = vmul.f32 %v2313, 0.1
    %v2330 = vmul.f32 %v2314, 0.1
    %v2331 = vmul.f32 %v2315, 0.1
    %v2332 = vsel %vm2316, %v2308, %v2324
    %v2333 = vsel %vm2317, %v2309, %v2325
    %v2334 = vsel %vm2318, %v2310, %v2326
    %v2335 = vsel %vm2319, %v2311, %v2327
    %v2336 = vsel %vm2320, %v2312, %v2328
    %v2337 = vsel %vm2321, %v2313, %v2329
    %v2338 = vsel %vm2322, %v2314, %v2330
    %v2339 = vsel %vm2323, %v2315, %v2331
    %v2340 = vld [vmem:[%s7] sm:$0xff]
    %v2341 = vld [vmem:[%s7 + $0x8] sm:$0xff]
    %v2342 = vld [vmem:[%s7 + $0x10] sm:$0xff]
    %v2343 = vld [vmem:[%s7 + $0x18] sm:$0xff]
    %v2344 = vlaneseq
    %v2345 = vshrl.u32 %v2344, 7
    %v2346 = vsub.s32 3, %v2345
    %v2347 = vrot.slane %v2040, %v2346
    %v2349 = vsel %vm355, %v2332, 0
    %v2352 = vsel %vm355, %v2333, 0
    %v2355 = vsel %vm355, %v2334, 0
    %v2358 = vsel %vm355, %v2335, 0
    %v2361 = vsel %vm355, %v2336, 0
    %v2364 = vsel %vm355, %v2337, 0
    %v2367 = vsel %vm355, %v2338, 0
    %v2370 = vsel %vm355, %v2339, 0
    %2372 = vmatprep.subr.mxu0 0.0
    %2373 = vmatpush1.msra.mxu0 %v2340
    %2374 = vmatprep.subr.mxu0 0.0
    %2375 = vmatpush1.msra.mxu0 %v2341
    %2376 = vmatprep.subr.mxu0 0.0
    %2377 = vmatpush1.msra.mxu0 %v2342
    %2378 = vmatprep.subr.mxu0 0.0
    %2379 = vmatpush1.msra.mxu0 %v2343
    %2380 = vmatprep.subr.mxu0 0.0
    %2381 = vmatpush1.msra.mxu0 0.0
    %2382 = vmatprep.subr.mxu0 0.0
    %2383 = vmatpush1.msra.mxu0 0.0
    %2384 = vmatprep.subr.mxu0 0.0
    %2385 = vmatpush1.msra.mxu0 0.0
    %2386 = vmatprep.subr.mxu0 0.0
    %2387 = vmatpush1.msra.mxu0 0.0
    %2388 = vmatprep.subr.mxu0 0.0
    %2389 = vmatpush1.msra.mxu0 0.0
    %2390 = vmatprep.subr.mxu0 0.0
    %2391 = vmatpush1.msra.mxu0 0.0
    %2392 = vmatprep.subr.mxu0 0.0
    %2393 = vmatpush1.msra.mxu0 0.0
    %2394 = vmatprep.subr.mxu0 0.0
    %2395 = vmatpush1.msra.mxu0 0.0
    %2396 = vmatprep.subr.mxu0 0.0
    %2397 = vmatpush1.msra.mxu0 0.0
    %2398 = vmatprep.subr.mxu0 0.0
    %2399 = vmatpush1.msra.mxu0 0.0
    %2400 = vmatprep.subr.mxu0 0.0
    %2401 = vmatpush1.msra.mxu0 0.0
    %2402 = vmatprep.subr.mxu0 0.0
    %2403 = vmatpush1.msra.mxu0 0.0
    %2404 = vmatprep.subr.mxu0 0.0
    %2405 = vmatpush1.msra.mxu0 0.0
    %2406 = vmatprep.subr.mxu0 0.0
    %2407 = vmatpush1.msra.mxu0 0.0
    %2408 = vmatprep.subr.mxu0 0.0
    %2409 = vmatpush1.msra.mxu0 0.0
    %2410 = vmatprep.subr.mxu0 0.0
    %2411 = vmatpush1.msra.mxu0 0.0
    %2412 = vmatprep.subr.mxu0 0.0
    %2413 = vmatpush1.msra.mxu0 0.0
    %2414 = vmatprep.subr.mxu0 0.0
    %2415 = vmatpush1.msra.mxu0 0.0
    %2416 = vmatprep.subr.mxu0 0.0
    %2417 = vmatpush1.msra.mxu0 0.0
    %2418 = vmatprep.subr.mxu0 0.0
    %2419 = vmatpush1.msra.mxu0 0.0
    %2420 = vmatprep.subr.mxu0 0.0
    %2421 = vmatpush1.msra.mxu0 0.0
    %2422 = vmatprep.subr.mxu0 0.0
    %2423 = vmatpush1.msra.mxu0 0.0
    %2424 = vmatprep.subr.mxu0 0.0
    %2425 = vmatpush1.msra.mxu0 0.0
    %2426 = vmatprep.subr.mxu0 0.0
    %2427 = vmatpush1.msra.mxu0 0.0
    %2428 = vmatprep.subr.mxu0 0.0
    %2429 = vmatpush1.msra.mxu0 0.0
    %2430 = vmatprep.subr.mxu0 0.0
    %2431 = vmatpush1.msra.mxu0 0.0
    %2432 = vmatprep.subr.mxu0 0.0
    %2433 = vmatpush1.msra.mxu0 0.0
    %2434 = vmatprep.subr.mxu0 0.0
    %2435 = vmatpush1.msra.mxu0 0.0
    %2436 = vmatprep.mubr.f32.mxu0 0.0
    %2437 = vmatmul.mubr.f32.gmra.mrb[0].mxu0 %v2349
    %v2438 = vpop.f32.mrb[0].mxu0
    %v2439 = vadd.f32 %v2347, %v2438
    %v2440 = vpop.f32.mrb[0].mxu0
    %2441 = vmatprep.mubr.f32.mxu0 0.0
    %2442 = vmatmul.mubr.f32.gmra.mrb[0].mxu0 %v2352
    %v2443 = vpop.f32.mrb[0].mxu0
    %v2444 = vadd.f32 %v2347, %v2443
    %v2445 = vpop.f32.mrb[0].mxu0
    %2446 = vmatprep.mubr.f32.mxu0 0.0
    %2447 = vmatmul.mubr.f32.gmra.mrb[0].mxu0 %v2355
    %v2448 = vpop.f32.mrb[0].mxu0
    %v2449 = vadd.f32 %v2347, %v2448
    %v2450 = vpop.f32.mrb[0].mxu0
    %2451 = vmatprep.mubr.f32.mxu0 0.0
    %2452 = vmatmul.mubr.f32.gmra.mrb[0].mxu0 %v2358
    %v2453 = vpop.f32.mrb[0].mxu0
    %v2454 = vadd.f32 %v2347, %v2453
    %v2455 = vpop.f32.mrb[0].mxu0
    %2456 = vmatprep.mubr.f32.mxu0 0.0
    %2457 = vmatmul.mubr.f32.gmra.mrb[0].mxu0 %v2361
    %v2458 = vpop.f32.mrb[0].mxu0
    %v2459 = vadd.f32 %v2347, %v2458
    %v2460 = vpop.f32.mrb[0].mxu0
    %2461 = vmatprep.mubr.f32.mxu0 0.0
    %2462 = vmatmul.mubr.f32.gmra.mrb[0].mxu0 %v2364
    %v2463 = vpop.f32.mrb[0].mxu0
    %v2464 = vadd.f32 %v2347, %v2463
    %v2465 = vpop.f32.mrb[0].mxu0
    %2466 = vmatprep.mubr.f32.mxu0 0.0
    %2467 = vmatmul.mubr.f32.gmra.mrb[0].mxu0 %v2367
    %v2468 = vpop.f32.mrb[0].mxu0
    %v2469 = vadd.f32 %v2347, %v2468
    %v2470 = vpop.f32.mrb[0].mxu0
    %2471 = vmatprep.mubr.f32.mxu0 0.0
    %2472 = vmatmul.mubr.f32.gmra.mrb[0].mxu0 %v2370
    %v2473 = vpop.f32.mrb[0].mxu0
    %v2474 = vadd.f32 %v2347, %v2473
    %v2475 = vpop.f32.mrb[0].mxu0
    %2476 = vdwg.mxu0
    %v2477 = vsel %vm355, %v2439, 0.0
    %2478 = vadd.xlane.f32.xlu0 %v2477
    %v2479 = vpop.xlane.xlu0 %2478
    %v2480 = vsel %vm355, %v2444, 0.0
    %2481 = vadd.xlane.f32.xlu0 %v2480
    %v2482 = vpop.xlane.xlu0 %2481
    %v2483 = vsel %vm355, %v2449, 0.0
    %2484 = vadd.xlane.f32.xlu0 %v2483
    %v2485 = vpop.xlane.xlu0 %2484
    %v2486 = vsel %vm355, %v2454, 0.0
    %2487 = vadd.xlane.f32.xlu0 %v2486
    %v2488 = vpop.xlane.xlu0 %2487
    %v2489 = vsel %vm355, %v2459, 0.0
    %2490 = vadd.xlane.f32.xlu0 %v2489
    %v2491 = vpop.xlane.xlu0 %2490
    %v2492 = vsel %vm355, %v2464, 0.0
    %2493 = vadd.xlane.f32.xlu0 %v2492
    %v2494 = vpop.xlane.xlu0 %2493
    %v2495 = vsel %vm355, %v2469, 0.0
    %2496 = vadd.xlane.f32.xlu0 %v2495
    %v2497 = vpop.xlane.xlu0 %2496
    %v2498 = vsel %vm355, %v2474, 0.0
    %2499 = vadd.xlane.f32.xlu0 %v2498
    %v2500 = vpop.xlane.xlu0 %2499
    %v2501 = vmul.f32 %v2479, %v2211
    %v2502 = vmul.f32 %v2482, %v2211
    %v2503 = vmul.f32 %v2485, %v2211
    %v2504 = vmul.f32 %v2488, %v2211
    %v2505 = vmul.f32 %v2491, %v2211
    %v2506 = vmul.f32 %v2494, %v2211
    %v2507 = vmul.f32 %v2497, %v2211
    %v2508 = vmul.f32 %v2500, %v2211
    %v2509 = vsub.f32 %v2439, %v2501
    %v2510 = vsub.f32 %v2444, %v2502
    %v2511 = vsub.f32 %v2449, %v2503
    %v2512 = vsub.f32 %v2454, %v2504
    %v2513 = vsub.f32 %v2459, %v2505
    %v2514 = vsub.f32 %v2464, %v2506
    %v2515 = vsub.f32 %v2469, %v2507
    %v2516 = vsub.f32 %v2474, %v2508
    %v2517 = vmul.f32 %v2509, %v2509
    %v2518 = vmul.f32 %v2510, %v2510
    %v2519 = vmul.f32 %v2511, %v2511
    %v2520 = vmul.f32 %v2512, %v2512
    %v2521 = vmul.f32 %v2513, %v2513
    %v2522 = vmul.f32 %v2514, %v2514
    %v2523 = vmul.f32 %v2515, %v2515
    %v2524 = vmul.f32 %v2516, %v2516
    %v2525 = vsel %vm355, %v2517, 0.0
    %2526 = vadd.xlane.f32.xlu0 %v2525
    %v2527 = vpop.xlane.xlu0 %2526
    %v2528 = vsel %vm355, %v2518, 0.0
    %2529 = vadd.xlane.f32.xlu0 %v2528
    %v2530 = vpop.xlane.xlu0 %2529
    %v2531 = vsel %vm355, %v2519, 0.0
    %2532 = vadd.xlane.f32.xlu0 %v2531
    %v2533 = vpop.xlane.xlu0 %2532
    %v2534 = vsel %vm355, %v2520, 0.0
    %2535 = vadd.xlane.f32.xlu0 %v2534
    %v2536 = vpop.xlane.xlu0 %2535
    %v2537 = vsel %vm355, %v2521, 0.0
    %2538 = vadd.xlane.f32.xlu0 %v2537
    %v2539 = vpop.xlane.xlu0 %2538
    %v2540 = vsel %vm355, %v2522, 0.0
    %2541 = vadd.xlane.f32.xlu0 %v2540
    %v2542 = vpop.xlane.xlu0 %2541
    %v2543 = vsel %vm355, %v2523, 0.0
    %2544 = vadd.xlane.f32.xlu0 %v2543
    %v2545 = vpop.xlane.xlu0 %2544
    %v2546 = vsel %vm355, %v2524, 0.0
    %2547 = vadd.xlane.f32.xlu0 %v2546
    %v2548 = vpop.xlane.xlu0 %2547
    %v2549 = vmul.f32 %v2527, %v2211
    %v2550 = vmul.f32 %v2530, %v2211
    %v2551 = vmul.f32 %v2533, %v2211
    %v2552 = vmul.f32 %v2536, %v2211
    %v2553 = vmul.f32 %v2539, %v2211
    %v2554 = vmul.f32 %v2542, %v2211
    %v2555 = vmul.f32 %v2545, %v2211
    %v2556 = vmul.f32 %v2548, %v2211
    %v2557 = vadd.f32 %v2549, 1e-05
    %v2558 = vadd.f32 %v2550, 1e-05
    %v2559 = vadd.f32 %v2551, 1e-05
    %v2560 = vadd.f32 %v2552, 1e-05
    %v2561 = vadd.f32 %v2553, 1e-05
    %v2562 = vadd.f32 %v2554, 1e-05
    %v2563 = vadd.f32 %v2555, 1e-05
    %v2564 = vadd.f32 %v2556, 1e-05
    %v2565 = vrsqrt.pop %v2557
    %v2566 = vrsqrt.pop %v2558
    %v2567 = vrsqrt.pop %v2559
    %v2568 = vrsqrt.pop %v2560
    %v2569 = vrsqrt.pop %v2561
    %v2570 = vrsqrt.pop %v2562
    %v2571 = vrsqrt.pop %v2563
    %v2572 = vrsqrt.pop %v2564
    %v2573 = vmul.f32 %v2509, %v2565
    %v2574 = vmul.f32 %v2510, %v2566
    %v2575 = vmul.f32 %v2511, %v2567
    %v2576 = vmul.f32 %v2512, %v2568
    %v2577 = vmul.f32 %v2513, %v2569
    %v2578 = vmul.f32 %v2514, %v2570
    %v2579 = vmul.f32 %v2515, %v2571
    %v2580 = vmul.f32 %v2516, %v2572
    %v2581 = vlaneseq
    %v2582 = vshrl.u32 %v2581, 7
    %v2583 = vsub.s32 4, %v2582
    %v2584 = vrot.slane %v2040, %v2583
    %v2585 = vmul.f32 %v2573, %v2584
    %v2586 = vmul.f32 %v2574, %v2584
    %v2587 = vmul.f32 %v2575, %v2584
    %v2588 = vmul.f32 %v2576, %v2584
    %v2589 = vmul.f32 %v2577, %v2584
    %v2590 = vmul.f32 %v2578, %v2584
    %v2591 = vmul.f32 %v2579, %v2584
    %v2592 = vmul.f32 %v2580, %v2584
    %v2593 = vlaneseq
    %v2594 = vshrl.u32 %v2593, 7
    %v2595 = vsub.s32 5, %v2594
    %v2596 = vrot.slane %v2040, %v2595
    %v2597 = vadd.f32 %v2585, %v2596
    %v2598 = vadd.f32 %v2586, %v2596
    %v2599 = vadd.f32 %v2587, %v2596
    %v2600 = vadd.f32 %v2588, %v2596
    %v2601 = vadd.f32 %v2589, %v2596
    %v2602 = vadd.f32 %v2590, %v2596
    %v2603 = vadd.f32 %v2591, %v2596
    %v2604 = vadd.f32 %v2592, %v2596
    %vm2605 = vcmp.gt.f32.partialorder %v2597, 0.0
    %vm2606 = vcmp.gt.f32.partialorder %v2598, 0.0
    %vm2607 = vcmp.gt.f32.partialorder %v2599, 0.0
    %vm2608 = vcmp.gt.f32.partialorder %v2600, 0.0
    %vm2609 = vcmp.gt.f32.partialorder %v2601, 0.0
    %vm2610 = vcmp.gt.f32.partialorder %v2602, 0.0
    %vm2611 = vcmp.gt.f32.partialorder %v2603, 0.0
    %vm2612 = vcmp.gt.f32.partialorder %v2604, 0.0
    %v2613 = vmul.f32 %v2597, 0.1
    %v2614 = vmul.f32 %v2598, 0.1
    %v2615 = vmul.f32 %v2599, 0.1
    %v2616 = vmul.f32 %v2600, 0.1
    %v2617 = vmul.f32 %v2601, 0.1
    %v2618 = vmul.f32 %v2602, 0.1
    %v2619 = vmul.f32 %v2603, 0.1
    %v2620 = vmul.f32 %v2604, 0.1
    %v2621 = vsel %vm2605, %v2597, %v2613
    %v2622 = vsel %vm2606, %v2598, %v2614
    %v2623 = vsel %vm2607, %v2599, %v2615
    %v2624 = vsel %vm2608, %v2600, %v2616
    %v2625 = vsel %vm2609, %v2601, %v2617
    %v2626 = vsel %vm2610, %v2602, %v2618
    %v2627 = vsel %vm2611, %v2603, %v2619
    %v2628 = vsel %vm2612, %v2604, %v2620
    %v2629 = vld [vmem:[%s8] sm:$0xff]
    %v2630 = vld [vmem:[%s8 + $0x8] sm:$0xff]
    %v2631 = vld [vmem:[%s8 + $0x10] sm:$0xff]
    %v2632 = vld [vmem:[%s8 + $0x18] sm:$0xff]
    %v2633 = vlaneseq
    %v2634 = vshrl.u32 %v2633, 7
    %v2635 = vsub.s32 0, %v2634
    %v2636 = vrot.slane %v2041, %v2635
    %v2638 = vsel %vm355, %v2621, 0
    %v2641 = vsel %vm355, %v2622, 0
    %v2644 = vsel %vm355, %v2623, 0
    %v2647 = vsel %vm355, %v2624, 0
    %v2650 = vsel %vm355, %v2625, 0
    %v2653 = vsel %vm355, %v2626, 0
    %v2656 = vsel %vm355, %v2627, 0
    %v2659 = vsel %vm355, %v2628, 0
    %2661 = vmatprep.subr.mxu0 0.0
    %2662 = vmatpush1.msra.mxu0 %v2629
    %2663 = vmatprep.subr.mxu0 0.0
    %2664 = vmatpush1.msra.mxu0 %v2630
    %2665 = vmatprep.subr.mxu0 0.0
    %2666 = vmatpush1.msra.mxu0 %v2631
    %2667 = vmatprep.subr.mxu0 0.0
    %2668 = vmatpush1.msra.mxu0 %v2632
    %2669 = vmatprep.subr.mxu0 0.0
    %2670 = vmatpush1.msra.mxu0 0.0
    %2671 = vmatprep.subr.mxu0 0.0
    %2672 = vmatpush1.msra.mxu0 0.0
    %2673 = vmatprep.subr.mxu0 0.0
    %2674 = vmatpush1.msra.mxu0 0.0
    %2675 = vmatprep.subr.mxu0 0.0
    %2676 = vmatpush1.msra.mxu0 0.0
    %2677 = vmatprep.subr.mxu0 0.0
    %2678 = vmatpush1.msra.mxu0 0.0
    %2679 = vmatprep.subr.mxu0 0.0
    %2680 = vmatpush1.msra.mxu0 0.0
    %2681 = vmatprep.subr.mxu0 0.0
    %2682 = vmatpush1.msra.mxu0 0.0
    %2683 = vmatprep.subr.mxu0 0.0
    %2684 = vmatpush1.msra.mxu0 0.0
    %2685 = vmatprep.subr.mxu0 0.0
    %2686 = vmatpush1.msra.mxu0 0.0
    %2687 = vmatprep.subr.mxu0 0.0
    %2688 = vmatpush1.msra.mxu0 0.0
    %2689 = vmatprep.subr.mxu0 0.0
    %2690 = vmatpush1.msra.mxu0 0.0
    %2691 = vmatprep.subr.mxu0 0.0
    %2692 = vmatpush1.msra.mxu0 0.0
    %2693 = vmatprep.subr.mxu0 0.0
    %2694 = vmatpush1.msra.mxu0 0.0
    %2695 = vmatprep.subr.mxu0 0.0
    %2696 = vmatpush1.msra.mxu0 0.0
    %2697 = vmatprep.subr.mxu0 0.0
    %2698 = vmatpush1.msra.mxu0 0.0
    %2699 = vmatprep.subr.mxu0 0.0
    %2700 = vmatpush1.msra.mxu0 0.0
    %2701 = vmatprep.subr.mxu0 0.0
    %2702 = vmatpush1.msra.mxu0 0.0
    %2703 = vmatprep.subr.mxu0 0.0
    %2704 = vmatpush1.msra.mxu0 0.0
    %2705 = vmatprep.subr.mxu0 0.0
    %2706 = vmatpush1.msra.mxu0 0.0
    %2707 = vmatprep.subr.mxu0 0.0
    %2708 = vmatpush1.msra.mxu0 0.0
    %2709 = vmatprep.subr.mxu0 0.0
    %2710 = vmatpush1.msra.mxu0 0.0
    %2711 = vmatprep.subr.mxu0 0.0
    %2712 = vmatpush1.msra.mxu0 0.0
    %2713 = vmatprep.subr.mxu0 0.0
    %2714 = vmatpush1.msra.mxu0 0.0
    %2715 = vmatprep.subr.mxu0 0.0
    %2716 = vmatpush1.msra.mxu0 0.0
    %2717 = vmatprep.subr.mxu0 0.0
    %2718 = vmatpush1.msra.mxu0 0.0
    %2719 = vmatprep.subr.mxu0 0.0
    %2720 = vmatpush1.msra.mxu0 0.0
    %2721 = vmatprep.subr.mxu0 0.0
    %2722 = vmatpush1.msra.mxu0 0.0
    %2723 = vmatprep.subr.mxu0 0.0
    %2724 = vmatpush1.msra.mxu0 0.0
    %2725 = vmatprep.mubr.f32.mxu0 0.0
    %2726 = vmatmul.mubr.f32.gmra.mrb[0].mxu0 %v2638
    %v2727 = vpop.f32.mrb[0].mxu0
    %v2728 = vadd.f32 %v2636, %v2727
    %v2729 = vpop.f32.mrb[0].mxu0
    %2730 = vmatprep.mubr.f32.mxu0 0.0
    %2731 = vmatmul.mubr.f32.gmra.mrb[0].mxu0 %v2641
    %v2732 = vpop.f32.mrb[0].mxu0
    %v2733 = vadd.f32 %v2636, %v2732
    %v2734 = vpop.f32.mrb[0].mxu0
    %2735 = vmatprep.mubr.f32.mxu0 0.0
    %2736 = vmatmul.mubr.f32.gmra.mrb[0].mxu0 %v2644
    %v2737 = vpop.f32.mrb[0].mxu0
    %v2738 = vadd.f32 %v2636, %v2737
    %v2739 = vpop.f32.mrb[0].mxu0
    %2740 = vmatprep.mubr.f32.mxu0 0.0
    %2741 = vmatmul.mubr.f32.gmra.mrb[0].mxu0 %v2647
    %v2742 = vpop.f32.mrb[0].mxu0
    %v2743 = vadd.f32 %v2636, %v2742
    %v2744 = vpop.f32.mrb[0].mxu0
    %2745 = vmatprep.mubr.f32.mxu0 0.0
    %2746 = vmatmul.mubr.f32.gmra.mrb[0].mxu0 %v2650
    %v2747 = vpop.f32.mrb[0].mxu0
    %v2748 = vadd.f32 %v2636, %v2747
    %v2749 = vpop.f32.mrb[0].mxu0
    %2750 = vmatprep.mubr.f32.mxu0 0.0
    %2751 = vmatmul.mubr.f32.gmra.mrb[0].mxu0 %v2653
    %v2752 = vpop.f32.mrb[0].mxu0
    %v2753 = vadd.f32 %v2636, %v2752
    %v2754 = vpop.f32.mrb[0].mxu0
    %2755 = vmatprep.mubr.f32.mxu0 0.0
    %2756 = vmatmul.mubr.f32.gmra.mrb[0].mxu0 %v2656
    %v2757 = vpop.f32.mrb[0].mxu0
    %v2758 = vadd.f32 %v2636, %v2757
    %v2759 = vpop.f32.mrb[0].mxu0
    %2760 = vmatprep.mubr.f32.mxu0 0.0
    %2761 = vmatmul.mubr.f32.gmra.mrb[0].mxu0 %v2659
    %v2762 = vpop.f32.mrb[0].mxu0
    %v2763 = vadd.f32 %v2636, %v2762
    %v2764 = vpop.f32.mrb[0].mxu0
    %2765 = vdwg.mxu0
    %v2766 = vsel %vm112, %v2728, 0.0
    %2767 = vadd.xlane.f32.xlu0 %v2766
    %v2768 = vpop.xlane.xlu0 %2767
    %v2769 = vsel %vm112, %v2733, 0.0
    %2770 = vadd.xlane.f32.xlu0 %v2769
    %v2771 = vpop.xlane.xlu0 %2770
    %v2772 = vsel %vm112, %v2738, 0.0
    %2773 = vadd.xlane.f32.xlu0 %v2772
    %v2774 = vpop.xlane.xlu0 %2773
    %v2775 = vsel %vm112, %v2743, 0.0
    %2776 = vadd.xlane.f32.xlu0 %v2775
    %v2777 = vpop.xlane.xlu0 %2776
    %v2778 = vsel %vm112, %v2748, 0.0
    %2779 = vadd.xlane.f32.xlu0 %v2778
    %v2780 = vpop.xlane.xlu0 %2779
    %v2781 = vsel %vm112, %v2753, 0.0
    %2782 = vadd.xlane.f32.xlu0 %v2781
    %v2783 = vpop.xlane.xlu0 %2782
    %v2784 = vsel %vm112, %v2758, 0.0
    %2785 = vadd.xlane.f32.xlu0 %v2784
    %v2786 = vpop.xlane.xlu0 %2785
    %v2787 = vsel %vm112, %v2763, 0.0
    %2788 = vadd.xlane.f32.xlu0 %v2787
    %v2789 = vpop.xlane.xlu0 %2788
    %v2790 = vrcp.pop 16.0
    %v2791 = vmul.f32 %v2768, %v2790
    %v2792 = vmul.f32 %v2771, %v2790
    %v2793 = vmul.f32 %v2774, %v2790
    %v2794 = vmul.f32 %v2777, %v2790
    %v2795 = vmul.f32 %v2780, %v2790
    %v2796 = vmul.f32 %v2783, %v2790
    %v2797 = vmul.f32 %v2786, %v2790
    %v2798 = vmul.f32 %v2789, %v2790
    %v2799 = vsub.f32 %v2728, %v2791
    %v2800 = vsub.f32 %v2733, %v2792
    %v2801 = vsub.f32 %v2738, %v2793
    %v2802 = vsub.f32 %v2743, %v2794
    %v2803 = vsub.f32 %v2748, %v2795
    %v2804 = vsub.f32 %v2753, %v2796
    %v2805 = vsub.f32 %v2758, %v2797
    %v2806 = vsub.f32 %v2763, %v2798
    %v2807 = vmul.f32 %v2799, %v2799
    %v2808 = vmul.f32 %v2800, %v2800
    %v2809 = vmul.f32 %v2801, %v2801
    %v2810 = vmul.f32 %v2802, %v2802
    %v2811 = vmul.f32 %v2803, %v2803
    %v2812 = vmul.f32 %v2804, %v2804
    %v2813 = vmul.f32 %v2805, %v2805
    %v2814 = vmul.f32 %v2806, %v2806
    %v2815 = vsel %vm112, %v2807, 0.0
    %2816 = vadd.xlane.f32.xlu0 %v2815
    %v2817 = vpop.xlane.xlu0 %2816
    %v2818 = vsel %vm112, %v2808, 0.0
    %2819 = vadd.xlane.f32.xlu0 %v2818
    %v2820 = vpop.xlane.xlu0 %2819
    %v2821 = vsel %vm112, %v2809, 0.0
    %2822 = vadd.xlane.f32.xlu0 %v2821
    %v2823 = vpop.xlane.xlu0 %2822
    %v2824 = vsel %vm112, %v2810, 0.0
    %2825 = vadd.xlane.f32.xlu0 %v2824
    %v2826 = vpop.xlane.xlu0 %2825
    %v2827 = vsel %vm112, %v2811, 0.0
    %2828 = vadd.xlane.f32.xlu0 %v2827
    %v2829 = vpop.xlane.xlu0 %2828
    %v2830 = vsel %vm112, %v2812, 0.0
    %2831 = vadd.xlane.f32.xlu0 %v2830
    %v2832 = vpop.xlane.xlu0 %2831
    %v2833 = vsel %vm112, %v2813, 0.0
    %2834 = vadd.xlane.f32.xlu0 %v2833
    %v2835 = vpop.xlane.xlu0 %2834
    %v2836 = vsel %vm112, %v2814, 0.0
    %2837 = vadd.xlane.f32.xlu0 %v2836
    %v2838 = vpop.xlane.xlu0 %2837
    %v2839 = vmul.f32 %v2817, %v2790
    %v2840 = vmul.f32 %v2820, %v2790
    %v2841 = vmul.f32 %v2823, %v2790
    %v2842 = vmul.f32 %v2826, %v2790
    %v2843 = vmul.f32 %v2829, %v2790
    %v2844 = vmul.f32 %v2832, %v2790
    %v2845 = vmul.f32 %v2835, %v2790
    %v2846 = vmul.f32 %v2838, %v2790
    %v2847 = vadd.f32 %v2839, 1e-05
    %v2848 = vadd.f32 %v2840, 1e-05
    %v2849 = vadd.f32 %v2841, 1e-05
    %v2850 = vadd.f32 %v2842, 1e-05
    %v2851 = vadd.f32 %v2843, 1e-05
    %v2852 = vadd.f32 %v2844, 1e-05
    %v2853 = vadd.f32 %v2845, 1e-05
    %v2854 = vadd.f32 %v2846, 1e-05
    %v2855 = vrsqrt.pop %v2847
    %v2856 = vrsqrt.pop %v2848
    %v2857 = vrsqrt.pop %v2849
    %v2858 = vrsqrt.pop %v2850
    %v2859 = vrsqrt.pop %v2851
    %v2860 = vrsqrt.pop %v2852
    %v2861 = vrsqrt.pop %v2853
    %v2862 = vrsqrt.pop %v2854
    %v2863 = vmul.f32 %v2799, %v2855
    %v2864 = vmul.f32 %v2800, %v2856
    %v2865 = vmul.f32 %v2801, %v2857
    %v2866 = vmul.f32 %v2802, %v2858
    %v2867 = vmul.f32 %v2803, %v2859
    %v2868 = vmul.f32 %v2804, %v2860
    %v2869 = vmul.f32 %v2805, %v2861
    %v2870 = vmul.f32 %v2806, %v2862
    %v2871 = vlaneseq
    %v2872 = vshrl.u32 %v2871, 7
    %v2873 = vsub.s32 1, %v2872
    %v2874 = vrot.slane %v2041, %v2873
    %v2875 = vmul.f32 %v2863, %v2874
    %v2876 = vmul.f32 %v2864, %v2874
    %v2877 = vmul.f32 %v2865, %v2874
    %v2878 = vmul.f32 %v2866, %v2874
    %v2879 = vmul.f32 %v2867, %v2874
    %v2880 = vmul.f32 %v2868, %v2874
    %v2881 = vmul.f32 %v2869, %v2874
    %v2882 = vmul.f32 %v2870, %v2874
    %v2883 = vlaneseq
    %v2884 = vshrl.u32 %v2883, 7
    %v2885 = vsub.s32 2, %v2884
    %v2886 = vrot.slane %v2041, %v2885
    %v2887 = vadd.f32 %v2875, %v2886
    %v2888 = vadd.f32 %v2876, %v2886
    %v2889 = vadd.f32 %v2877, %v2886
    %v2890 = vadd.f32 %v2878, %v2886
    %v2891 = vadd.f32 %v2879, %v2886
    %v2892 = vadd.f32 %v2880, %v2886
    %v2893 = vadd.f32 %v2881, %v2886
    %v2894 = vadd.f32 %v2882, %v2886
    %vm2895 = vcmp.gt.f32.partialorder %v2887, 0.0
    %vm2896 = vcmp.gt.f32.partialorder %v2888, 0.0
    %vm2897 = vcmp.gt.f32.partialorder %v2889, 0.0
    %vm2898 = vcmp.gt.f32.partialorder %v2890, 0.0
    %vm2899 = vcmp.gt.f32.partialorder %v2891, 0.0
    %vm2900 = vcmp.gt.f32.partialorder %v2892, 0.0
    %vm2901 = vcmp.gt.f32.partialorder %v2893, 0.0
    %vm2902 = vcmp.gt.f32.partialorder %v2894, 0.0
    %v2903 = vmul.f32 %v2887, 0.1
    %v2904 = vmul.f32 %v2888, 0.1
    %v2905 = vmul.f32 %v2889, 0.1
    %v2906 = vmul.f32 %v2890, 0.1
    %v2907 = vmul.f32 %v2891, 0.1
    %v2908 = vmul.f32 %v2892, 0.1
    %v2909 = vmul.f32 %v2893, 0.1
    %v2910 = vmul.f32 %v2894, 0.1
    %v2911 = vsel %vm2895, %v2887, %v2903
    %v2912 = vsel %vm2896, %v2888, %v2904
    %v2913 = vsel %vm2897, %v2889, %v2905
    %v2914 = vsel %vm2898, %v2890, %v2906
    %v2915 = vsel %vm2899, %v2891, %v2907
    %v2916 = vsel %vm2900, %v2892, %v2908
    %v2917 = vsel %vm2901, %v2893, %v2909
    %v2918 = vsel %vm2902, %v2894, %v2910
    %v2919 = vld [vmem:[%s11] sm:$0xff]
    %v2920 = vld [vmem:[%s11 + $0x8] sm:$0xff]
    %v2921 = vld [vmem:[%s11 + $0x10] sm:$0xff]
    %v2922 = vld [vmem:[%s11 + $0x18] sm:$0xff]
    %v2923 = vld [vmem:[%s12] sm:$0x3]
    %v2925 = vlaneseq
    %v2926 = vshrl.u32 %v2925, 7
    %v2927 = vsub.s32 0, %v2926
    %v2928 = vrot.slane %v2923, %v2927
    %v2929 = vlaneseq
    %v2930 = vshrl.u32 %v2929, 7
    %v2931 = vsub.s32 1, %v2930
    %v2932 = vrot.slane %v2923, %v2931
    %v2936 = vsel %vm112, %v2911, 0
    %v2939 = vsel %vm112, %v2912, 0
    %v2942 = vsel %vm112, %v2913, 0
    %v2945 = vsel %vm112, %v2914, 0
    %v2948 = vsel %vm112, %v2915, 0
    %v2951 = vsel %vm112, %v2916, 0
    %v2954 = vsel %vm112, %v2917, 0
    %v2957 = vsel %vm112, %v2918, 0
    %2959 = vmatprep.subr.mxu0 %v2920
    %2960 = vmatpush1.msra.mxu0 %v2919
    %2961 = vmatprep.subr.mxu0 %v2922
    %2962 = vmatpush1.msra.mxu0 %v2921
    %2963 = vmatprep.subr.mxu0 0.0
    %2964 = vmatpush1.msra.mxu0 0.0
    %2965 = vmatprep.subr.mxu0 0.0
    %2966 = vmatpush1.msra.mxu0 0.0
    %2967 = vmatprep.subr.mxu0 0.0
    %2968 = vmatpush1.msra.mxu0 0.0
    %2969 = vmatprep.subr.mxu0 0.0
    %2970 = vmatpush1.msra.mxu0 0.0
    %2971 = vmatprep.subr.mxu0 0.0
    %2972 = vmatpush1.msra.mxu0 0.0
    %2973 = vmatprep.subr.mxu0 0.0
    %2974 = vmatpush1.msra.mxu0 0.0
    %2975 = vmatprep.subr.mxu0 0.0
    %2976 = vmatpush1.msra.mxu0 0.0
    %2977 = vmatprep.subr.mxu0 0.0
    %2978 = vmatpush1.msra.mxu0 0.0
    %2979 = vmatprep.subr.mxu0 0.0
    %2980 = vmatpush1.msra.mxu0 0.0
    %2981 = vmatprep.subr.mxu0 0.0
    %2982 = vmatpush1.msra.mxu0 0.0
    %2983 = vmatprep.subr.mxu0 0.0
    %2984 = vmatpush1.msra.mxu0 0.0
    %2985 = vmatprep.subr.mxu0 0.0
    %2986 = vmatpush1.msra.mxu0 0.0
    %2987 = vmatprep.subr.mxu0 0.0
    %2988 = vmatpush1.msra.mxu0 0.0
    %2989 = vmatprep.subr.mxu0 0.0
    %2990 = vmatpush1.msra.mxu0 0.0
    %2991 = vmatprep.subr.mxu0 0.0
    %2992 = vmatpush1.msra.mxu0 0.0
    %2993 = vmatprep.subr.mxu0 0.0
    %2994 = vmatpush1.msra.mxu0 0.0
    %2995 = vmatprep.subr.mxu0 0.0
    %2996 = vmatpush1.msra.mxu0 0.0
    %2997 = vmatprep.subr.mxu0 0.0
    %2998 = vmatpush1.msra.mxu0 0.0
    %2999 = vmatprep.subr.mxu0 0.0
    %3000 = vmatpush1.msra.mxu0 0.0
    %3001 = vmatprep.subr.mxu0 0.0
    %3002 = vmatpush1.msra.mxu0 0.0
    %3003 = vmatprep.subr.mxu0 0.0
    %3004 = vmatpush1.msra.mxu0 0.0
    %3005 = vmatprep.subr.mxu0 0.0
    %3006 = vmatpush1.msra.mxu0 0.0
    %3007 = vmatprep.subr.mxu0 0.0
    %3008 = vmatpush1.msra.mxu0 0.0
    %3009 = vmatprep.subr.mxu0 0.0
    %3010 = vmatpush1.msra.mxu0 0.0
    %3011 = vmatprep.subr.mxu0 0.0
    %3012 = vmatpush1.msra.mxu0 0.0
    %3013 = vmatprep.subr.mxu0 0.0
    %3014 = vmatpush1.msra.mxu0 0.0
    %3015 = vmatprep.subr.mxu0 0.0
    %3016 = vmatpush1.msra.mxu0 0.0
    %3017 = vmatprep.subr.mxu0 0.0
    %3018 = vmatpush1.msra.mxu0 0.0
    %3019 = vmatprep.subr.mxu0 0.0
    %3020 = vmatpush1.msra.mxu0 0.0
    %3021 = vmatprep.subr.mxu0 0.0
    %3022 = vmatpush1.msra.mxu0 0.0
    %3023 = vmatprep.mubr.f32.mxu0 0.0
    %3024 = vmatmul.mubr.f32.gmra.mrb[0].mxu0 %v2936
    %v3025 = vpop.f32.mrb[0].mxu0
    %v3026 = vadd.f32 %v2928, %v3025
    %v3027 = vpop.f32.mrb[0].mxu0
    %v3028 = vadd.f32 %v2932, %v3027
    %3029 = vmatprep.mubr.f32.mxu0 0.0
    %3030 = vmatmul.mubr.f32.gmra.mrb[0].mxu0 %v2939
    %v3031 = vpop.f32.mrb[0].mxu0
    %v3032 = vadd.f32 %v2928, %v3031
    %v3033 = vpop.f32.mrb[0].mxu0
    %v3034 = vadd.f32 %v2932, %v3033
    %3035 = vmatprep.mubr.f32.mxu0 0.0
    %3036 = vmatmul.mubr.f32.gmra.mrb[0].mxu0 %v2942
    %v3037 = vpop.f32.mrb[0].mxu0
    %v3038 = vadd.f32 %v2928, %v3037
    %v3039 = vpop.f32.mrb[0].mxu0
    %v3040 = vadd.f32 %v2932, %v3039
    %3041 = vmatprep.mubr.f32.mxu0 0.0
    %3042 = vmatmul.mubr.f32.gmra.mrb[0].mxu0 %v2945
    %v3043 = vpop.f32.mrb[0].mxu0
    %v3044 = vadd.f32 %v2928, %v3043
    %v3045 = vpop.f32.mrb[0].mxu0
    %v3046 = vadd.f32 %v2932, %v3045
    %3047 = vmatprep.mubr.f32.mxu0 0.0
    %3048 = vmatmul.mubr.f32.gmra.mrb[0].mxu0 %v2948
    %v3049 = vpop.f32.mrb[0].mxu0
    %v3050 = vadd.f32 %v2928, %v3049
    %v3051 = vpop.f32.mrb[0].mxu0
    %v3052 = vadd.f32 %v2932, %v3051
    %3053 = vmatprep.mubr.f32.mxu0 0.0
    %3054 = vmatmul.mubr.f32.gmra.mrb[0].mxu0 %v2951
    %v3055 = vpop.f32.mrb[0].mxu0
    %v3056 = vadd.f32 %v2928, %v3055
    %v3057 = vpop.f32.mrb[0].mxu0
    %v3058 = vadd.f32 %v2932, %v3057
    %3059 = vmatprep.mubr.f32.mxu0 0.0
    %3060 = vmatmul.mubr.f32.gmra.mrb[0].mxu0 %v2954
    %v3061 = vpop.f32.mrb[0].mxu0
    %v3062 = vadd.f32 %v2928, %v3061
    %v3063 = vpop.f32.mrb[0].mxu0
    %v3064 = vadd.f32 %v2932, %v3063
    %3065 = vmatprep.mubr.f32.mxu0 0.0
    %3066 = vmatmul.mubr.f32.gmra.mrb[0].mxu0 %v2957
    %v3067 = vpop.f32.mrb[0].mxu0
    %v3068 = vadd.f32 %v2928, %v3067
    %v3069 = vpop.f32.mrb[0].mxu0
    %v3070 = vadd.f32 %v2932, %v3069
    %3071 = vdwg.mxu0
    %v3072 = vmul.f32 %v3028, 1.442695
    %v3073 = vpow.pop %v3072
    %v3074 = vmul.f32 %v3034, 1.442695
    %v3075 = vpow.pop %v3074
    %v3076 = vmul.f32 %v3040, 1.442695
    %v3077 = vpow.pop %v3076
    %v3078 = vmul.f32 %v3046, 1.442695
    %v3079 = vpow.pop %v3078
    %v3080 = vmul.f32 %v3052, 1.442695
    %v3081 = vpow.pop %v3080
    %v3082 = vmul.f32 %v3058, 1.442695
    %v3083 = vpow.pop %v3082
    %v3084 = vmul.f32 %v3064, 1.442695
    %v3085 = vpow.pop %v3084
    %v3086 = vmul.f32 %v3070, 1.442695
    %v3087 = vpow.pop %v3086
    %v3088 = vld [vmem:[%s1] sm:$0xff]
    %v3089 = vld [vmem:[%s1 + $0x8] sm:$0xff]
    %v3090 = vld [vmem:[%s1 + $0x10] sm:$0xff]
    %v3091 = vld [vmem:[%s1 + $0x18] sm:$0xff]
    %v3092 = vld [vmem:[%s1 + $0x20] sm:$0xff]
    %v3093 = vld [vmem:[%s1 + $0x28] sm:$0xff]
    %v3094 = vld [vmem:[%s1 + $0x30] sm:$0xff]
    %v3095 = vld [vmem:[%s1 + $0x38] sm:$0xff]
    %v3096 = vmul.f32 %v3073, %v3088
    %v3097 = vmul.f32 %v3075, %v3089
    %v3098 = vmul.f32 %v3077, %v3090
    %v3099 = vmul.f32 %v3079, %v3091
    %v3100 = vmul.f32 %v3081, %v3092
    %v3101 = vmul.f32 %v3083, %v3093
    %v3102 = vmul.f32 %v3085, %v3094
    %v3103 = vmul.f32 %v3087, %v3095
    %v3104 = vadd.f32 %v3026, %v3096
    %v3105 = vadd.f32 %v3032, %v3097
    %v3106 = vadd.f32 %v3038, %v3098
    %v3107 = vadd.f32 %v3044, %v3099
    %v3108 = vadd.f32 %v3050, %v3100
    %v3109 = vadd.f32 %v3056, %v3101
    %v3110 = vadd.f32 %v3062, %v3102
    %v3111 = vadd.f32 %v3068, %v3103
    %3112 = vst [vmem:[%s13] sm:$0xff] %v3104
    %3113 = vst [vmem:[%s13 + $0x8] sm:$0xff] %v3105
    %3114 = vst [vmem:[%s13 + $0x10] sm:$0xff] %v3106
    %3115 = vst [vmem:[%s13 + $0x18] sm:$0xff] %v3107
    %3116 = vst [vmem:[%s13 + $0x20] sm:$0xff] %v3108
    %3117 = vst [vmem:[%s13 + $0x28] sm:$0xff] %v3109
    %3118 = vst [vmem:[%s13 + $0x30] sm:$0xff] %v3110
    %3119 = vst [vmem:[%s13 + $0x38] sm:$0xff] %v3111
    // Predicated region
    $region58: #{_lambda_.1} parent=1 // pred_check
      _
    $region59: #{_lambda_.1} parent=1 // pred_check_branch
      %3121 = sbr.rel (0) target = $region61
    $region60: #{_lambda_.1} parent=1 // pred_region
      _
    $region61: #{_lambda_.1} parent=1 // pred_fallthru
      _
    // Predicated region
    $region62: #{_lambda_.1} parent=1 // pred_check
      _
    $region63: #{_lambda_.1} parent=1 // pred_check_branch
      %3123 = sbr.rel (0) target = $region65
    $region64: #{_lambda_.1} parent=1 // pred_region
      _
    $region65: #{_lambda_.1} parent=1 // pred_fallthru
      _
    %3124 = vsyncpa [#allocation5], 1

</llo_original>
